<compile_context>
chip_gen: v7x
topology: tpu7x:2x2x1
jax: 0.10.0
libtpu: 0.0.40
codegen_flags: <defaults>
</compile_context>

<pallas_src>
import math

import numpy as np

import jax
import jax.numpy as jnp
from jax import lax
from jax.experimental import pallas as pl
from jax.experimental.pallas import tpu as pltpu

_F32 = jnp.float32
_BF16 = jnp.bfloat16


def _round_up(n, m):
    return ((n + m - 1) // m) * m


# ---------------------------------------------------------------------------
# host-side parameter re-layout (done once, outside jit)
# ---------------------------------------------------------------------------
def prepare_params(params):
    """Re-layout PyTorch-convention weights into MXU/VPU-friendly operands."""
    (w1, b1, w2, b2, fw1, fb1, fw2, fb2) = [np.asarray(p, np.float32) for p in params]
    K = 5

    # ---- conv1 banded weight: (5*28, 256) ---------------------------------
    # rows:  kh*28 + wi (input row tap kh, input col wi, Cin == 1)
    # cols:  even out col j=2q -> lane q*10+co (0..119), zeros 120..127,
    #        odd  out col j=2q+1 -> lane 128+q*10+co (128..247), zeros 248..255
    w1b = np.zeros((K * 28, 256), np.float32)
    for j in range(24):
        blk, q = (0, j // 2) if j % 2 == 0 else (128, j // 2)
        for kh in range(K):
            for kw in range(K):
                w1b[kh * 28 + (j + kw), blk + q * 10: blk + q * 10 + 10] = w1[:, 0, kh, kw]
    b1t = np.zeros((1, 256), np.float32)
    b1t[0, 0:120] = np.tile(b1, 12)
    b1t[0, 128:248] = np.tile(b1, 12)

    # ---- conv2 banded weight: (5*128, 256) --------------------------------
    # rows:  kh*128 + wi*10 + ci   (zero rows at kh*128 + 120..127 pad lanes)
    # cols:  even j=2q -> q*20+co (0..79), pad 80..127,
    #        odd  j=2q+1 -> 128+q*20+co (128..207), pad 208..255
    w2b = np.zeros((K * 128, 256), np.float32)
    for j in range(8):
        blk, q = (0, j // 2) if j % 2 == 0 else (128, j // 2)
        for kh in range(K):
            for kw in range(K):
                wi = j + kw
                for ci in range(10):
                    w2b[kh * 128 + wi * 10 + ci,
                        blk + q * 20: blk + q * 20 + 20] = w2[:, ci, kh, kw]
    b2t = np.zeros((1, 256), np.float32)
    b2t[0, 0:80] = np.tile(b2, 4)
    b2t[0, 128:208] = np.tile(b2, 4)

    # ---- fc1: rows permuted from torch (co, i, q) flatten order to the
    #      in-kernel (i, q, co) order, padded to 512 rows (zero pad rows) -----
    fw1_r = fw1.reshape(50, 20, 4, 4)            # (out, co, i, q)
    fw1p = np.zeros((512, 50), np.float32)
    for i in range(4):
        for q in range(4):
            for co in range(20):
                fw1p[i * 128 + q * 20 + co, :] = fw1_r[:, co, i, q]
    fb1r = fb1.reshape(1, 50)
    fw2t = fw2.T.copy()                           # (50, 10)
    fb2r = fb2.reshape(1, 10)

    # Matmul operands in bf16 (f32 accumulation in-kernel); biases stay f32.
    return (jnp.asarray(w1b).astype(_BF16), jnp.asarray(b1t),
            jnp.asarray(w2b).astype(_BF16), jnp.asarray(b2t),
            jnp.asarray(fw1p).astype(_BF16), jnp.asarray(fb1r),
            jnp.asarray(fw2t).astype(_BF16), jnp.asarray(fb2r))


# ---------------------------------------------------------------------------
# fused kernel: conv1 -> pool -> relu -> conv2 -> pool -> relu -> fc1 -> relu
#               -> fc2 -> log_softmax        (TB samples per grid step)
# ---------------------------------------------------------------------------
def net_kernel(x_ref, w1b_ref, b1_ref, w2b_ref, b2_ref,
               fw1_ref, fb1_ref, fw2_ref, fb2_ref, o_ref):
    tb = x_ref.shape[0]
    x = x_ref[...]                                            # (TB, 28, 28) f32

    # ---- conv1: single banded im2col matmul (K = 5*28 = 140, N = 256) ------
    im1 = jnp.concatenate([x[:, kh:kh + 24, :] for kh in range(5)], axis=-1)
    a1 = im1.reshape(tb * 24, 140).astype(_BF16)
    out1 = jnp.dot(a1, w1b_ref[...], preferred_element_type=_F32) + b1_ref[...]

    # ---- 2x2 max-pool + relu.  H: fold row pairs into lanes (256 | 256);
    #      W: max of the even / odd 128-lane blocks.  All slices 128-aligned.
    y1 = out1.reshape(tb * 12, 512)
    h1 = jnp.maximum(y1[:, :256], y1[:, 256:])
    p1 = jnp.maximum(jnp.maximum(h1[:, :128], h1[:, 128:]), 0.0)
    x1 = p1.reshape(tb, 12, 128)          # lanes = w*10 + ci, pad lanes 120..127 == 0

    # ---- conv2 (Dropout2d == identity in eval): K = 5*128 = 640, N = 256 ---
    #      tap concat is lane-tile aligned; pad lanes hit zero weight rows.
    im2 = jnp.concatenate([x1[:, kh:kh + 8, :] for kh in range(5)], axis=-1)
    a2 = im2.reshape(tb * 8, 640).astype(_BF16)
    out2 = jnp.dot(a2, w2b_ref[...], preferred_element_type=_F32) + b2_ref[...]

    y2 = out2.reshape(tb * 4, 512)
    h2 = jnp.maximum(y2[:, :256], y2[:, 256:])
    p2 = jnp.maximum(jnp.maximum(h2[:, :128], h2[:, 128:]), 0.0)
    feat = p2.reshape(tb, 512).astype(_BF16)   # lanes = i*128 + q*20 + co (+ zero pads)

    # ---- fc1 -> relu -> [F.dropout == identity] -> fc2 -> log_softmax ------
    h = jnp.dot(feat, fw1_ref[...], preferred_element_type=_F32) + fb1_ref[...]
    h = jnp.maximum(h, 0.0).astype(_BF16)
    logits = jnp.dot(h, fw2_ref[...], preferred_element_type=_F32) + fb2_ref[...]
    m = jnp.max(logits, axis=-1, keepdims=True)
    lse = m + jnp.log(jnp.sum(jnp.exp(logits - m), axis=-1, keepdims=True))
    o_ref[...] = logits - lse


# ---------------------------------------------------------------------------
# wrapper: batch tiling / padding and the single pallas_call
# ---------------------------------------------------------------------------
def _pick_tb(batch):
    # <= 64 rows per step, multiple of 8, and >= 2 grid steps whenever the
    # batch allows it (so v7x can shard the "parallel" batch axis over 2 TCs).
    if batch <= 8:
        return 8
    return min(64, _round_up((batch + 1) // 2, 8))


def net_forward(x, prepped):
    (w1b, b1t, w2b, b2t, fw1p, fb1r, fw2t, fb2r) = prepped
    B = x.shape[0]
    x3 = x[:, 0, :, :].astype(_F32)                           # (B, 28, 28)

    TB = _pick_tb(B)
    Bp = _round_up(B, TB)
    if Bp != B:
        x3 = jnp.pad(x3, ((0, Bp - B), (0, 0), (0, 0)))

    def const2d(arr):
        return pl.BlockSpec(arr.shape, lambda i: (0, 0))

    out = pl.pallas_call(
        net_kernel,
        out_shape=jax.ShapeDtypeStruct((Bp, 10), _F32),
        grid=(Bp // TB,),
        in_specs=[
            pl.BlockSpec((TB, 28, 28), lambda i: (i, 0, 0)),
            const2d(w1b), const2d(b1t), const2d(w2b), const2d(b2t),
            const2d(fw1p), const2d(fb1r), const2d(fw2t), const2d(fb2r),
        ],
        out_specs=pl.BlockSpec((TB, 10), lambda i: (i, 0)),
        compiler_params=pltpu.CompilerParams(
            dimension_semantics=("parallel",),
            vmem_limit_bytes=32 * 1024 * 1024),
    )(x3, w1b, b1t, w2b, b2t, fw1p, fb1r, fw2t, fb2r)
    return out[:B]


# ---------------------------------------------------------------------------
# pure-JAX reference (sanity check only; full f32 precision)
# ---------------------------------------------------------------------------
def reference_forward(x, params):
    (w1, b1, w2, b2, fw1, fb1, fw2, fb2) = params
    dn = ("NCHW", "OIHW", "NCHW")
    hp = lax.Precision.HIGHEST
    c1 = lax.conv_general_dilated(x, w1, (1, 1), "VALID", dimension_numbers=dn,
                                  precision=hp) + b1[None, :, None, None]
    p1 = lax.reduce_window(c1, -jnp.inf, lax.max, (1, 1, 2, 2), (1, 1, 2, 2), "VALID")
    r1 = jnp.maximum(p1, 0.0)
    c2 = lax.conv_general_dilated(r1, w2, (1, 1), "VALID", dimension_numbers=dn,
                                  precision=hp) + b2[None, :, None, None]
    p2 = lax.reduce_window(c2, -jnp.inf, lax.max, (1, 1, 2, 2), (1, 1, 2, 2), "VALID")
    r2 = jnp.maximum(p2, 0.0)
    a = r2.reshape(x.shape[0], 320)
    h = jnp.maximum(jnp.dot(a, fw1.T, precision=hp) + fb1, 0.0)
    logits = jnp.dot(h, fw2.T, precision=hp) + fb2
    return jax.nn.log_softmax(logits, axis=-1)


if __name__ == "__main__":
    key = jax.random.PRNGKey(0)
    ks = jax.random.split(key, 10)

    def uni(k, shape, fan_in):
        bound = 1.0 / math.sqrt(fan_in)
        return jax.random.uniform(k, shape, _F32, -bound, bound)

    params = (
        uni(ks[0], (10, 1, 5, 5), 1 * 5 * 5),     # conv1.weight
        uni(ks[1], (10,), 1 * 5 * 5),             # conv1.bias
        uni(ks[2], (20, 10, 5, 5), 10 * 5 * 5),   # conv2.weight
        uni(ks[3], (20,), 10 * 5 * 5),            # conv2.bias
        uni(ks[4], (50, 320), 320),               # fc1.weight
        uni(ks[5], (50,), 320),                   # fc1.bias
        uni(ks[6], (10, 50), 50),                 # fc2.weight
        uni(ks[7], (10,), 50),                    # fc2.bias
    )
    prepped = prepare_params(params)

    fwd = jax.jit(net_forward)

    # Small MNIST-shaped batch (single grid step, TB = 8 after padding).
    x = jax.random.normal(ks[8], (2, 1, 28, 28), _F32)
    out = jax.block_until_ready(fwd(x, prepped))
    ref = reference_forward(x, params)
    assert out.shape == (2, 10)
    assert bool(jnp.all(jnp.isfinite(out)))
    # bf16 MXU operands (f32 accumulation) vs. the f32 HIGHEST-precision
    # reference: expected |err| ~1e-2 on log-probs; layout/permutation bugs
    # would be O(1e-1..1), so this remains a meaningful functional check.
    assert bool(jnp.allclose(out, ref, atol=5e-2, rtol=2e-2))

    # Larger batch exercising TB=64 tiles, a 4-step grid and batch padding.
    x_big = jax.random.normal(ks[9], (200, 1, 28, 28), _F32)
    out_big = jax.block_until_ready(fwd(x_big, prepped))
    ref_big = reference_forward(x_big, params)
    assert out_big.shape == (200, 10)
    assert bool(jnp.all(jnp.isfinite(out_big)))
    assert bool(jnp.allclose(out_big, ref_big, atol=5e-2, rtol=2e-2))

    print("KERNEL_OK")
</pallas_src>

<mosaic_0001>
module attributes {stable_mosaic.version = 11 : i64} {
  func.func @net_kernel(%arg0: i32, %arg1: memref<8x28x28xf32, #tpu.memory_space<vmem>>, %arg2: memref<140x256xbf16, #tpu.memory_space<vmem>>, %arg3: memref<1x256xf32, #tpu.memory_space<vmem>>, %arg4: memref<640x256xbf16, #tpu.memory_space<vmem>>, %arg5: memref<1x256xf32, #tpu.memory_space<vmem>>, %arg6: memref<512x50xbf16, #tpu.memory_space<vmem>>, %arg7: memref<1x50xf32, #tpu.memory_space<vmem>>, %arg8: memref<50x10xbf16, #tpu.memory_space<vmem>>, %arg9: memref<1x10xf32, #tpu.memory_space<vmem>>, %arg10: memref<8x10xf32, #tpu.memory_space<vmem>>) attributes {dimension_semantics = [#tpu.dimension_semantics<parallel>], iteration_bounds = array<i64: 1>, scalar_prefetch = 0 : i64, scratch_operands = 0 : i64, tpu.core_type = #tpu.core_type<tc>, window_params = [{transform_indices = @transform_0, window_bounds = array<i64: 8, 28, 28>}, {pipeline_mode = #tpu.pipeline_mode<synchronous>, transform_indices = @transform_1, window_bounds = array<i64: 140, 256>}, {pipeline_mode = #tpu.pipeline_mode<synchronous>, transform_indices = @transform_2, window_bounds = array<i64: 1, 256>}, {pipeline_mode = #tpu.pipeline_mode<synchronous>, transform_indices = @transform_3, window_bounds = array<i64: 640, 256>}, {pipeline_mode = #tpu.pipeline_mode<synchronous>, transform_indices = @transform_4, window_bounds = array<i64: 1, 256>}, {pipeline_mode = #tpu.pipeline_mode<synchronous>, transform_indices = @transform_5, window_bounds = array<i64: 512, 50>}, {pipeline_mode = #tpu.pipeline_mode<synchronous>, transform_indices = @transform_6, window_bounds = array<i64: 1, 50>}, {pipeline_mode = #tpu.pipeline_mode<synchronous>, transform_indices = @transform_7, window_bounds = array<i64: 50, 10>}, {pipeline_mode = #tpu.pipeline_mode<synchronous>, transform_indices = @transform_8, window_bounds = array<i64: 1, 10>}, {transform_indices = @transform_9, window_bounds = array<i64: 8, 10>}]} {
    %c0 = arith.constant 0 : index
    %c0_0 = arith.constant 0 : index
    %c0_1 = arith.constant 0 : index
    %0 = vector.load %arg1[%c0, %c0_0, %c0_1] : memref<8x28x28xf32, #tpu.memory_space<vmem>>, vector<8x28x28xf32>
    %1 = vector.extract_strided_slice %0 {offsets = [0, 0, 0], sizes = [8, 24, 28], strides = [1, 1, 1]} : vector<8x28x28xf32> to vector<8x24x28xf32>
    %2 = vector.extract_strided_slice %0 {offsets = [0, 1, 0], sizes = [8, 24, 28], strides = [1, 1, 1]} : vector<8x28x28xf32> to vector<8x24x28xf32>
    %3 = vector.extract_strided_slice %0 {offsets = [0, 2, 0], sizes = [8, 24, 28], strides = [1, 1, 1]} : vector<8x28x28xf32> to vector<8x24x28xf32>
    %4 = vector.extract_strided_slice %0 {offsets = [0, 3, 0], sizes = [8, 24, 28], strides = [1, 1, 1]} : vector<8x28x28xf32> to vector<8x24x28xf32>
    %5 = vector.extract_strided_slice %0 {offsets = [0, 4, 0], sizes = [8, 24, 28], strides = [1, 1, 1]} : vector<8x28x28xf32> to vector<8x24x28xf32>
    %6 = tpu.concatenate %1, %2, %3, %4, %5 in 2 : vector<8x24x28xf32>, vector<8x24x28xf32>, vector<8x24x28xf32>, vector<8x24x28xf32>, vector<8x24x28xf32> -> vector<8x24x140xf32>
    %7 = vector.shape_cast %6 : vector<8x24x140xf32> to vector<192x140xf32>
    %8 = arith.truncf %7 : vector<192x140xf32> to vector<192x140xbf16>
    %c0_2 = arith.constant 0 : index
    %c0_3 = arith.constant 0 : index
    %9 = vector.load %arg2[%c0_2, %c0_3] : memref<140x256xbf16, #tpu.memory_space<vmem>>, vector<140x256xbf16>
    %cst = arith.constant dense<0.000000e+00> : vector<192x256xf32>
    %10 = tpu.matmul %8, %9, %cst {dimension_numbers = #tpu.dot_dimension_numbers<[1], [0], [0], [1], [0, 0, 1, 1], [], []>} : vector<192x140xbf16>, vector<140x256xbf16>, vector<192x256xf32> -> vector<192x256xf32>
    %c0_4 = arith.constant 0 : index
    %c0_5 = arith.constant 0 : index
    %11 = vector.load %arg3[%c0_4, %c0_5] : memref<1x256xf32, #tpu.memory_space<vmem>>, vector<1x256xf32>
    %12 = vector.broadcast %11 : vector<1x256xf32> to vector<192x256xf32>
    %13 = arith.addf %10, %12 : vector<192x256xf32>
    %14 = vector.shape_cast %13 : vector<192x256xf32> to vector<96x512xf32>
    %15 = vector.extract_strided_slice %14 {offsets = [0, 0], sizes = [96, 256], strides = [1, 1]} : vector<96x512xf32> to vector<96x256xf32>
    %16 = vector.extract_strided_slice %14 {offsets = [0, 256], sizes = [96, 256], strides = [1, 1]} : vector<96x512xf32> to vector<96x256xf32>
    %17 = arith.maximumf %15, %16 : vector<96x256xf32>
    %18 = vector.extract_strided_slice %17 {offsets = [0, 0], sizes = [96, 128], strides = [1, 1]} : vector<96x256xf32> to vector<96x128xf32>
    %19 = vector.extract_strided_slice %17 {offsets = [0, 128], sizes = [96, 128], strides = [1, 1]} : vector<96x256xf32> to vector<96x128xf32>
    %20 = arith.maximumf %18, %19 : vector<96x128xf32>
    %cst_6 = arith.constant 0.000000e+00 : f32
    %21 = vector.broadcast %cst_6 : f32 to vector<96x128xf32>
    %22 = arith.maximumf %20, %21 : vector<96x128xf32>
    %23 = vector.shape_cast %22 : vector<96x128xf32> to vector<8x12x128xf32>
    %24 = vector.extract_strided_slice %23 {offsets = [0, 0, 0], sizes = [8, 8, 128], strides = [1, 1, 1]} : vector<8x12x128xf32> to vector<8x8x128xf32>
    %25 = vector.extract_strided_slice %23 {offsets = [0, 1, 0], sizes = [8, 8, 128], strides = [1, 1, 1]} : vector<8x12x128xf32> to vector<8x8x128xf32>
    %26 = vector.extract_strided_slice %23 {offsets = [0, 2, 0], sizes = [8, 8, 128], strides = [1, 1, 1]} : vector<8x12x128xf32> to vector<8x8x128xf32>
    %27 = vector.extract_strided_slice %23 {offsets = [0, 3, 0], sizes = [8, 8, 128], strides = [1, 1, 1]} : vector<8x12x128xf32> to vector<8x8x128xf32>
    %28 = vector.extract_strided_slice %23 {offsets = [0, 4, 0], sizes = [8, 8, 128], strides = [1, 1, 1]} : vector<8x12x128xf32> to vector<8x8x128xf32>
    %29 = tpu.concatenate %24, %25, %26, %27, %28 in 2 : vector<8x8x128xf32>, vector<8x8x128xf32>, vector<8x8x128xf32>, vector<8x8x128xf32>, vector<8x8x128xf32> -> vector<8x8x640xf32>
    %30 = vector.shape_cast %29 : vector<8x8x640xf32> to vector<64x640xf32>
    %31 = arith.truncf %30 : vector<64x640xf32> to vector<64x640xbf16>
    %c0_7 = arith.constant 0 : index
    %c0_8 = arith.constant 0 : index
    %32 = vector.load %arg4[%c0_7, %c0_8] : memref<640x256xbf16, #tpu.memory_space<vmem>>, vector<640x256xbf16>
    %cst_9 = arith.constant dense<0.000000e+00> : vector<64x256xf32>
    %33 = tpu.matmul %31, %32, %cst_9 {dimension_numbers = #tpu.dot_dimension_numbers<[1], [0], [0], [1], [0, 0, 1, 1], [], []>} : vector<64x640xbf16>, vector<640x256xbf16>, vector<64x256xf32> -> vector<64x256xf32>
    %c0_10 = arith.constant 0 : index
    %c0_11 = arith.constant 0 : index
    %34 = vector.load %arg5[%c0_10, %c0_11] : memref<1x256xf32, #tpu.memory_space<vmem>>, vector<1x256xf32>
    %35 = vector.broadcast %34 : vector<1x256xf32> to vector<64x256xf32>
    %36 = arith.addf %33, %35 : vector<64x256xf32>
    %37 = vector.shape_cast %36 : vector<64x256xf32> to vector<32x512xf32>
    %38 = vector.extract_strided_slice %37 {offsets = [0, 0], sizes = [32, 256], strides = [1, 1]} : vector<32x512xf32> to vector<32x256xf32>
    %39 = vector.extract_strided_slice %37 {offsets = [0, 256], sizes = [32, 256], strides = [1, 1]} : vector<32x512xf32> to vector<32x256xf32>
    %40 = arith.maximumf %38, %39 : vector<32x256xf32>
    %41 = vector.extract_strided_slice %40 {offsets = [0, 0], sizes = [32, 128], strides = [1, 1]} : vector<32x256xf32> to vector<32x128xf32>
    %42 = vector.extract_strided_slice %40 {offsets = [0, 128], sizes = [32, 128], strides = [1, 1]} : vector<32x256xf32> to vector<32x128xf32>
    %43 = arith.maximumf %41, %42 : vector<32x128xf32>
    %cst_12 = arith.constant 0.000000e+00 : f32
    %44 = vector.broadcast %cst_12 : f32 to vector<32x128xf32>
    %45 = arith.maximumf %43, %44 : vector<32x128xf32>
    %46 = vector.shape_cast %45 : vector<32x128xf32> to vector<8x512xf32>
    %47 = arith.truncf %46 : vector<8x512xf32> to vector<8x512xbf16>
    %c0_13 = arith.constant 0 : index
    %c0_14 = arith.constant 0 : index
    %48 = vector.load %arg6[%c0_13, %c0_14] : memref<512x50xbf16, #tpu.memory_space<vmem>>, vector<512x50xbf16>
    %cst_15 = arith.constant dense<0.000000e+00> : vector<8x50xf32>
    %49 = tpu.matmul %47, %48, %cst_15 {dimension_numbers = #tpu.dot_dimension_numbers<[1], [0], [0], [1], [0, 0, 1, 1], [], []>} : vector<8x512xbf16>, vector<512x50xbf16>, vector<8x50xf32> -> vector<8x50xf32>
    %c0_16 = arith.constant 0 : index
    %c0_17 = arith.constant 0 : index
    %50 = vector.load %arg7[%c0_16, %c0_17] : memref<1x50xf32, #tpu.memory_space<vmem>>, vector<1x50xf32>
    %51 = vector.broadcast %50 : vector<1x50xf32> to vector<8x50xf32>
    %52 = arith.addf %49, %51 : vector<8x50xf32>
    %cst_18 = arith.constant 0.000000e+00 : f32
    %53 = vector.broadcast %cst_18 : f32 to vector<8x50xf32>
    %54 = arith.maximumf %52, %53 : vector<8x50xf32>
    %55 = arith.truncf %54 : vector<8x50xf32> to vector<8x50xbf16>
    %c0_19 = arith.constant 0 : index
    %c0_20 = arith.constant 0 : index
    %56 = vector.load %arg8[%c0_19, %c0_20] : memref<50x10xbf16, #tpu.memory_space<vmem>>, vector<50x10xbf16>
    %cst_21 = arith.constant dense<0.000000e+00> : vector<8x10xf32>
    %57 = tpu.matmul %55, %56, %cst_21 {dimension_numbers = #tpu.dot_dimension_numbers<[1], [0], [0], [1], [0, 0, 1, 1], [], []>} : vector<8x50xbf16>, vector<50x10xbf16>, vector<8x10xf32> -> vector<8x10xf32>
    %c0_22 = arith.constant 0 : index
    %c0_23 = arith.constant 0 : index
    %58 = vector.load %arg9[%c0_22, %c0_23] : memref<1x10xf32, #tpu.memory_space<vmem>>, vector<1x10xf32>
    %59 = vector.broadcast %58 : vector<1x10xf32> to vector<8x10xf32>
    %60 = arith.addf %57, %59 : vector<8x10xf32>
    %cst_24 = arith.constant dense<0xFF800000> : vector<8xf32>
    %61 = vector.multi_reduction <maximumf>, %60, %cst_24 [1] : vector<8x10xf32> to vector<8xf32>
    %62 = vector.shape_cast %61 : vector<8xf32> to vector<8x1xf32>
    %63 = vector.broadcast %62 : vector<8x1xf32> to vector<8x10xf32>
    %64 = arith.subf %60, %63 : vector<8x10xf32>
    %65 = math.exp %64 : vector<8x10xf32>
    %cst_25 = arith.constant dense<0.000000e+00> : vector<8xf32>
    %66 = vector.multi_reduction <add>, %65, %cst_25 [1] : vector<8x10xf32> to vector<8xf32>
    %67 = vector.shape_cast %66 : vector<8xf32> to vector<8x1xf32>
    %68 = math.log %67 : vector<8x1xf32>
    %69 = arith.addf %62, %68 : vector<8x1xf32>
    %70 = vector.broadcast %69 : vector<8x1xf32> to vector<8x10xf32>
    %71 = arith.subf %60, %70 : vector<8x10xf32>
    %c0_26 = arith.constant 0 : index
    %c0_27 = arith.constant 0 : index
    %72 = vector.load %arg10[%c0_26, %c0_27] : memref<8x10xf32, #tpu.memory_space<vmem>>, vector<8x10xf32>
    tpu.vector_store %arg10[%c0_26, %c0_27], %71 {strides = array<i32>} : memref<8x10xf32, #tpu.memory_space<vmem>>, vector<8x10xf32>,
    return
  }
  func.func @transform_0(%arg0: i32) -> (i32, i32, i32) {
    %c0_i32 = arith.constant 0 : i32
    %c0_i32_0 = arith.constant 0 : i32
    %c0_i32_1 = arith.constant 0 : i32
    return %arg0, %c0_i32, %c0_i32_0 : i32, i32, i32
  }
  func.func @transform_1(%arg0: i32) -> (i32, i32) {
    %c0_i32 = arith.constant 0 : i32
    %c0_i32_0 = arith.constant 0 : i32
    %c0_i32_1 = arith.constant 0 : i32
    return %c0_i32, %c0_i32_0 : i32, i32
  }
  func.func @transform_2(%arg0: i32) -> (i32, i32) {
    %c0_i32 = arith.constant 0 : i32
    %c0_i32_0 = arith.constant 0 : i32
    %c0_i32_1 = arith.constant 0 : i32
    return %c0_i32, %c0_i32_0 : i32, i32
  }
  func.func @transform_3(%arg0: i32) -> (i32, i32) {
    %c0_i32 = arith.constant 0 : i32
    %c0_i32_0 = arith.constant 0 : i32
    %c0_i32_1 = arith.constant 0 : i32
    return %c0_i32, %c0_i32_0 : i32, i32
  }
  func.func @transform_4(%arg0: i32) -> (i32, i32) {
    %c0_i32 = arith.constant 0 : i32
    %c0_i32_0 = arith.constant 0 : i32
    %c0_i32_1 = arith.constant 0 : i32
    return %c0_i32, %c0_i32_0 : i32, i32
  }
  func.func @transform_5(%arg0: i32) -> (i32, i32) {
    %c0_i32 = arith.constant 0 : i32
    %c0_i32_0 = arith.constant 0 : i32
    %c0_i32_1 = arith.constant 0 : i32
    return %c0_i32, %c0_i32_0 : i32, i32
  }
  func.func @transform_6(%arg0: i32) -> (i32, i32) {
    %c0_i32 = arith.constant 0 : i32
    %c0_i32_0 = arith.constant 0 : i32
    %c0_i32_1 = arith.constant 0 : i32
    return %c0_i32, %c0_i32_0 : i32, i32
  }
  func.func @transform_7(%arg0: i32) -> (i32, i32) {
    %c0_i32 = arith.constant 0 : i32
    %c0_i32_0 = arith.constant 0 : i32
    %c0_i32_1 = arith.constant 0 : i32
    return %c0_i32, %c0_i32_0 : i32, i32
  }
  func.func @transform_8(%arg0: i32) -> (i32, i32) {
    %c0_i32 = arith.constant 0 : i32
    %c0_i32_0 = arith.constant 0 : i32
    %c0_i32_1 = arith.constant 0 : i32
    return %c0_i32, %c0_i32_0 : i32, i32
  }
  func.func @transform_9(%arg0: i32) -> (i32, i32) {
    %c0_i32 = arith.constant 0 : i32
    %c0_i32_0 = arith.constant 0 : i32
    return %arg0, %c0_i32 : i32, i32
  }
}

</mosaic_0001>

<llo_original>
// kernel: net_forward.1
$region0: #{net_forward.1}
  #allocation0 [shape = 'u32[]', space=smem, size = 0x4, offset = 0x4, fixed_abs, tag = 'smem constant byte address 0x4 - core index']
  #allocation1 [shape = 'u32[144,128]{1,0:T(1,128)}', space=vmem, size = 0x12000, scoped, tag = 'internal scratch']
  %s0 = inlined_call_operand.vmem [shape: f32[8,28,28], index: 0, kind: input, shape index: {}]
  %s1 = inlined_call_operand.vmem [shape: bf16[140,256], index: 1, kind: input, shape index: {}]
  %s2 = inlined_call_operand.vmem [shape: f32[1,256], index: 2, kind: input, shape index: {}]
  %s3 = inlined_call_operand.vmem [shape: bf16[640,256], index: 3, kind: input, shape index: {}]
  %s4 = inlined_call_operand.vmem [shape: f32[1,256], index: 4, kind: input, shape index: {}]
  %s5 = inlined_call_operand.vmem [shape: bf16[512,50], index: 5, kind: input, shape index: {}]
  %s6 = inlined_call_operand.vmem [shape: f32[1,50], index: 6, kind: input, shape index: {}]
  %s7 = inlined_call_operand.vmem [shape: bf16[50,10], index: 7, kind: input, shape index: {}]
  %s8 = inlined_call_operand.vmem [shape: f32[1,10], index: 8, kind: input, shape index: {}]
  %s9 = inlined_call_operand.vmem [shape: f32[8,10], index: 9, kind: output, shape index: {}]
  %s10 = sld [smem:[#allocation0]]
  $region46: #{net_forward.1} parent=0
    _
  %s12 = ssub.s32 1, %s10
  %s13 = scalar_select 0, %s12, %s10
  // Predicated region
  $region2: #{net_forward.1} parent=0 // pred_check
    _
  $region3: #{net_forward.1} parent=0 // pred_check_branch
    %15 = sbr.rel (0) target = $region5
  $region4: #{net_forward.1} parent=0 // pred_region
    _
  $region5: #{net_forward.1} parent=0 // pred_fallthru
    _
  // Predicated region
  $region6: #{net_forward.1} parent=0 // pred_check
    _
  $region7: #{net_forward.1} parent=0 // pred_check_branch
    %17 = sbr.rel (0) target = $region9
  $region8: #{net_forward.1} parent=0 // pred_region
    _
  $region9: #{net_forward.1} parent=0 // pred_fallthru
    _
  // Predicated region
  $region10: #{net_forward.1} parent=0 // pred_check
    _
  $region11: #{net_forward.1} parent=0 // pred_check_branch
    %19 = sbr.rel (0) target = $region13
  $region12: #{net_forward.1} parent=0 // pred_region
    _
  $region13: #{net_forward.1} parent=0 // pred_fallthru
    _
  // Predicated region
  $region14: #{net_forward.1} parent=0 // pred_check
    _
  $region15: #{net_forward.1} parent=0 // pred_check_branch
    %21 = sbr.rel (0) target = $region17
  $region16: #{net_forward.1} parent=0 // pred_region
    _
  $region17: #{net_forward.1} parent=0 // pred_fallthru
    _
  // Predicated region
  $region18: #{net_forward.1} parent=0 // pred_check
    _
  $region19: #{net_forward.1} parent=0 // pred_check_branch
    %23 = sbr.rel (0) target = $region21
  $region20: #{net_forward.1} parent=0 // pred_region
    _
  $region21: #{net_forward.1} parent=0 // pred_fallthru
    _
  // Predicated region
  $region22: #{net_forward.1} parent=0 // pred_check
    _
  $region23: #{net_forward.1} parent=0 // pred_check_branch
    %25 = sbr.rel (0) target = $region25
  $region24: #{net_forward.1} parent=0 // pred_region
    _
  $region25: #{net_forward.1} parent=0 // pred_fallthru
    _
  // Predicated region
  $region26: #{net_forward.1} parent=0 // pred_check
    _
  $region27: #{net_forward.1} parent=0 // pred_check_branch
    %27 = sbr.rel (0) target = $region29
  $region28: #{net_forward.1} parent=0 // pred_region
    _
  $region29: #{net_forward.1} parent=0 // pred_fallthru
    _
  // Predicated region
  $region30: #{net_forward.1} parent=0 // pred_check
    _
  $region31: #{net_forward.1} parent=0 // pred_check_branch
    %29 = sbr.rel (0) target = $region33
  $region32: #{net_forward.1} parent=0 // pred_region
    _
  $region33: #{net_forward.1} parent=0 // pred_fallthru
    _
  // Predicated region
  $region34: #{net_forward.1} parent=0 // pred_check
    _
  $region35: #{net_forward.1} parent=0 // pred_check_branch
    %31 = sbr.rel (0) target = $region37
  $region36: #{net_forward.1} parent=0 // pred_region
    _
  $region37: #{net_forward.1} parent=0 // pred_fallthru
    _
  %v33 = vld [vmem:[%s0] sm:$0xff]
  %v34 = vld [vmem:[%s0 + $0x8] sm:$0xff]
  %v35 = vld [vmem:[%s0 + $0x10] sm:$0xff]
  %v36 = vld [vmem:[%s0 + $0x18] sm:$0xf]
  %v37 = vld [vmem:[%s0 + $0x20] sm:$0xff]
  %v38 = vld [vmem:[%s0 + $0x28] sm:$0xff]
  %v39 = vld [vmem:[%s0 + $0x30] sm:$0xff]
  %v40 = vld [vmem:[%s0 + $0x38] sm:$0xf]
  %v41 = vld [vmem:[%s0 + $0x40] sm:$0xff]
  %v42 = vld [vmem:[%s0 + $0x48] sm:$0xff]
  %v43 = vld [vmem:[%s0 + $0x50] sm:$0xff]
  %v44 = vld [vmem:[%s0 + $0x58] sm:$0xf]
  %v45 = vld [vmem:[%s0 + $0x60] sm:$0xff]
  %v46 = vld [vmem:[%s0 + $0x68] sm:$0xff]
  %v47 = vld [vmem:[%s0 + $0x70] sm:$0xff]
  %v48 = vld [vmem:[%s0 + $0x78] sm:$0xf]
  %v49 = vld [vmem:[%s0 + $0x80] sm:$0xff]
  %v50 = vld [vmem:[%s0 + $0x88] sm:$0xff]
  %v51 = vld [vmem:[%s0 + $0x90] sm:$0xff]
  %v52 = vld [vmem:[%s0 + $0x98] sm:$0xf]
  %v53 = vld [vmem:[%s0 + $0xa0] sm:$0xff]
  %v54 = vld [vmem:[%s0 + $0xa8] sm:$0xff]
  %v55 = vld [vmem:[%s0 + $0xb0] sm:$0xff]
  %v56 = vld [vmem:[%s0 + $0xb8] sm:$0xf]
  %v57 = vld [vmem:[%s0 + $0xc0] sm:$0xff]
  %v58 = vld [vmem:[%s0 + $0xc8] sm:$0xff]
  %v59 = vld [vmem:[%s0 + $0xd0] sm:$0xff]
  %v60 = vld [vmem:[%s0 + $0xd8] sm:$0xf]
  %v61 = vld [vmem:[%s0 + $0xe0] sm:$0xff]
  %v62 = vld [vmem:[%s0 + $0xe8] sm:$0xff]
  %v63 = vld [vmem:[%s0 + $0xf0] sm:$0xff]
  %v64 = vld [vmem:[%s0 + $0xf8] sm:$0xf]
  %vm97 = vcmask 1046528
  %v98 = vrot.slane %v33, 1
  %v99 = vrot.slane %v34, 1
  %v100 = vsel %vm97, %v98, %v99
  %v101 = vrot.slane %v35, 1
  %v102 = vsel %vm97, %v99, %v101
  %v103 = vrot.slane %v36, 1
  %v104 = vsel %vm97, %v101, %v103
  %v105 = vrot.slane %v37, 1
  %v106 = vrot.slane %v38, 1
  %v107 = vsel %vm97, %v105, %v106
  %v108 = vrot.slane %v39, 1
  %v109 = vsel %vm97, %v106, %v108
  %v110 = vrot.slane %v40, 1
  %v111 = vsel %vm97, %v108, %v110
  %v112 = vrot.slane %v41, 1
  %v113 = vrot.slane %v42, 1
  %v114 = vsel %vm97, %v112, %v113
  %v115 = vrot.slane %v43, 1
  %v116 = vsel %vm97, %v113, %v115
  %v117 = vrot.slane %v44, 1
  %v118 = vsel %vm97, %v115, %v117
  %v119 = vrot.slane %v45, 1
  %v120 = vrot.slane %v46, 1
  %v121 = vsel %vm97, %v119, %v120
  %v122 = vrot.slane %v47, 1
  %v123 = vsel %vm97, %v120, %v122
  %v124 = vrot.slane %v48, 1
  %v125 = vsel %vm97, %v122, %v124
  %v126 = vrot.slane %v49, 1
  %v127 = vrot.slane %v50, 1
  %v128 = vsel %vm97, %v126, %v127
  %v129 = vrot.slane %v51, 1
  %v130 = vsel %vm97, %v127, %v129
  %v131 = vrot.slane %v52, 1
  %v132 = vsel %vm97, %v129, %v131
  %v133 = vrot.slane %v53, 1
  %v134 = vrot.slane %v54, 1
  %v135 = vsel %vm97, %v133, %v134
  %v136 = vrot.slane %v55, 1
  %v137 = vsel %vm97, %v134, %v136
  %v138 = vrot.slane %v56, 1
  %v139 = vsel %vm97, %v136, %v138
  %v140 = vrot.slane %v57, 1
  %v141 = vrot.slane %v58, 1
  %v142 = vsel %vm97, %v140, %v141
  %v143 = vrot.slane %v59, 1
  %v144 = vsel %vm97, %v141, %v143
  %v145 = vrot.slane %v60, 1
  %v146 = vsel %vm97, %v143, %v145
  %v147 = vrot.slane %v61, 1
  %v148 = vrot.slane %v62, 1
  %v149 = vsel %vm97, %v147, %v148
  %v150 = vrot.slane %v63, 1
  %v151 = vsel %vm97, %v148, %v150
  %v152 = vrot.slane %v64, 1
  %v153 = vsel %vm97, %v150, %v152
  %154 = vrot.lane.b32.xlu0 %v100, 28
  %v155 = vpop.permute.xlu0 %154
  %156 = vrot.lane.b32.xlu0 %v102, 28
  %v157 = vpop.permute.xlu0 %156
  %158 = vrot.lane.b32.xlu0 %v104, 28
  %v159 = vpop.permute.xlu0 %158
  %160 = vrot.lane.b32.xlu0 %v107, 28
  %v161 = vpop.permute.xlu0 %160
  %162 = vrot.lane.b32.xlu0 %v109, 28
  %v163 = vpop.permute.xlu0 %162
  %164 = vrot.lane.b32.xlu0 %v111, 28
  %v165 = vpop.permute.xlu0 %164
  %166 = vrot.lane.b32.xlu0 %v114, 28
  %v167 = vpop.permute.xlu0 %166
  %168 = vrot.lane.b32.xlu0 %v116, 28
  %v169 = vpop.permute.xlu0 %168
  %170 = vrot.lane.b32.xlu0 %v118, 28
  %v171 = vpop.permute.xlu0 %170
  %172 = vrot.lane.b32.xlu0 %v121, 28
  %v173 = vpop.permute.xlu0 %172
  %174 = vrot.lane.b32.xlu0 %v123, 28
  %v175 = vpop.permute.xlu0 %174
  %176 = vrot.lane.b32.xlu0 %v125, 28
  %v177 = vpop.permute.xlu0 %176
  %178 = vrot.lane.b32.xlu0 %v128, 28
  %v179 = vpop.permute.xlu0 %178
  %180 = vrot.lane.b32.xlu0 %v130, 28
  %v181 = vpop.permute.xlu0 %180
  %182 = vrot.lane.b32.xlu0 %v132, 28
  %v183 = vpop.permute.xlu0 %182
  %184 = vrot.lane.b32.xlu0 %v135, 28
  %v185 = vpop.permute.xlu0 %184
  %186 = vrot.lane.b32.xlu0 %v137, 28
  %v187 = vpop.permute.xlu0 %186
  %188 = vrot.lane.b32.xlu0 %v139, 28
  %v189 = vpop.permute.xlu0 %188
  %190 = vrot.lane.b32.xlu0 %v142, 28
  %v191 = vpop.permute.xlu0 %190
  %192 = vrot.lane.b32.xlu0 %v144, 28
  %v193 = vpop.permute.xlu0 %192
  %194 = vrot.lane.b32.xlu0 %v146, 28
  %v195 = vpop.permute.xlu0 %194
  %196 = vrot.lane.b32.xlu0 %v149, 28
  %v197 = vpop.permute.xlu0 %196
  %198 = vrot.lane.b32.xlu0 %v151, 28
  %v199 = vpop.permute.xlu0 %198
  %200 = vrot.lane.b32.xlu0 %v153, 28
  %v201 = vpop.permute.xlu0 %200
  %vm226 = vcmask 1045504
  %v227 = vrot.slane %v33, 2
  %v228 = vrot.slane %v34, 2
  %v229 = vsel %vm226, %v227, %v228
  %v230 = vrot.slane %v35, 2
  %v231 = vsel %vm226, %v228, %v230
  %v232 = vrot.slane %v36, 2
  %v233 = vsel %vm226, %v230, %v232
  %v234 = vrot.slane %v37, 2
  %v235 = vrot.slane %v38, 2
  %v236 = vsel %vm226, %v234, %v235
  %v237 = vrot.slane %v39, 2
  %v238 = vsel %vm226, %v235, %v237
  %v239 = vrot.slane %v40, 2
  %v240 = vsel %vm226, %v237, %v239
  %v241 = vrot.slane %v41, 2
  %v242 = vrot.slane %v42, 2
  %v243 = vsel %vm226, %v241, %v242
  %v244 = vrot.slane %v43, 2
  %v245 = vsel %vm226, %v242, %v244
  %v246 = vrot.slane %v44, 2
  %v247 = vsel %vm226, %v244, %v246
  %v248 = vrot.slane %v45, 2
  %v249 = vrot.slane %v46, 2
  %v250 = vsel %vm226, %v248, %v249
  %v251 = vrot.slane %v47, 2
  %v252 = vsel %vm226, %v249, %v251
  %v253 = vrot.slane %v48, 2
  %v254 = vsel %vm226, %v251, %v253
  %v255 = vrot.slane %v49, 2
  %v256 = vrot.slane %v50, 2
  %v257 = vsel %vm226, %v255, %v256
  %v258 = vrot.slane %v51, 2
  %v259 = vsel %vm226, %v256, %v258
  %v260 = vrot.slane %v52, 2
  %v261 = vsel %vm226, %v258, %v260
  %v262 = vrot.slane %v53, 2
  %v263 = vrot.slane %v54, 2
  %v264 = vsel %vm226, %v262, %v263
  %v265 = vrot.slane %v55, 2
  %v266 = vsel %vm226, %v263, %v265
  %v267 = vrot.slane %v56, 2
  %v268 = vsel %vm226, %v265, %v267
  %v269 = vrot.slane %v57, 2
  %v270 = vrot.slane %v58, 2
  %v271 = vsel %vm226, %v269, %v270
  %v272 = vrot.slane %v59, 2
  %v273 = vsel %vm226, %v270, %v272
  %v274 = vrot.slane %v60, 2
  %v275 = vsel %vm226, %v272, %v274
  %v276 = vrot.slane %v61, 2
  %v277 = vrot.slane %v62, 2
  %v278 = vsel %vm226, %v276, %v277
  %v279 = vrot.slane %v63, 2
  %v280 = vsel %vm226, %v277, %v279
  %v281 = vrot.slane %v64, 2
  %v282 = vsel %vm226, %v279, %v281
  %283 = vrot.lane.b32.xlu0 %v229, 56
  %v284 = vpop.permute.xlu0 %283
  %285 = vrot.lane.b32.xlu0 %v231, 56
  %v286 = vpop.permute.xlu0 %285
  %287 = vrot.lane.b32.xlu0 %v233, 56
  %v288 = vpop.permute.xlu0 %287
  %289 = vrot.lane.b32.xlu0 %v236, 56
  %v290 = vpop.permute.xlu0 %289
  %291 = vrot.lane.b32.xlu0 %v238, 56
  %v292 = vpop.permute.xlu0 %291
  %293 = vrot.lane.b32.xlu0 %v240, 56
  %v294 = vpop.permute.xlu0 %293
  %295 = vrot.lane.b32.xlu0 %v243, 56
  %v296 = vpop.permute.xlu0 %295
  %297 = vrot.lane.b32.xlu0 %v245, 56
  %v298 = vpop.permute.xlu0 %297
  %299 = vrot.lane.b32.xlu0 %v247, 56
  %v300 = vpop.permute.xlu0 %299
  %301 = vrot.lane.b32.xlu0 %v250, 56
  %v302 = vpop.permute.xlu0 %301
  %303 = vrot.lane.b32.xlu0 %v252, 56
  %v304 = vpop.permute.xlu0 %303
  %305 = vrot.lane.b32.xlu0 %v254, 56
  %v306 = vpop.permute.xlu0 %305
  %307 = vrot.lane.b32.xlu0 %v257, 56
  %v308 = vpop.permute.xlu0 %307
  %309 = vrot.lane.b32.xlu0 %v259, 56
  %v310 = vpop.permute.xlu0 %309
  %311 = vrot.lane.b32.xlu0 %v261, 56
  %v312 = vpop.permute.xlu0 %311
  %313 = vrot.lane.b32.xlu0 %v264, 56
  %v314 = vpop.permute.xlu0 %313
  %315 = vrot.lane.b32.xlu0 %v266, 56
  %v316 = vpop.permute.xlu0 %315
  %317 = vrot.lane.b32.xlu0 %v268, 56
  %v318 = vpop.permute.xlu0 %317
  %319 = vrot.lane.b32.xlu0 %v271, 56
  %v320 = vpop.permute.xlu0 %319
  %321 = vrot.lane.b32.xlu0 %v273, 56
  %v322 = vpop.permute.xlu0 %321
  %323 = vrot.lane.b32.xlu0 %v275, 56
  %v324 = vpop.permute.xlu0 %323
  %325 = vrot.lane.b32.xlu0 %v278, 56
  %v326 = vpop.permute.xlu0 %325
  %327 = vrot.lane.b32.xlu0 %v280, 56
  %v328 = vpop.permute.xlu0 %327
  %329 = vrot.lane.b32.xlu0 %v282, 56
  %v330 = vpop.permute.xlu0 %329
  %vm355 = vcmask 1044480
  %v356 = vrot.slane %v33, 3
  %v357 = vrot.slane %v34, 3
  %v358 = vsel %vm355, %v356, %v357
  %v359 = vrot.slane %v35, 3
  %v360 = vsel %vm355, %v357, %v359
  %v361 = vrot.slane %v36, 3
  %v362 = vsel %vm355, %v359, %v361
  %v363 = vrot.slane %v37, 3
  %v364 = vrot.slane %v38, 3
  %v365 = vsel %vm355, %v363, %v364
  %v366 = vrot.slane %v39, 3
  %v367 = vsel %vm355, %v364, %v366
  %v368 = vrot.slane %v40, 3
  %v369 = vsel %vm355, %v366, %v368
  %v370 = vrot.slane %v41, 3
  %v371 = vrot.slane %v42, 3
  %v372 = vsel %vm355, %v370, %v371
  %v373 = vrot.slane %v43, 3
  %v374 = vsel %vm355, %v371, %v373
  %v375 = vrot.slane %v44, 3
  %v376 = vsel %vm355, %v373, %v375
  %v377 = vrot.slane %v45, 3
  %v378 = vrot.slane %v46, 3
  %v379 = vsel %vm355, %v377, %v378
  %v380 = vrot.slane %v47, 3
  %v381 = vsel %vm355, %v378, %v380
  %v382 = vrot.slane %v48, 3
  %v383 = vsel %vm355, %v380, %v382
  %v384 = vrot.slane %v49, 3
  %v385 = vrot.slane %v50, 3
  %v386 = vsel %vm355, %v384, %v385
  %v387 = vrot.slane %v51, 3
  %v388 = vsel %vm355, %v385, %v387
  %v389 = vrot.slane %v52, 3
  %v390 = vsel %vm355, %v387, %v389
  %v391 = vrot.slane %v53, 3
  %v392 = vrot.slane %v54, 3
  %v393 = vsel %vm355, %v391, %v392
  %v394 = vrot.slane %v55, 3
  %v395 = vsel %vm355, %v392, %v394
  %v396 = vrot.slane %v56, 3
  %v397 = vsel %vm355, %v394, %v396
  %v398 = vrot.slane %v57, 3
  %v399 = vrot.slane %v58, 3
  %v400 = vsel %vm355, %v398, %v399
  %v401 = vrot.slane %v59, 3
  %v402 = vsel %vm355, %v399, %v401
  %v403 = vrot.slane %v60, 3
  %v404 = vsel %vm355, %v401, %v403
  %v405 = vrot.slane %v61, 3
  %v406 = vrot.slane %v62, 3
  %v407 = vsel %vm355, %v405, %v406
  %v408 = vrot.slane %v63, 3
  %v409 = vsel %vm355, %v406, %v408
  %v410 = vrot.slane %v64, 3
  %v411 = vsel %vm355, %v408, %v410
  %412 = vrot.lane.b32.xlu0 %v358, 84
  %v413 = vpop.permute.xlu0 %412
  %414 = vrot.lane.b32.xlu0 %v360, 84
  %v415 = vpop.permute.xlu0 %414
  %416 = vrot.lane.b32.xlu0 %v362, 84
  %v417 = vpop.permute.xlu0 %416
  %418 = vrot.lane.b32.xlu0 %v365, 84
  %v419 = vpop.permute.xlu0 %418
  %420 = vrot.lane.b32.xlu0 %v367, 84
  %v421 = vpop.permute.xlu0 %420
  %422 = vrot.lane.b32.xlu0 %v369, 84
  %v423 = vpop.permute.xlu0 %422
  %424 = vrot.lane.b32.xlu0 %v372, 84
  %v425 = vpop.permute.xlu0 %424
  %426 = vrot.lane.b32.xlu0 %v374, 84
  %v427 = vpop.permute.xlu0 %426
  %428 = vrot.lane.b32.xlu0 %v376, 84
  %v429 = vpop.permute.xlu0 %428
  %430 = vrot.lane.b32.xlu0 %v379, 84
  %v431 = vpop.permute.xlu0 %430
  %432 = vrot.lane.b32.xlu0 %v381, 84
  %v433 = vpop.permute.xlu0 %432
  %434 = vrot.lane.b32.xlu0 %v383, 84
  %v435 = vpop.permute.xlu0 %434
  %436 = vrot.lane.b32.xlu0 %v386, 84
  %v437 = vpop.permute.xlu0 %436
  %438 = vrot.lane.b32.xlu0 %v388, 84
  %v439 = vpop.permute.xlu0 %438
  %440 = vrot.lane.b32.xlu0 %v390, 84
  %v441 = vpop.permute.xlu0 %440
  %442 = vrot.lane.b32.xlu0 %v393, 84
  %v443 = vpop.permute.xlu0 %442
  %444 = vrot.lane.b32.xlu0 %v395, 84
  %v445 = vpop.permute.xlu0 %444
  %446 = vrot.lane.b32.xlu0 %v397, 84
  %v447 = vpop.permute.xlu0 %446
  %448 = vrot.lane.b32.xlu0 %v400, 84
  %v449 = vpop.permute.xlu0 %448
  %450 = vrot.lane.b32.xlu0 %v402, 84
  %v451 = vpop.permute.xlu0 %450
  %452 = vrot.lane.b32.xlu0 %v404, 84
  %v453 = vpop.permute.xlu0 %452
  %454 = vrot.lane.b32.xlu0 %v407, 84
  %v455 = vpop.permute.xlu0 %454
  %456 = vrot.lane.b32.xlu0 %v409, 84
  %v457 = vpop.permute.xlu0 %456
  %458 = vrot.lane.b32.xlu0 %v411, 84
  %v459 = vpop.permute.xlu0 %458
  %vm484 = vcmask 1043456
  %v485 = vrot.slane %v33, 4
  %v486 = vrot.slane %v34, 4
  %v487 = vsel %vm484, %v485, %v486
  %v488 = vrot.slane %v35, 4
  %v489 = vsel %vm484, %v486, %v488
  %v490 = vrot.slane %v36, 4
  %v491 = vsel %vm484, %v488, %v490
  %v492 = vrot.slane %v37, 4
  %v493 = vrot.slane %v38, 4
  %v494 = vsel %vm484, %v492, %v493
  %v495 = vrot.slane %v39, 4
  %v496 = vsel %vm484, %v493, %v495
  %v497 = vrot.slane %v40, 4
  %v498 = vsel %vm484, %v495, %v497
  %v499 = vrot.slane %v41, 4
  %v500 = vrot.slane %v42, 4
  %v501 = vsel %vm484, %v499, %v500
  %v502 = vrot.slane %v43, 4
  %v503 = vsel %vm484, %v500, %v502
  %v504 = vrot.slane %v44, 4
  %v505 = vsel %vm484, %v502, %v504
  %v506 = vrot.slane %v45, 4
  %v507 = vrot.slane %v46, 4
  %v508 = vsel %vm484, %v506, %v507
  %v509 = vrot.slane %v47, 4
  %v510 = vsel %vm484, %v507, %v509
  %v511 = vrot.slane %v48, 4
  %v512 = vsel %vm484, %v509, %v511
  %v513 = vrot.slane %v49, 4
  %v514 = vrot.slane %v50, 4
  %v515 = vsel %vm484, %v513, %v514
  %v516 = vrot.slane %v51, 4
  %v517 = vsel %vm484, %v514, %v516
  %v518 = vrot.slane %v52, 4
  %v519 = vsel %vm484, %v516, %v518
  %v520 = vrot.slane %v53, 4
  %v521 = vrot.slane %v54, 4
  %v522 = vsel %vm484, %v520, %v521
  %v523 = vrot.slane %v55, 4
  %v524 = vsel %vm484, %v521, %v523
  %v525 = vrot.slane %v56, 4
  %v526 = vsel %vm484, %v523, %v525
  %v527 = vrot.slane %v57, 4
  %v528 = vrot.slane %v58, 4
  %v529 = vsel %vm484, %v527, %v528
  %v530 = vrot.slane %v59, 4
  %v531 = vsel %vm484, %v528, %v530
  %v532 = vrot.slane %v60, 4
  %v533 = vsel %vm484, %v530, %v532
  %v534 = vrot.slane %v61, 4
  %v535 = vrot.slane %v62, 4
  %v536 = vsel %vm484, %v534, %v535
  %v537 = vrot.slane %v63, 4
  %v538 = vsel %vm484, %v535, %v537
  %v539 = vrot.slane %v64, 4
  %v540 = vsel %vm484, %v537, %v539
  %541 = vrot.lane.b32.xlu0 %v487, 112
  %v542 = vpop.permute.xlu0 %541
  %543 = vrot.lane.b32.xlu0 %v489, 112
  %v544 = vpop.permute.xlu0 %543
  %545 = vrot.lane.b32.xlu0 %v491, 112
  %v546 = vpop.permute.xlu0 %545
  %547 = vrot.lane.b32.xlu0 %v494, 112
  %v548 = vpop.permute.xlu0 %547
  %549 = vrot.lane.b32.xlu0 %v496, 112
  %v550 = vpop.permute.xlu0 %549
  %551 = vrot.lane.b32.xlu0 %v498, 112
  %v552 = vpop.permute.xlu0 %551
  %553 = vrot.lane.b32.xlu0 %v501, 112
  %v554 = vpop.permute.xlu0 %553
  %555 = vrot.lane.b32.xlu0 %v503, 112
  %v556 = vpop.permute.xlu0 %555
  %557 = vrot.lane.b32.xlu0 %v505, 112
  %v558 = vpop.permute.xlu0 %557
  %559 = vrot.lane.b32.xlu0 %v508, 112
  %v560 = vpop.permute.xlu0 %559
  %561 = vrot.lane.b32.xlu0 %v510, 112
  %v562 = vpop.permute.xlu0 %561
  %563 = vrot.lane.b32.xlu0 %v512, 112
  %v564 = vpop.permute.xlu0 %563
  %565 = vrot.lane.b32.xlu0 %v515, 112
  %v566 = vpop.permute.xlu0 %565
  %567 = vrot.lane.b32.xlu0 %v517, 112
  %v568 = vpop.permute.xlu0 %567
  %569 = vrot.lane.b32.xlu0 %v519, 112
  %v570 = vpop.permute.xlu0 %569
  %571 = vrot.lane.b32.xlu0 %v522, 112
  %v572 = vpop.permute.xlu0 %571
  %573 = vrot.lane.b32.xlu0 %v524, 112
  %v574 = vpop.permute.xlu0 %573
  %575 = vrot.lane.b32.xlu0 %v526, 112
  %v576 = vpop.permute.xlu0 %575
  %577 = vrot.lane.b32.xlu0 %v529, 112
  %v578 = vpop.permute.xlu0 %577
  %579 = vrot.lane.b32.xlu0 %v531, 112
  %v580 = vpop.permute.xlu0 %579
  %581 = vrot.lane.b32.xlu0 %v533, 112
  %v582 = vpop.permute.xlu0 %581
  %583 = vrot.lane.b32.xlu0 %v536, 112
  %v584 = vpop.permute.xlu0 %583
  %585 = vrot.lane.b32.xlu0 %v538, 112
  %v586 = vpop.permute.xlu0 %585
  %587 = vrot.lane.b32.xlu0 %v540, 112
  %v588 = vpop.permute.xlu0 %587
  %vm613 = vcmask 228352
  %v614 = vsel %vm613, %v33, %v155
  %v615 = vsel %vm613, %v34, %v157
  %v616 = vsel %vm613, %v35, %v159
  %v617 = vsel %vm613, %v37, %v161
  %v618 = vsel %vm613, %v38, %v163
  %v619 = vsel %vm613, %v39, %v165
  %v620 = vsel %vm613, %v41, %v167
  %v621 = vsel %vm613, %v42, %v169
  %v622 = vsel %vm613, %v43, %v171
  %v623 = vsel %vm613, %v45, %v173
  %v624 = vsel %vm613, %v46, %v175
  %v625 = vsel %vm613, %v47, %v177
  %v626 = vsel %vm613, %v49, %v179
  %v627 = vsel %vm613, %v50, %v181
  %v628 = vsel %vm613, %v51, %v183
  %v629 = vsel %vm613, %v53, %v185
  %v630 = vsel %vm613, %v54, %v187
  %v631 = vsel %vm613, %v55, %v189
  %v632 = vsel %vm613, %v57, %v191
  %v633 = vsel %vm613, %v58, %v193
  %v634 = vsel %vm613, %v59, %v195
  %v635 = vsel %vm613, %v61, %v197
  %v636 = vsel %vm613, %v62, %v199
  %v637 = vsel %vm613, %v63, %v201
  %vm638 = vcmask 457728
  %v639 = vsel %vm638, %v614, %v284
  %v640 = vsel %vm638, %v615, %v286
  %v641 = vsel %vm638, %v616, %v288
  %v642 = vsel %vm638, %v617, %v290
  %v643 = vsel %vm638, %v618, %v292
  %v644 = vsel %vm638, %v619, %v294
  %v645 = vsel %vm638, %v620, %v296
  %v646 = vsel %vm638, %v621, %v298
  %v647 = vsel %vm638, %v622, %v300
  %v648 = vsel %vm638, %v623, %v302
  %v649 = vsel %vm638, %v624, %v304
  %v650 = vsel %vm638, %v625, %v306
  %v651 = vsel %vm638, %v626, %v308
  %v652 = vsel %vm638, %v627, %v310
  %v653 = vsel %vm638, %v628, %v312
  %v654 = vsel %vm638, %v629, %v314
  %v655 = vsel %vm638, %v630, %v316
  %v656 = vsel %vm638, %v631, %v318
  %v657 = vsel %vm638, %v632, %v320
  %v658 = vsel %vm638, %v633, %v322
  %v659 = vsel %vm638, %v634, %v324
  %v660 = vsel %vm638, %v635, %v326
  %v661 = vsel %vm638, %v636, %v328
  %v662 = vsel %vm638, %v637, %v330
  %vm663 = vcmask 687104
  %v664 = vsel %vm663, %v639, %v413
  %v665 = vsel %vm663, %v640, %v415
  %v666 = vsel %vm663, %v641, %v417
  %v667 = vsel %vm663, %v642, %v419
  %v668 = vsel %vm663, %v643, %v421
  %v669 = vsel %vm663, %v644, %v423
  %v670 = vsel %vm663, %v645, %v425
  %v671 = vsel %vm663, %v646, %v427
  %v672 = vsel %vm663, %v647, %v429
  %v673 = vsel %vm663, %v648, %v431
  %v674 = vsel %vm663, %v649, %v433
  %v675 = vsel %vm663, %v650, %v435
  %v676 = vsel %vm663, %v651, %v437
  %v677 = vsel %vm663, %v652, %v439
  %v678 = vsel %vm663, %v653, %v441
  %v679 = vsel %vm663, %v654, %v443
  %v680 = vsel %vm663, %v655, %v445
  %v681 = vsel %vm663, %v656, %v447
  %v682 = vsel %vm663, %v657, %v449
  %v683 = vsel %vm663, %v658, %v451
  %v684 = vsel %vm663, %v659, %v453
  %v685 = vsel %vm663, %v660, %v455
  %v686 = vsel %vm663, %v661, %v457
  %v687 = vsel %vm663, %v662, %v459
  %vm688 = vcmask 916480
  %v689 = vsel %vm688, %v664, %v542
  %v690 = vsel %vm688, %v665, %v544
  %v691 = vsel %vm688, %v666, %v546
  %v692 = vsel %vm688, %v667, %v548
  %v693 = vsel %vm688, %v668, %v550
  %v694 = vsel %vm688, %v669, %v552
  %v695 = vsel %vm688, %v670, %v554
  %v696 = vsel %vm688, %v671, %v556
  %v697 = vsel %vm688, %v672, %v558
  %v698 = vsel %vm688, %v673, %v560
  %v699 = vsel %vm688, %v674, %v562
  %v700 = vsel %vm688, %v675, %v564
  %v701 = vsel %vm688, %v676, %v566
  %v702 = vsel %vm688, %v677, %v568
  %v703 = vsel %vm688, %v678, %v570
  %v704 = vsel %vm688, %v679, %v572
  %v705 = vsel %vm688, %v680, %v574
  %v706 = vsel %vm688, %v681, %v576
  %v707 = vsel %vm688, %v682, %v578
  %v708 = vsel %vm688, %v683, %v580
  %v709 = vsel %vm688, %v684, %v582
  %v710 = vsel %vm688, %v685, %v584
  %v711 = vsel %vm688, %v686, %v586
  %v712 = vsel %vm688, %v687, %v588
  %v713 = vpack.c.bf16 %v690, %v689
  %v714 = vpack.c.bf16 %v544, %v542
  %v715 = vpack.c.bf16 %v692, %v691
  %v716 = vpack.c.bf16 %v548, %v546
  %v717 = vpack.c.bf16 %v694, %v693
  %v718 = vpack.c.bf16 %v552, %v550
  %v719 = vpack.c.bf16 %v696, %v695
  %v720 = vpack.c.bf16 %v556, %v554
  %v721 = vpack.c.bf16 %v698, %v697
  %v722 = vpack.c.bf16 %v560, %v558
  %v723 = vpack.c.bf16 %v700, %v699
  %v724 = vpack.c.bf16 %v564, %v562
  %v725 = vpack.c.bf16 %v702, %v701
  %v726 = vpack.c.bf16 %v568, %v566
  %v727 = vpack.c.bf16 %v704, %v703
  %v728 = vpack.c.bf16 %v572, %v570
  %v729 = vpack.c.bf16 %v706, %v705
  %v730 = vpack.c.bf16 %v576, %v574
  %v731 = vpack.c.bf16 %v708, %v707
  %v732 = vpack.c.bf16 %v580, %v578
  %v733 = vpack.c.bf16 %v710, %v709
  %v734 = vpack.c.bf16 %v584, %v582
  %v735 = vpack.c.bf16 %v712, %v711
  %v736 = vpack.c.bf16 %v588, %v586
  %v737 = vld [vmem:[%s1] sm:$0xff]
  %v738 = vld [vmem:[%s1 + $0x8] sm:$0xff]
  %v739 = vld [vmem:[%s1 + $0x10] sm:$0xff]
  %v740 = vld [vmem:[%s1 + $0x18] sm:$0xff]
  %v741 = vld [vmem:[%s1 + $0x20] sm:$0xff]
  %v742 = vld [vmem:[%s1 + $0x28] sm:$0xff]
  %v743 = vld [vmem:[%s1 + $0x30] sm:$0xff]
  %v744 = vld [vmem:[%s1 + $0x38] sm:$0xff]
  %v745 = vld [vmem:[%s1 + $0x40] sm:$0xff]
  %v746 = vld [vmem:[%s1 + $0x48] sm:$0xff]
  %v747 = vld [vmem:[%s1 + $0x50] sm:$0xff]
  %v748 = vld [vmem:[%s1 + $0x58] sm:$0xff]
  %v749 = vld [vmem:[%s1 + $0x60] sm:$0xff]
  %v750 = vld [vmem:[%s1 + $0x68] sm:$0xff]
  %v751 = vld [vmem:[%s1 + $0x70] sm:$0xff]
  %v752 = vld [vmem:[%s1 + $0x78] sm:$0xff]
  %v753 = vld [vmem:[%s1 + $0x80] sm:$0xff]
  %v754 = vld [vmem:[%s1 + $0x88] sm:$0x33]
  %v755 = vld [vmem:[%s2] sm:$0x3]
  %v757 = vlaneseq
  %v758 = vshrl.u32 %v757, 7
  %v759 = vsub.s32 0, %v758
  %v760 = vrot.slane %v755, %v759
  %v761 = vlaneseq
  %v762 = vshrl.u32 %v761, 7
  %v763 = vsub.s32 1, %v762
  %v764 = vrot.slane %v755, %v763
  %v785 = vunpack.c.l.b16 %v737
  %v786 = vunpack.c.h.b16 %v737
  %v787 = vunpack.c.l.b16 %v738
  %v788 = vunpack.c.h.b16 %v738
  %v789 = vunpack.c.l.b16 %v739
  %v790 = vunpack.c.h.b16 %v739
  %v791 = vunpack.c.l.b16 %v740
  %v792 = vunpack.c.h.b16 %v740
  %v793 = vunpack.c.l.b16 %v741
  %v794 = vunpack.c.h.b16 %v741
  %v795 = vunpack.c.l.b16 %v742
  %v796 = vunpack.c.h.b16 %v742
  %v797 = vunpack.c.l.b16 %v743
  %v798 = vunpack.c.h.b16 %v743
  %v799 = vunpack.c.l.b16 %v744
  %v800 = vunpack.c.h.b16 %v744
  %v801 = vunpack.c.l.b16 %v745
  %v802 = vunpack.c.h.b16 %v745
  %v803 = vunpack.c.l.b16 %v746
  %v804 = vunpack.c.h.b16 %v746
  %v805 = vunpack.c.l.b16 %v747
  %v806 = vunpack.c.h.b16 %v747
  %v807 = vunpack.c.l.b16 %v748
  %v808 = vunpack.c.h.b16 %v748
  %v809 = vunpack.c.l.b16 %v749
  %v810 = vunpack.c.h.b16 %v749
  %v811 = vunpack.c.l.b16 %v750
  %v812 = vunpack.c.h.b16 %v750
  %v813 = vunpack.c.l.b16 %v751
  %v814 = vunpack.c.h.b16 %v751
  %v815 = vunpack.c.l.b16 %v752
  %v816 = vunpack.c.h.b16 %v752
  %v817 = vunpack.c.l.b16 %v753
  %v818 = vunpack.c.h.b16 %v753
  %v819 = vunpack.c.l.b16 %v754
  %v820 = vunpack.c.h.b16 %v754
  %v821 = vpack.c.b16 %v787, %v785
  %v822 = vpack.c.b16 %v788, %v786
  %v823 = vpack.c.b16 %v791, %v789
  %v824 = vpack.c.b16 %v792, %v790
  %v825 = vpack.c.b16 %v795, %v793
  %v826 = vpack.c.b16 %v796, %v794
  %v827 = vpack.c.b16 %v799, %v797
  %v828 = vpack.c.b16 %v800, %v798
  %v829 = vpack.c.b16 %v803, %v801
  %v830 = vpack.c.b16 %v804, %v802
  %v831 = vpack.c.b16 %v807, %v805
  %v832 = vpack.c.b16 %v808, %v806
  %v833 = vpack.c.b16 %v811, %v809
  %v834 = vpack.c.b16 %v812, %v810
  %v835 = vpack.c.b16 %v815, %v813
  %v836 = vpack.c.b16 %v816, %v814
  %v837 = vpack.c.b16 %v819, %v817
  %v838 = vpack.c.b16 %v820, %v818
  %vm855 = vcmask 97280
  %v857 = vsel %vm855, %v714, 0
  %v860 = vsel %vm855, %v716, 0
  %v863 = vsel %vm855, %v718, 0
  %v866 = vsel %vm855, %v720, 0
  %v869 = vsel %vm855, %v722, 0
  %v872 = vsel %vm855, %v724, 0
  %v875 = vsel %vm855, %v726, 0
  %v878 = vsel %vm855, %v728, 0
  %v881 = vsel %vm855, %v730, 0
  %v884 = vsel %vm855, %v732, 0
  %v887 = vsel %vm855, %v734, 0
  %v890 = vsel %vm855, %v736, 0
  %v893 = vsel %vm226, %v837, 0
  %v896 = vsel %vm226, %v838, 0
  %898 = vmatprep.subr.bf16.mxu0 %v822
  %899 = vmatpush1.bf16.msra.mxu0 %v821
  %900 = vmatprep.subr.bf16.mxu0 %v824
  %901 = vmatpush1.bf16.msra.mxu0 %v823
  %902 = vmatprep.subr.bf16.mxu0 %v826
  %903 = vmatpush1.bf16.msra.mxu0 %v825
  %904 = vmatprep.subr.bf16.mxu0 %v828
  %905 = vmatpush1.bf16.msra.mxu0 %v827
  %906 = vmatprep.subr.bf16.mxu0 %v830
  %907 = vmatpush1.bf16.msra.mxu0 %v829
  %908 = vmatprep.subr.bf16.mxu0 %v832
  %909 = vmatpush1.bf16.msra.mxu0 %v831
  %910 = vmatprep.subr.bf16.mxu0 %v834
  %911 = vmatpush1.bf16.msra.mxu0 %v833
  %912 = vmatprep.subr.bf16.mxu0 %v836
  %913 = vmatpush1.bf16.msra.mxu0 %v835
  %914 = vmatprep.subr.bf16.mxu0 %v896
  %915 = vmatpush1.bf16.msra.mxu0 %v893
  %916 = vmatprep.subr.bf16.mxu0 0
  %917 = vmatpush1.bf16.msra.mxu0 0
  %918 = vmatprep.subr.bf16.mxu0 0
  %919 = vmatpush1.bf16.msra.mxu0 0
  %920 = vmatprep.subr.bf16.mxu0 0
  %921 = vmatpush1.bf16.msra.mxu0 0
  %922 = vmatprep.subr.bf16.mxu0 0
  %923 = vmatpush1.bf16.msra.mxu0 0
  %924 = vmatprep.subr.bf16.mxu0 0
  %925 = vmatpush1.bf16.msra.mxu0 0
  %926 = vmatprep.subr.bf16.mxu0 0
  %927 = vmatpush1.bf16.msra.mxu0 0
  %928 = vmatprep.subr.bf16.mxu0 0
  %929 = vmatpush1.bf16.msra.mxu0 0
  %930 = vmatprep.mubr.bf16.mxu0 %v857
  %931 = vmatmul.mubr.bf16.gmra.mrb[0].mxu0 %v713
  %v932 = vpop.f32.mrb[0].mxu0
  %v933 = vadd.f32 %v760, %v932
  %v934 = vpop.f32.mrb[0].mxu0
  %v935 = vadd.f32 %v764, %v934
  %v936 = vpop.f32.mrb[0].mxu0
  %v937 = vadd.f32 %v760, %v936
  %v938 = vpop.f32.mrb[0].mxu0
  %v939 = vadd.f32 %v764, %v938
  %940 = vmatprep.mubr.bf16.mxu0 %v860
  %941 = vmatmul.mubr.bf16.gmra.mrb[0].mxu0 %v715
  %v942 = vpop.f32.mrb[0].mxu0
  %v943 = vadd.f32 %v760, %v942
  %v944 = vpop.f32.mrb[0].mxu0
  %v945 = vadd.f32 %v764, %v944
  %v946 = vpop.f32.mrb[0].mxu0
  %v947 = vadd.f32 %v760, %v946
  %v948 = vpop.f32.mrb[0].mxu0
  %v949 = vadd.f32 %v764, %v948
  %950 = vmatprep.mubr.bf16.mxu0 %v863
  %951 = vmatmul.mubr.bf16.gmra.mrb[0].mxu0 %v717
  %v952 = vpop.f32.mrb[0].mxu0
  %v953 = vadd.f32 %v760, %v952
  %v954 = vpop.f32.mrb[0].mxu0
  %v955 = vadd.f32 %v764, %v954
  %v956 = vpop.f32.mrb[0].mxu0
  %v957 = vadd.f32 %v760, %v956
  %v958 = vpop.f32.mrb[0].mxu0
  %v959 = vadd.f32 %v764, %v958
  %960 = vmatprep.mubr.bf16.mxu0 %v866
  %961 = vmatmul.mubr.bf16.gmra.mrb[0].mxu0 %v719
  %v962 = vpop.f32.mrb[0].mxu0
  %v963 = vadd.f32 %v760, %v962
  %v964 = vpop.f32.mrb[0].mxu0
  %v965 = vadd.f32 %v764, %v964
  %v966 = vpop.f32.mrb[0].mxu0
  %v967 = vadd.f32 %v760, %v966
  %v968 = vpop.f32.mrb[0].mxu0
  %v969 = vadd.f32 %v764, %v968
  %970 = vmatprep.mubr.bf16.mxu0 %v869
  %971 = vmatmul.mubr.bf16.gmra.mrb[0].mxu0 %v721
  %v972 = vpop.f32.mrb[0].mxu0
  %v973 = vadd.f32 %v760, %v972
  %v974 = vpop.f32.mrb[0].mxu0
  %v975 = vadd.f32 %v764, %v974
  %v976 = vpop.f32.mrb[0].mxu0
  %v977 = vadd.f32 %v760, %v976
  %v978 = vpop.f32.mrb[0].mxu0
  %v979 = vadd.f32 %v764, %v978
  %980 = vmatprep.mubr.bf16.mxu0 %v872
  %981 = vmatmul.mubr.bf16.gmra.mrb[0].mxu0 %v723
  %v982 = vpop.f32.mrb[0].mxu0
  %v983 = vadd.f32 %v760, %v982
  %v984 = vpop.f32.mrb[0].mxu0
  %v985 = vadd.f32 %v764, %v984
  %v986 = vpop.f32.mrb[0].mxu0
  %v987 = vadd.f32 %v760, %v986
  %v988 = vpop.f32.mrb[0].mxu0
  %v989 = vadd.f32 %v764, %v988
  %990 = vmatprep.mubr.bf16.mxu0 %v875
  %991 = vmatmul.mubr.bf16.gmra.mrb[0].mxu0 %v725
  %v992 = vpop.f32.mrb[0].mxu0
  %v993 = vadd.f32 %v760, %v992
  %v994 = vpop.f32.mrb[0].mxu0
  %v995 = vadd.f32 %v764, %v994
  %v996 = vpop.f32.mrb[0].mxu0
  %v997 = vadd.f32 %v760, %v996
  %v998 = vpop.f32.mrb[0].mxu0
  %v999 = vadd.f32 %v764, %v998
  %1000 = vmatprep.mubr.bf16.mxu0 %v878
  %1001 = vmatmul.mubr.bf16.gmra.mrb[0].mxu0 %v727
  %v1002 = vpop.f32.mrb[0].mxu0
  %v1003 = vadd.f32 %v760, %v1002
  %v1004 = vpop.f32.mrb[0].mxu0
  %v1005 = vadd.f32 %v764, %v1004
  %v1006 = vpop.f32.mrb[0].mxu0
  %v1007 = vadd.f32 %v760, %v1006
  %v1008 = vpop.f32.mrb[0].mxu0
  %v1009 = vadd.f32 %v764, %v1008
  %1010 = vmatprep.mubr.bf16.mxu0 %v881
  %1011 = vmatmul.mubr.bf16.gmra.mrb[0].mxu0 %v729
  %v1012 = vpop.f32.mrb[0].mxu0
  %v1013 = vadd.f32 %v760, %v1012
  %v1014 = vpop.f32.mrb[0].mxu0
  %v1015 = vadd.f32 %v764, %v1014
  %v1016 = vpop.f32.mrb[0].mxu0
  %v1017 = vadd.f32 %v760, %v1016
  %v1018 = vpop.f32.mrb[0].mxu0
  %v1019 = vadd.f32 %v764, %v1018
  %1020 = vmatprep.mubr.bf16.mxu0 %v884
  %1021 = vmatmul.mubr.bf16.gmra.mrb[0].mxu0 %v731
  %v1022 = vpop.f32.mrb[0].mxu0
  %v1023 = vadd.f32 %v760, %v1022
  %v1024 = vpop.f32.mrb[0].mxu0
  %v1025 = vadd.f32 %v764, %v1024
  %v1026 = vpop.f32.mrb[0].mxu0
  %v1027 = vadd.f32 %v760, %v1026
  %v1028 = vpop.f32.mrb[0].mxu0
  %v1029 = vadd.f32 %v764, %v1028
  %1030 = vmatprep.mubr.bf16.mxu0 %v887
  %1031 = vmatmul.mubr.bf16.gmra.mrb[0].mxu0 %v733
  %v1032 = vpop.f32.mrb[0].mxu0
  %v1033 = vadd.f32 %v760, %v1032
  %v1034 = vpop.f32.mrb[0].mxu0
  %v1035 = vadd.f32 %v764, %v1034
  %v1036 = vpop.f32.mrb[0].mxu0
  %v1037 = vadd.f32 %v760, %v1036
  %v1038 = vpop.f32.mrb[0].mxu0
  %v1039 = vadd.f32 %v764, %v1038
  %1040 = vmatprep.mubr.bf16.mxu0 %v890
  %1041 = vmatmul.mubr.bf16.gmra.mrb[0].mxu0 %v735
  %v1042 = vpop.f32.mrb[0].mxu0
  %v1043 = vadd.f32 %v760, %v1042
  %v1044 = vpop.f32.mrb[0].mxu0
  %v1045 = vadd.f32 %v764, %v1044
  %v1046 = vpop.f32.mrb[0].mxu0
  %v1047 = vadd.f32 %v760, %v1046
  %v1048 = vpop.f32.mrb[0].mxu0
  %v1049 = vadd.f32 %v764, %v1048
  %1050 = vdwg.mxu0
  %v1099 = vcombine.low %v933, %v935
  %v1100 = vcombine.high %v933, %v935
  %v1101 = vcombine.low %v937, %v939
  %v1102 = vcombine.high %v937, %v939
  %v1103 = vcombine.low %v943, %v945
  %v1104 = vcombine.high %v943, %v945
  %v1105 = vcombine.low %v947, %v949
  %v1106 = vcombine.high %v947, %v949
  %v1107 = vcombine.low %v953, %v955
  %v1108 = vcombine.high %v953, %v955
  %v1109 = vcombine.low %v957, %v959
  %v1110 = vcombine.high %v957, %v959
  %v1111 = vcombine.low %v963, %v965
  %v1112 = vcombine.high %v963, %v965
  %v1113 = vcombine.low %v967, %v969
  %v1114 = vcombine.high %v967, %v969
  %v1115 = vcombine.low %v973, %v975
  %v1116 = vcombine.high %v973, %v975
  %v1117 = vcombine.low %v977, %v979
  %v1118 = vcombine.high %v977, %v979
  %v1119 = vcombine.low %v983, %v985
  %v1120 = vcombine.high %v983, %v985
  %v1121 = vcombine.low %v987, %v989
  %v1122 = vcombine.high %v987, %v989
  %v1123 = vcombine.low %v993, %v995
  %v1124 = vcombine.high %v993, %v995
  %v1125 = vcombine.low %v997, %v999
  %v1126 = vcombine.high %v997, %v999
  %v1127 = vcombine.low %v1003, %v1005
  %v1128 = vcombine.high %v1003, %v1005
  %v1129 = vcombine.low %v1007, %v1009
  %v1130 = vcombine.high %v1007, %v1009
  %v1131 = vcombine.low %v1013, %v1015
  %v1132 = vcombine.high %v1013, %v1015
  %v1133 = vcombine.low %v1017, %v1019
  %v1134 = vcombine.high %v1017, %v1019
  %v1135 = vcombine.low %v1023, %v1025
  %v1136 = vcombine.high %v1023, %v1025
  %v1137 = vcombine.low %v1027, %v1029
  %v1138 = vcombine.high %v1027, %v1029
  %v1139 = vcombine.low %v1033, %v1035
  %v1140 = vcombine.high %v1033, %v1035
  %v1141 = vcombine.low %v1037, %v1039
  %v1142 = vcombine.high %v1037, %v1039
  %v1143 = vcombine.low %v1043, %v1045
  %v1144 = vcombine.high %v1043, %v1045
  %v1145 = vcombine.low %v1047, %v1049
  %v1146 = vcombine.high %v1047, %v1049
  %v1196 = vunpack.c.l.s4 1966171168
  %v1197 = vunpack.c.0.s8 %v1196
  %v1198 = vlaneseq
  %v1199 = vshrl.u32 %v1198, 7
  %v1200 = vsub.s32 %v1197, %v1199
  %v1201 = vrot.slane %v1099, %v1200
  %v1203 = vunpack.c.l.s4 1966171168
  %v1204 = vunpack.c.0.s8 %v1203
  %v1205 = vlaneseq
  %v1206 = vshrl.u32 %v1205, 7
  %v1207 = vsub.s32 %v1204, %v1206
  %v1208 = vrot.slane %v1100, %v1207
  %v1210 = vunpack.c.l.s4 1966171168
  %v1211 = vunpack.c.0.s8 %v1210
  %v1212 = vlaneseq
  %v1213 = vshrl.u32 %v1212, 7
  %v1214 = vsub.s32 %v1211, %v1213
  %v1215 = vrot.slane %v1101, %v1214
  %v1217 = vunpack.c.l.s4 1966171168
  %v1218 = vunpack.c.0.s8 %v1217
  %v1219 = vlaneseq
  %v1220 = vshrl.u32 %v1219, 7
  %v1221 = vsub.s32 %v1218, %v1220
  %v1222 = vrot.slane %v1102, %v1221
  %v1224 = vunpack.c.l.s4 1966171168
  %v1225 = vunpack.c.0.s8 %v1224
  %v1226 = vlaneseq
  %v1227 = vshrl.u32 %v1226, 7
  %v1228 = vsub.s32 %v1225, %v1227
  %v1229 = vrot.slane %v1103, %v1228
  %v1231 = vunpack.c.l.s4 1966171168
  %v1232 = vunpack.c.0.s8 %v1231
  %v1233 = vlaneseq
  %v1234 = vshrl.u32 %v1233, 7
  %v1235 = vsub.s32 %v1232, %v1234
  %v1236 = vrot.slane %v1104, %v1235
  %v1238 = vunpack.c.l.s4 1966171168
  %v1239 = vunpack.c.0.s8 %v1238
  %v1240 = vlaneseq
  %v1241 = vshrl.u32 %v1240, 7
  %v1242 = vsub.s32 %v1239, %v1241
  %v1243 = vrot.slane %v1105, %v1242
  %v1245 = vunpack.c.l.s4 1966171168
  %v1246 = vunpack.c.0.s8 %v1245
  %v1247 = vlaneseq
  %v1248 = vshrl.u32 %v1247, 7
  %v1249 = vsub.s32 %v1246, %v1248
  %v1250 = vrot.slane %v1106, %v1249
  %v1252 = vunpack.c.l.s4 1966171168
  %v1253 = vunpack.c.0.s8 %v1252
  %v1254 = vlaneseq
  %v1255 = vshrl.u32 %v1254, 7
  %v1256 = vsub.s32 %v1253, %v1255
  %v1257 = vrot.slane %v1107, %v1256
  %v1259 = vunpack.c.l.s4 1966171168
  %v1260 = vunpack.c.0.s8 %v1259
  %v1261 = vlaneseq
  %v1262 = vshrl.u32 %v1261, 7
  %v1263 = vsub.s32 %v1260, %v1262
  %v1264 = vrot.slane %v1108, %v1263
  %v1266 = vunpack.c.l.s4 1966171168
  %v1267 = vunpack.c.0.s8 %v1266
  %v1268 = vlaneseq
  %v1269 = vshrl.u32 %v1268, 7
  %v1270 = vsub.s32 %v1267, %v1269
  %v1271 = vrot.slane %v1109, %v1270
  %v1273 = vunpack.c.l.s4 1966171168
  %v1274 = vunpack.c.0.s8 %v1273
  %v1275 = vlaneseq
  %v1276 = vshrl.u32 %v1275, 7
  %v1277 = vsub.s32 %v1274, %v1276
  %v1278 = vrot.slane %v1110, %v1277
  %v1280 = vunpack.c.l.s4 1966171168
  %v1281 = vunpack.c.0.s8 %v1280
  %v1282 = vlaneseq
  %v1283 = vshrl.u32 %v1282, 7
  %v1284 = vsub.s32 %v1281, %v1283
  %v1285 = vrot.slane %v1111, %v1284
  %v1287 = vunpack.c.l.s4 1966171168
  %v1288 = vunpack.c.0.s8 %v1287
  %v1289 = vlaneseq
  %v1290 = vshrl.u32 %v1289, 7
  %v1291 = vsub.s32 %v1288, %v1290
  %v1292 = vrot.slane %v1112, %v1291
  %v1294 = vunpack.c.l.s4 1966171168
  %v1295 = vunpack.c.0.s8 %v1294
  %v1296 = vlaneseq
  %v1297 = vshrl.u32 %v1296, 7
  %v1298 = vsub.s32 %v1295, %v1297
  %v1299 = vrot.slane %v1113, %v1298
  %v1301 = vunpack.c.l.s4 1966171168
  %v1302 = vunpack.c.0.s8 %v1301
  %v1303 = vlaneseq
  %v1304 = vshrl.u32 %v1303, 7
  %v1305 = vsub.s32 %v1302, %v1304
  %v1306 = vrot.slane %v1114, %v1305
  %v1308 = vunpack.c.l.s4 1966171168
  %v1309 = vunpack.c.0.s8 %v1308
  %v1310 = vlaneseq
  %v1311 = vshrl.u32 %v1310, 7
  %v1312 = vsub.s32 %v1309, %v1311
  %v1313 = vrot.slane %v1115, %v1312
  %v1315 = vunpack.c.l.s4 1966171168
  %v1316 = vunpack.c.0.s8 %v1315
  %v1317 = vlaneseq
  %v1318 = vshrl.u32 %v1317, 7
  %v1319 = vsub.s32 %v1316, %v1318
  %v1320 = vrot.slane %v1116, %v1319
  %v1322 = vunpack.c.l.s4 1966171168
  %v1323 = vunpack.c.0.s8 %v1322
  %v1324 = vlaneseq
  %v1325 = vshrl.u32 %v1324, 7
  %v1326 = vsub.s32 %v1323, %v1325
  %v1327 = vrot.slane %v1117, %v1326
  %v1329 = vunpack.c.l.s4 1966171168
  %v1330 = vunpack.c.0.s8 %v1329
  %v1331 = vlaneseq
  %v1332 = vshrl.u32 %v1331, 7
  %v1333 = vsub.s32 %v1330, %v1332
  %v1334 = vrot.slane %v1118, %v1333
  %v1336 = vunpack.c.l.s4 1966171168
  %v1337 = vunpack.c.0.s8 %v1336
  %v1338 = vlaneseq
  %v1339 = vshrl.u32 %v1338, 7
  %v1340 = vsub.s32 %v1337, %v1339
  %v1341 = vrot.slane %v1119, %v1340
  %v1343 = vunpack.c.l.s4 1966171168
  %v1344 = vunpack.c.0.s8 %v1343
  %v1345 = vlaneseq
  %v1346 = vshrl.u32 %v1345, 7
  %v1347 = vsub.s32 %v1344, %v1346
  %v1348 = vrot.slane %v1120, %v1347
  %v1350 = vunpack.c.l.s4 1966171168
  %v1351 = vunpack.c.0.s8 %v1350
  %v1352 = vlaneseq
  %v1353 = vshrl.u32 %v1352, 7
  %v1354 = vsub.s32 %v1351, %v1353
  %v1355 = vrot.slane %v1121, %v1354
  %v1357 = vunpack.c.l.s4 1966171168
  %v1358 = vunpack.c.0.s8 %v1357
  %v1359 = vlaneseq
  %v1360 = vshrl.u32 %v1359, 7
  %v1361 = vsub.s32 %v1358, %v1360
  %v1362 = vrot.slane %v1122, %v1361
  %v1364 = vunpack.c.l.s4 1966171168
  %v1365 = vunpack.c.0.s8 %v1364
  %v1366 = vlaneseq
  %v1367 = vshrl.u32 %v1366, 7
  %v1368 = vsub.s32 %v1365, %v1367
  %v1369 = vrot.slane %v1123, %v1368
  %v1371 = vunpack.c.l.s4 1966171168
  %v1372 = vunpack.c.0.s8 %v1371
  %v1373 = vlaneseq
  %v1374 = vshrl.u32 %v1373, 7
  %v1375 = vsub.s32 %v1372, %v1374
  %v1376 = vrot.slane %v1124, %v1375
  %v1378 = vunpack.c.l.s4 1966171168
  %v1379 = vunpack.c.0.s8 %v1378
  %v1380 = vlaneseq
  %v1381 = vshrl.u32 %v1380, 7
  %v1382 = vsub.s32 %v1379, %v1381
  %v1383 = vrot.slane %v1125, %v1382
  %v1385 = vunpack.c.l.s4 1966171168
  %v1386 = vunpack.c.0.s8 %v1385
  %v1387 = vlaneseq
  %v1388 = vshrl.u32 %v1387, 7
  %v1389 = vsub.s32 %v1386, %v1388
  %v1390 = vrot.slane %v1126, %v1389
  %v1392 = vunpack.c.l.s4 1966171168
  %v1393 = vunpack.c.0.s8 %v1392
  %v1394 = vlaneseq
  %v1395 = vshrl.u32 %v1394, 7
  %v1396 = vsub.s32 %v1393, %v1395
  %v1397 = vrot.slane %v1127, %v1396
  %v1399 = vunpack.c.l.s4 1966171168
  %v1400 = vunpack.c.0.s8 %v1399
  %v1401 = vlaneseq
  %v1402 = vshrl.u32 %v1401, 7
  %v1403 = vsub.s32 %v1400, %v1402
  %v1404 = vrot.slane %v1128, %v1403
  %v1406 = vunpack.c.l.s4 1966171168
  %v1407 = vunpack.c.0.s8 %v1406
  %v1408 = vlaneseq
  %v1409 = vshrl.u32 %v1408, 7
  %v1410 = vsub.s32 %v1407, %v1409
  %v1411 = vrot.slane %v1129, %v1410
  %v1413 = vunpack.c.l.s4 1966171168
  %v1414 = vunpack.c.0.s8 %v1413
  %v1415 = vlaneseq
  %v1416 = vshrl.u32 %v1415, 7
  %v1417 = vsub.s32 %v1414, %v1416
  %v1418 = vrot.slane %v1130, %v1417
  %v1420 = vunpack.c.l.s4 1966171168
  %v1421 = vunpack.c.0.s8 %v1420
  %v1422 = vlaneseq
  %v1423 = vshrl.u32 %v1422, 7
  %v1424 = vsub.s32 %v1421, %v1423
  %v1425 = vrot.slane %v1131, %v1424
  %v1427 = vunpack.c.l.s4 1966171168
  %v1428 = vunpack.c.0.s8 %v1427
  %v1429 = vlaneseq
  %v1430 = vshrl.u32 %v1429, 7
  %v1431 = vsub.s32 %v1428, %v1430
  %v1432 = vrot.slane %v1132, %v1431
  %v1434 = vunpack.c.l.s4 1966171168
  %v1435 = vunpack.c.0.s8 %v1434
  %v1436 = vlaneseq
  %v1437 = vshrl.u32 %v1436, 7
  %v1438 = vsub.s32 %v1435, %v1437
  %v1439 = vrot.slane %v1133, %v1438
  %v1441 = vunpack.c.l.s4 1966171168
  %v1442 = vunpack.c.0.s8 %v1441
  %v1443 = vlaneseq
  %v1444 = vshrl.u32 %v1443, 7
  %v1445 = vsub.s32 %v1442, %v1444
  %v1446 = vrot.slane %v1134, %v1445
  %v1448 = vunpack.c.l.s4 1966171168
  %v1449 = vunpack.c.0.s8 %v1448
  %v1450 = vlaneseq
  %v1451 = vshrl.u32 %v1450, 7
  %v1452 = vsub.s32 %v1449, %v1451
  %v1453 = vrot.slane %v1135, %v1452
  %v1455 = vunpack.c.l.s4 1966171168
  %v1456 = vunpack.c.0.s8 %v1455
  %v1457 = vlaneseq
  %v1458 = vshrl.u32 %v1457, 7
  %v1459 = vsub.s32 %v1456, %v1458
  %v1460 = vrot.slane %v1136, %v1459
  %v1462 = vunpack.c.l.s4 1966171168
  %v1463 = vunpack.c.0.s8 %v1462
  %v1464 = vlaneseq
  %v1465 = vshrl.u32 %v1464, 7
  %v1466 = vsub.s32 %v1463, %v1465
  %v1467 = vrot.slane %v1137, %v1466
  %v1469 = vunpack.c.l.s4 1966171168
  %v1470 = vunpack.c.0.s8 %v1469
  %v1471 = vlaneseq
  %v1472 = vshrl.u32 %v1471, 7
  %v1473 = vsub.s32 %v1470, %v1472
  %v1474 = vrot.slane %v1138, %v1473
  %v1476 = vunpack.c.l.s4 1966171168
  %v1477 = vunpack.c.0.s8 %v1476
  %v1478 = vlaneseq
  %v1479 = vshrl.u32 %v1478, 7
  %v1480 = vsub.s32 %v1477, %v1479
  %v1481 = vrot.slane %v1139, %v1480
  %v1483 = vunpack.c.l.s4 1966171168
  %v1484 = vunpack.c.0.s8 %v1483
  %v1485 = vlaneseq
  %v1486 = vshrl.u32 %v1485, 7
  %v1487 = vsub.s32 %v1484, %v1486
  %v1488 = vrot.slane %v1140, %v1487
  %v1490 = vunpack.c.l.s4 1966171168
  %v1491 = vunpack.c.0.s8 %v1490
  %v1492 = vlaneseq
  %v1493 = vshrl.u32 %v1492, 7
  %v1494 = vsub.s32 %v1491, %v1493
  %v1495 = vrot.slane %v1141, %v1494
  %v1497 = vunpack.c.l.s4 1966171168
  %v1498 = vunpack.c.0.s8 %v1497
  %v1499 = vlaneseq
  %v1500 = vshrl.u32 %v1499, 7
  %v1501 = vsub.s32 %v1498, %v1500
  %v1502 = vrot.slane %v1142, %v1501
  %v1504 = vunpack.c.l.s4 1966171168
  %v1505 = vunpack.c.0.s8 %v1504
  %v1506 = vlaneseq
  %v1507 = vshrl.u32 %v1506, 7
  %v1508 = vsub.s32 %v1505, %v1507
  %v1509 = vrot.slane %v1143, %v1508
  %v1511 = vunpack.c.l.s4 1966171168
  %v1512 = vunpack.c.0.s8 %v1511
  %v1513 = vlaneseq
  %v1514 = vshrl.u32 %v1513, 7
  %v1515 = vsub.s32 %v1512, %v1514
  %v1516 = vrot.slane %v1144, %v1515
  %v1518 = vunpack.c.l.s4 1966171168
  %v1519 = vunpack.c.0.s8 %v1518
  %v1520 = vlaneseq
  %v1521 = vshrl.u32 %v1520, 7
  %v1522 = vsub.s32 %v1519, %v1521
  %v1523 = vrot.slane %v1145, %v1522
  %v1525 = vunpack.c.l.s4 1966171168
  %v1526 = vunpack.c.0.s8 %v1525
  %v1527 = vlaneseq
  %v1528 = vshrl.u32 %v1527, 7
  %v1529 = vsub.s32 %v1526, %v1528
  %v1530 = vrot.slane %v1146, %v1529
  %v1579 = vrot.slane %v1201, 4
  %v1580 = vrot.slane %v1208, 4
  %v1581 = vrot.slane %v1215, 4
  %v1582 = vrot.slane %v1222, 4
  %v1583 = vrot.slane %v1229, 4
  %v1584 = vrot.slane %v1236, 4
  %v1585 = vrot.slane %v1243, 4
  %v1586 = vrot.slane %v1250, 4
  %v1587 = vrot.slane %v1257, 4
  %v1588 = vrot.slane %v1264, 4
  %v1589 = vrot.slane %v1271, 4
  %v1590 = vrot.slane %v1278, 4
  %v1591 = vrot.slane %v1285, 4
  %v1592 = vrot.slane %v1292, 4
  %v1593 = vrot.slane %v1299, 4
  %v1594 = vrot.slane %v1306, 4
  %v1595 = vrot.slane %v1313, 4
  %v1596 = vrot.slane %v1320, 4
  %v1597 = vrot.slane %v1327, 4
  %v1598 = vrot.slane %v1334, 4
  %v1599 = vrot.slane %v1341, 4
  %v1600 = vrot.slane %v1348, 4
  %v1601 = vrot.slane %v1355, 4
  %v1602 = vrot.slane %v1362, 4
  %v1603 = vrot.slane %v1369, 4
  %v1604 = vrot.slane %v1376, 4
  %v1605 = vrot.slane %v1383, 4
  %v1606 = vrot.slane %v1390, 4
  %v1607 = vrot.slane %v1397, 4
  %v1608 = vrot.slane %v1404, 4
  %v1609 = vrot.slane %v1411, 4
  %v1610 = vrot.slane %v1418, 4
  %v1611 = vrot.slane %v1425, 4
  %v1612 = vrot.slane %v1432, 4
  %v1613 = vrot.slane %v1439, 4
  %v1614 = vrot.slane %v1446, 4
  %v1615 = vrot.slane %v1453, 4
  %v1616 = vrot.slane %v1460, 4
  %v1617 = vrot.slane %v1467, 4
  %v1618 = vrot.slane %v1474, 4
  %v1619 = vrot.slane %v1481, 4
  %v1620 = vrot.slane %v1488, 4
  %v1621 = vrot.slane %v1495, 4
  %v1622 = vrot.slane %v1502, 4
  %v1623 = vrot.slane %v1509, 4
  %v1624 = vrot.slane %v1516, 4
  %v1625 = vrot.slane %v1523, 4
  %v1626 = vrot.slane %v1530, 4
  %v1675 = vmax.f32 %v1201, %v1579
  %v1676 = vmax.f32 %v1208, %v1580
  %v1677 = vmax.f32 %v1215, %v1581
  %v1678 = vmax.f32 %v1222, %v1582
  %v1679 = vmax.f32 %v1229, %v1583
  %v1680 = vmax.f32 %v1236, %v1584
  %v1681 = vmax.f32 %v1243, %v1585
  %v1682 = vmax.f32 %v1250, %v1586
  %v1683 = vmax.f32 %v1257, %v1587
  %v1684 = vmax.f32 %v1264, %v1588
  %v1685 = vmax.f32 %v1271, %v1589
  %v1686 = vmax.f32 %v1278, %v1590
  %v1687 = vmax.f32 %v1285, %v1591
  %v1688 = vmax.f32 %v1292, %v1592
  %v1689 = vmax.f32 %v1299, %v1593
  %v1690 = vmax.f32 %v1306, %v1594
  %v1691 = vmax.f32 %v1313, %v1595
  %v1692 = vmax.f32 %v1320, %v1596
  %v1693 = vmax.f32 %v1327, %v1597
  %v1694 = vmax.f32 %v1334, %v1598
  %v1695 = vmax.f32 %v1341, %v1599
  %v1696 = vmax.f32 %v1348, %v1600
  %v1697 = vmax.f32 %v1355, %v1601
  %v1698 = vmax.f32 %v1362, %v1602
  %v1699 = vmax.f32 %v1369, %v1603
  %v1700 = vmax.f32 %v1376, %v1604
  %v1701 = vmax.f32 %v1383, %v1605
  %v1702 = vmax.f32 %v1390, %v1606
  %v1703 = vmax.f32 %v1397, %v1607
  %v1704 = vmax.f32 %v1404, %v1608
  %v1705 = vmax.f32 %v1411, %v1609
  %v1706 = vmax.f32 %v1418, %v1610
  %v1707 = vmax.f32 %v1425, %v1611
  %v1708 = vmax.f32 %v1432, %v1612
  %v1709 = vmax.f32 %v1439, %v1613
  %v1710 = vmax.f32 %v1446, %v1614
  %v1711 = vmax.f32 %v1453, %v1615
  %v1712 = vmax.f32 %v1460, %v1616
  %v1713 = vmax.f32 %v1467, %v1617
  %v1714 = vmax.f32 %v1474, %v1618
  %v1715 = vmax.f32 %v1481, %v1619
  %v1716 = vmax.f32 %v1488, %v1620
  %v1717 = vmax.f32 %v1495, %v1621
  %v1718 = vmax.f32 %v1502, %v1622
  %v1719 = vmax.f32 %v1509, %v1623
  %v1720 = vmax.f32 %v1516, %v1624
  %v1721 = vmax.f32 %v1523, %v1625
  %v1722 = vmax.f32 %v1530, %v1626
  %v1771 = vrot.slane %v1675, 2
  %v1772 = vrot.slane %v1676, 2
  %v1773 = vrot.slane %v1677, 2
  %v1774 = vrot.slane %v1678, 2
  %v1775 = vrot.slane %v1679, 2
  %v1776 = vrot.slane %v1680, 2
  %v1777 = vrot.slane %v1681, 2
  %v1778 = vrot.slane %v1682, 2
  %v1779 = vrot.slane %v1683, 2
  %v1780 = vrot.slane %v1684, 2
  %v1781 = vrot.slane %v1685, 2
  %v1782 = vrot.slane %v1686, 2
  %v1783 = vrot.slane %v1687, 2
  %v1784 = vrot.slane %v1688, 2
  %v1785 = vrot.slane %v1689, 2
  %v1786 = vrot.slane %v1690, 2
  %v1787 = vrot.slane %v1691, 2
  %v1788 = vrot.slane %v1692, 2
  %v1789 = vrot.slane %v1693, 2
  %v1790 = vrot.slane %v1694, 2
  %v1791 = vrot.slane %v1695, 2
  %v1792 = vrot.slane %v1696, 2
  %v1793 = vrot.slane %v1697, 2
  %v1794 = vrot.slane %v1698, 2
  %v1795 = vrot.slane %v1699, 2
  %v1796 = vrot.slane %v1700, 2
  %v1797 = vrot.slane %v1701, 2
  %v1798 = vrot.slane %v1702, 2
  %v1799 = vrot.slane %v1703, 2
  %v1800 = vrot.slane %v1704, 2
  %v1801 = vrot.slane %v1705, 2
  %v1802 = vrot.slane %v1706, 2
  %v1803 = vrot.slane %v1707, 2
  %v1804 = vrot.slane %v1708, 2
  %v1805 = vrot.slane %v1709, 2
  %v1806 = vrot.slane %v1710, 2
  %v1807 = vrot.slane %v1711, 2
  %v1808 = vrot.slane %v1712, 2
  %v1809 = vrot.slane %v1713, 2
  %v1810 = vrot.slane %v1714, 2
  %v1811 = vrot.slane %v1715, 2
  %v1812 = vrot.slane %v1716, 2
  %v1813 = vrot.slane %v1717, 2
  %v1814 = vrot.slane %v1718, 2
  %v1815 = vrot.slane %v1719, 2
  %v1816 = vrot.slane %v1720, 2
  %v1817 = vrot.slane %v1721, 2
  %v1818 = vrot.slane %v1722, 2
  %v1867 = vmax.f32 %v1675, %v1771
  %v1868 = vmax.f32 %v1676, %v1772
  %v1869 = vmax.f32 %v1677, %v1773
  %v1870 = vmax.f32 %v1678, %v1774
  %v1871 = vmax.f32 %v1679, %v1775
  %v1872 = vmax.f32 %v1680, %v1776
  %v1873 = vmax.f32 %v1681, %v1777
  %v1874 = vmax.f32 %v1682, %v1778
  %v1875 = vmax.f32 %v1683, %v1779
  %v1876 = vmax.f32 %v1684, %v1780
  %v1877 = vmax.f32 %v1685, %v1781
  %v1878 = vmax.f32 %v1686, %v1782
  %v1879 = vmax.f32 %v1687, %v1783
  %v1880 = vmax.f32 %v1688, %v1784
  %v1881 = vmax.f32 %v1689, %v1785
  %v1882 = vmax.f32 %v1690, %v1786
  %v1883 = vmax.f32 %v1691, %v1787
  %v1884 = vmax.f32 %v1692, %v1788
  %v1885 = vmax.f32 %v1693, %v1789
  %v1886 = vmax.f32 %v1694, %v1790
  %v1887 = vmax.f32 %v1695, %v1791
  %v1888 = vmax.f32 %v1696, %v1792
  %v1889 = vmax.f32 %v1697, %v1793
  %v1890 = vmax.f32 %v1698, %v1794
  %v1891 = vmax.f32 %v1699, %v1795
  %v1892 = vmax.f32 %v1700, %v1796
  %v1893 = vmax.f32 %v1701, %v1797
  %v1894 = vmax.f32 %v1702, %v1798
  %v1895 = vmax.f32 %v1703, %v1799
  %v1896 = vmax.f32 %v1704, %v1800
  %v1897 = vmax.f32 %v1705, %v1801
  %v1898 = vmax.f32 %v1706, %v1802
  %v1899 = vmax.f32 %v1707, %v1803
  %v1900 = vmax.f32 %v1708, %v1804
  %v1901 = vmax.f32 %v1709, %v1805
  %v1902 = vmax.f32 %v1710, %v1806
  %v1903 = vmax.f32 %v1711, %v1807
  %v1904 = vmax.f32 %v1712, %v1808
  %v1905 = vmax.f32 %v1713, %v1809
  %v1906 = vmax.f32 %v1714, %v1810
  %v1907 = vmax.f32 %v1715, %v1811
  %v1908 = vmax.f32 %v1716, %v1812
  %v1909 = vmax.f32 %v1717, %v1813
  %v1910 = vmax.f32 %v1718, %v1814
  %v1911 = vmax.f32 %v1719, %v1815
  %v1912 = vmax.f32 %v1720, %v1816
  %v1913 = vmax.f32 %v1721, %v1817
  %v1914 = vmax.f32 %v1722, %v1818
  %v1915 = vmax.f32 %v1867, 0.0
  %v1916 = vmax.f32 %v1868, 0.0
  %v1917 = vmax.f32 %v1869, 0.0
  %v1918 = vmax.f32 %v1870, 0.0
  %v1919 = vmax.f32 %v1871, 0.0
  %v1920 = vmax.f32 %v1872, 0.0
  %v1921 = vmax.f32 %v1873, 0.0
  %v1922 = vmax.f32 %v1874, 0.0
  %v1923 = vmax.f32 %v1875, 0.0
  %v1924 = vmax.f32 %v1876, 0.0
  %v1925 = vmax.f32 %v1877, 0.0
  %v1926 = vmax.f32 %v1878, 0.0
  %v1927 = vmax.f32 %v1879, 0.0
  %v1928 = vmax.f32 %v1880, 0.0
  %v1929 = vmax.f32 %v1881, 0.0
  %v1930 = vmax.f32 %v1882, 0.0
  %v1931 = vmax.f32 %v1883, 0.0
  %v1932 = vmax.f32 %v1884, 0.0
  %v1933 = vmax.f32 %v1885, 0.0
  %v1934 = vmax.f32 %v1886, 0.0
  %v1935 = vmax.f32 %v1887, 0.0
  %v1936 = vmax.f32 %v1888, 0.0
  %v1937 = vmax.f32 %v1889, 0.0
  %v1938 = vmax.f32 %v1890, 0.0
  %v1939 = vmax.f32 %v1891, 0.0
  %v1940 = vmax.f32 %v1892, 0.0
  %v1941 = vmax.f32 %v1893, 0.0
  %v1942 = vmax.f32 %v1894, 0.0
  %v1943 = vmax.f32 %v1895, 0.0
  %v1944 = vmax.f32 %v1896, 0.0
  %v1945 = vmax.f32 %v1897, 0.0
  %v1946 = vmax.f32 %v1898, 0.0
  %v1947 = vmax.f32 %v1899, 0.0
  %v1948 = vmax.f32 %v1900, 0.0
  %v1949 = vmax.f32 %v1901, 0.0
  %v1950 = vmax.f32 %v1902, 0.0
  %v1951 = vmax.f32 %v1903, 0.0
  %v1952 = vmax.f32 %v1904, 0.0
  %v1953 = vmax.f32 %v1905, 0.0
  %v1954 = vmax.f32 %v1906, 0.0
  %v1955 = vmax.f32 %v1907, 0.0
  %v1956 = vmax.f32 %v1908, 0.0
  %v1957 = vmax.f32 %v1909, 0.0
  %v1958 = vmax.f32 %v1910, 0.0
  %v1959 = vmax.f32 %v1911, 0.0
  %v1960 = vmax.f32 %v1912, 0.0
  %v1961 = vmax.f32 %v1913, 0.0
  %v1962 = vmax.f32 %v1914, 0.0
  %v1995 = vcombine.low %v1915, %v1916
  %v1996 = vcombine.low %v1917, %v1918
  %v1998 = vunpack.c.l.s4 1983009808
  %v1999 = vunpack.c.0.s8 %v1998
  %v2000 = vlaneseq
  %v2001 = vshrl.u32 %v2000, 7
  %v2002 = vsub.s32 %v1999, %v2001
  %v2003 = vrot.slane %v1995, %v2002
  %v2005 = vunpack.c.l.s4 1983009808
  %v2006 = vunpack.c.0.s8 %v2005
  %v2007 = vlaneseq
  %v2008 = vshrl.u32 %v2007, 7
  %v2009 = vsub.s32 %v2006, %v2008
  %v2010 = vrot.slane %v1996, %v2009
  %v2011 = vcombine.low %v2003, %v2010
  %v2012 = vcombine.low %v1921, %v1922
  %v2013 = vcombine.low %v1923, %v1924
  %v2015 = vunpack.c.l.s4 1983009808
  %v2016 = vunpack.c.0.s8 %v2015
  %v2017 = vlaneseq
  %v2018 = vshrl.u32 %v2017, 7
  %v2019 = vsub.s32 %v2016, %v2018
  %v2020 = vrot.slane %v2012, %v2019
  %v2022 = vunpack.c.l.s4 1983009808
  %v2023 = vunpack.c.0.s8 %v2022
  %v2024 = vlaneseq
  %v2025 = vshrl.u32 %v2024, 7
  %v2026 = vsub.s32 %v2023, %v2025
  %v2027 = vrot.slane %v2013, %v2026
  %v2028 = vcombine.low %v2020, %v2027
  %v2029 = vcombine.low %v1927, %v1928
  %v2030 = vcombine.low %v1929, %v1930
  %v2032 = vunpack.c.l.s4 1983009808
  %v2033 = vunpack.c.0.s8 %v2032
  %v2034 = vlaneseq
  %v2035 = vshrl.u32 %v2034, 7
  %v2036 = vsub.s32 %v2033, %v2035
  %v2037 = vrot.slane %v2029, %v2036
  %v2039 = vunpack.c.l.s4 1983009808
  %v2040 = vunpack.c.0.s8 %v2039
  %v2041 = vlaneseq
  %v2042 = vshrl.u32 %v2041, 7
  %v2043 = vsub.s32 %v2040, %v2042
  %v2044 = vrot.slane %v2030, %v2043
  %v2045 = vcombine.low %v2037, %v2044
  %v2046 = vcombine.low %v1933, %v1934
  %v2047 = vcombine.low %v1935, %v1936
  %v2049 = vunpack.c.l.s4 1983009808
  %v2050 = vunpack.c.0.s8 %v2049
  %v2051 = vlaneseq
  %v2052 = vshrl.u32 %v2051, 7
  %v2053 = vsub.s32 %v2050, %v2052
  %v2054 = vrot.slane %v2046, %v2053
  %v2056 = vunpack.c.l.s4 1983009808
  %v2057 = vunpack.c.0.s8 %v2056
  %v2058 = vlaneseq
  %v2059 = vshrl.u32 %v2058, 7
  %v2060 = vsub.s32 %v2057, %v2059
  %v2061 = vrot.slane %v2047, %v2060
  %v2062 = vcombine.low %v2054, %v2061
  %v2063 = vcombine.low %v1939, %v1940
  %v2064 = vcombine.low %v1941, %v1942
  %v2066 = vunpack.c.l.s4 1983009808
  %v2067 = vunpack.c.0.s8 %v2066
  %v2068 = vlaneseq
  %v2069 = vshrl.u32 %v2068, 7
  %v2070 = vsub.s32 %v2067, %v2069
  %v2071 = vrot.slane %v2063, %v2070
  %v2073 = vunpack.c.l.s4 1983009808
  %v2074 = vunpack.c.0.s8 %v2073
  %v2075 = vlaneseq
  %v2076 = vshrl.u32 %v2075, 7
  %v2077 = vsub.s32 %v2074, %v2076
  %v2078 = vrot.slane %v2064, %v2077
  %v2079 = vcombine.low %v2071, %v2078
  %v2080 = vcombine.low %v1945, %v1946
  %v2081 = vcombine.low %v1947, %v1948
  %v2083 = vunpack.c.l.s4 1983009808
  %v2084 = vunpack.c.0.s8 %v2083
  %v2085 = vlaneseq
  %v2086 = vshrl.u32 %v2085, 7
  %v2087 = vsub.s32 %v2084, %v2086
  %v2088 = vrot.slane %v2080, %v2087
  %v2090 = vunpack.c.l.s4 1983009808
  %v2091 = vunpack.c.0.s8 %v2090
  %v2092 = vlaneseq
  %v2093 = vshrl.u32 %v2092, 7
  %v2094 = vsub.s32 %v2091, %v2093
  %v2095 = vrot.slane %v2081, %v2094
  %v2096 = vcombine.low %v2088, %v2095
  %v2097 = vcombine.low %v1951, %v1952
  %v2098 = vcombine.low %v1953, %v1954
  %v2100 = vunpack.c.l.s4 1983009808
  %v2101 = vunpack.c.0.s8 %v2100
  %v2102 = vlaneseq
  %v2103 = vshrl.u32 %v2102, 7
  %v2104 = vsub.s32 %v2101, %v2103
  %v2105 = vrot.slane %v2097, %v2104
  %v2107 = vunpack.c.l.s4 1983009808
  %v2108 = vunpack.c.0.s8 %v2107
  %v2109 = vlaneseq
  %v2110 = vshrl.u32 %v2109, 7
  %v2111 = vsub.s32 %v2108, %v2110
  %v2112 = vrot.slane %v2098, %v2111
  %v2113 = vcombine.low %v2105, %v2112
  %v2114 = vcombine.low %v1957, %v1958
  %v2115 = vcombine.low %v1959, %v1960
  %v2117 = vunpack.c.l.s4 1983009808
  %v2118 = vunpack.c.0.s8 %v2117
  %v2119 = vlaneseq
  %v2120 = vshrl.u32 %v2119, 7
  %v2121 = vsub.s32 %v2118, %v2120
  %v2122 = vrot.slane %v2114, %v2121
  %v2124 = vunpack.c.l.s4 1983009808
  %v2125 = vunpack.c.0.s8 %v2124
  %v2126 = vlaneseq
  %v2127 = vshrl.u32 %v2126, 7
  %v2128 = vsub.s32 %v2125, %v2127
  %v2129 = vrot.slane %v2115, %v2128
  %v2130 = vcombine.low %v2122, %v2129
  %v2148 = vunpack.c.l.s4 1983009808
  %v2149 = vunpack.c.0.s8 %v2148
  %v2150 = vlaneseq
  %v2151 = vshrl.u32 %v2150, 7
  %v2152 = vsub.s32 %v2149, %v2151
  %v2153 = vrot.slane %v1919, %v2152
  %v2155 = vunpack.c.l.s4 1983009808
  %v2156 = vunpack.c.0.s8 %v2155
  %v2157 = vlaneseq
  %v2158 = vshrl.u32 %v2157, 7
  %v2159 = vsub.s32 %v2156, %v2158
  %v2160 = vrot.slane %v1925, %v2159
  %v2162 = vunpack.c.l.s4 1983009808
  %v2163 = vunpack.c.0.s8 %v2162
  %v2164 = vlaneseq
  %v2165 = vshrl.u32 %v2164, 7
  %v2166 = vsub.s32 %v2163, %v2165
  %v2167 = vrot.slane %v1931, %v2166
  %v2169 = vunpack.c.l.s4 1983009808
  %v2170 = vunpack.c.0.s8 %v2169
  %v2171 = vlaneseq
  %v2172 = vshrl.u32 %v2171, 7
  %v2173 = vsub.s32 %v2170, %v2172
  %v2174 = vrot.slane %v1937, %v2173
  %v2176 = vunpack.c.l.s4 1983009808
  %v2177 = vunpack.c.0.s8 %v2176
  %v2178 = vlaneseq
  %v2179 = vshrl.u32 %v2178, 7
  %v2180 = vsub.s32 %v2177, %v2179
  %v2181 = vrot.slane %v1943, %v2180
  %v2183 = vunpack.c.l.s4 1983009808
  %v2184 = vunpack.c.0.s8 %v2183
  %v2185 = vlaneseq
  %v2186 = vshrl.u32 %v2185, 7
  %v2187 = vsub.s32 %v2184, %v2186
  %v2188 = vrot.slane %v1949, %v2187
  %v2190 = vunpack.c.l.s4 1983009808
  %v2191 = vunpack.c.0.s8 %v2190
  %v2192 = vlaneseq
  %v2193 = vshrl.u32 %v2192, 7
  %v2194 = vsub.s32 %v2191, %v2193
  %v2195 = vrot.slane %v1955, %v2194
  %v2197 = vunpack.c.l.s4 1983009808
  %v2198 = vunpack.c.0.s8 %v2197
  %v2199 = vlaneseq
  %v2200 = vshrl.u32 %v2199, 7
  %v2201 = vsub.s32 %v2198, %v2200
  %v2202 = vrot.slane %v1961, %v2201
  %v2203 = vrot.slane %v2011, 1
  %v2204 = vrot.slane %v2153, 1
  %v2205 = vsel %vm97, %v2203, %v2204
  %v2206 = vrot.slane %v2028, 1
  %v2207 = vrot.slane %v2160, 1
  %v2208 = vsel %vm97, %v2206, %v2207
  %v2209 = vrot.slane %v2045, 1
  %v2210 = vrot.slane %v2167, 1
  %v2211 = vsel %vm97, %v2209, %v2210
  %v2212 = vrot.slane %v2062, 1
  %v2213 = vrot.slane %v2174, 1
  %v2214 = vsel %vm97, %v2212, %v2213
  %v2215 = vrot.slane %v2079, 1
  %v2216 = vrot.slane %v2181, 1
  %v2217 = vsel %vm97, %v2215, %v2216
  %v2218 = vrot.slane %v2096, 1
  %v2219 = vrot.slane %v2188, 1
  %v2220 = vsel %vm97, %v2218, %v2219
  %v2221 = vrot.slane %v2113, 1
  %v2222 = vrot.slane %v2195, 1
  %v2223 = vsel %vm97, %v2221, %v2222
  %v2224 = vrot.slane %v2130, 1
  %v2225 = vrot.slane %v2202, 1
  %v2226 = vsel %vm97, %v2224, %v2225
  %v2235 = vcombine.low %v1916, %v1917
  %v2236 = vcombine.low %v1918, %v1919
  %v2238 = vunpack.c.l.s4 1983009808
  %v2239 = vunpack.c.0.s8 %v2238
  %v2240 = vlaneseq
  %v2241 = vshrl.u32 %v2240, 7
  %v2242 = vsub.s32 %v2239, %v2241
  %v2243 = vrot.slane %v2235, %v2242
  %v2245 = vunpack.c.l.s4 1983009808
  %v2246 = vunpack.c.0.s8 %v2245
  %v2247 = vlaneseq
  %v2248 = vshrl.u32 %v2247, 7
  %v2249 = vsub.s32 %v2246, %v2248
  %v2250 = vrot.slane %v2236, %v2249
  %v2251 = vcombine.low %v2243, %v2250
  %v2252 = vcombine.low %v1922, %v1923
  %v2253 = vcombine.low %v1924, %v1925
  %v2255 = vunpack.c.l.s4 1983009808
  %v2256 = vunpack.c.0.s8 %v2255
  %v2257 = vlaneseq
  %v2258 = vshrl.u32 %v2257, 7
  %v2259 = vsub.s32 %v2256, %v2258
  %v2260 = vrot.slane %v2252, %v2259
  %v2262 = vunpack.c.l.s4 1983009808
  %v2263 = vunpack.c.0.s8 %v2262
  %v2264 = vlaneseq
  %v2265 = vshrl.u32 %v2264, 7
  %v2266 = vsub.s32 %v2263, %v2265
  %v2267 = vrot.slane %v2253, %v2266
  %v2268 = vcombine.low %v2260, %v2267
  %v2269 = vcombine.low %v1928, %v1929
  %v2270 = vcombine.low %v1930, %v1931
  %v2272 = vunpack.c.l.s4 1983009808
  %v2273 = vunpack.c.0.s8 %v2272
  %v2274 = vlaneseq
  %v2275 = vshrl.u32 %v2274, 7
  %v2276 = vsub.s32 %v2273, %v2275
  %v2277 = vrot.slane %v2269, %v2276
  %v2279 = vunpack.c.l.s4 1983009808
  %v2280 = vunpack.c.0.s8 %v2279
  %v2281 = vlaneseq
  %v2282 = vshrl.u32 %v2281, 7
  %v2283 = vsub.s32 %v2280, %v2282
  %v2284 = vrot.slane %v2270, %v2283
  %v2285 = vcombine.low %v2277, %v2284
  %v2286 = vcombine.low %v1934, %v1935
  %v2287 = vcombine.low %v1936, %v1937
  %v2289 = vunpack.c.l.s4 1983009808
  %v2290 = vunpack.c.0.s8 %v2289
  %v2291 = vlaneseq
  %v2292 = vshrl.u32 %v2291, 7
  %v2293 = vsub.s32 %v2290, %v2292
  %v2294 = vrot.slane %v2286, %v2293
  %v2296 = vunpack.c.l.s4 1983009808
  %v2297 = vunpack.c.0.s8 %v2296
  %v2298 = vlaneseq
  %v2299 = vshrl.u32 %v2298, 7
  %v2300 = vsub.s32 %v2297, %v2299
  %v2301 = vrot.slane %v2287, %v2300
  %v2302 = vcombine.low %v2294, %v2301
  %v2303 = vcombine.low %v1940, %v1941
  %v2304 = vcombine.low %v1942, %v1943
  %v2306 = vunpack.c.l.s4 1983009808
  %v2307 = vunpack.c.0.s8 %v2306
  %v2308 = vlaneseq
  %v2309 = vshrl.u32 %v2308, 7
  %v2310 = vsub.s32 %v2307, %v2309
  %v2311 = vrot.slane %v2303, %v2310
  %v2313 = vunpack.c.l.s4 1983009808
  %v2314 = vunpack.c.0.s8 %v2313
  %v2315 = vlaneseq
  %v2316 = vshrl.u32 %v2315, 7
  %v2317 = vsub.s32 %v2314, %v2316
  %v2318 = vrot.slane %v2304, %v2317
  %v2319 = vcombine.low %v2311, %v2318
  %v2320 = vcombine.low %v1946, %v1947
  %v2321 = vcombine.low %v1948, %v1949
  %v2323 = vunpack.c.l.s4 1983009808
  %v2324 = vunpack.c.0.s8 %v2323
  %v2325 = vlaneseq
  %v2326 = vshrl.u32 %v2325, 7
  %v2327 = vsub.s32 %v2324, %v2326
  %v2328 = vrot.slane %v2320, %v2327
  %v2330 = vunpack.c.l.s4 1983009808
  %v2331 = vunpack.c.0.s8 %v2330
  %v2332 = vlaneseq
  %v2333 = vshrl.u32 %v2332, 7
  %v2334 = vsub.s32 %v2331, %v2333
  %v2335 = vrot.slane %v2321, %v2334
  %v2336 = vcombine.low %v2328, %v2335
  %v2337 = vcombine.low %v1952, %v1953
  %v2338 = vcombine.low %v1954, %v1955
  %v2340 = vunpack.c.l.s4 1983009808
  %v2341 = vunpack.c.0.s8 %v2340
  %v2342 = vlaneseq
  %v2343 = vshrl.u32 %v2342, 7
  %v2344 = vsub.s32 %v2341, %v2343
  %v2345 = vrot.slane %v2337, %v2344
  %v2347 = vunpack.c.l.s4 1983009808
  %v2348 = vunpack.c.0.s8 %v2347
  %v2349 = vlaneseq
  %v2350 = vshrl.u32 %v2349, 7
  %v2351 = vsub.s32 %v2348, %v2350
  %v2352 = vrot.slane %v2338, %v2351
  %v2353 = vcombine.low %v2345, %v2352
  %v2354 = vcombine.low %v1958, %v1959
  %v2355 = vcombine.low %v1960, %v1961
  %v2357 = vunpack.c.l.s4 1983009808
  %v2358 = vunpack.c.0.s8 %v2357
  %v2359 = vlaneseq
  %v2360 = vshrl.u32 %v2359, 7
  %v2361 = vsub.s32 %v2358, %v2360
  %v2362 = vrot.slane %v2354, %v2361
  %v2364 = vunpack.c.l.s4 1983009808
  %v2365 = vunpack.c.0.s8 %v2364
  %v2366 = vlaneseq
  %v2367 = vshrl.u32 %v2366, 7
  %v2368 = vsub.s32 %v2365, %v2367
  %v2369 = vrot.slane %v2355, %v2368
  %v2370 = vcombine.low %v2362, %v2369
  %v2388 = vunpack.c.l.s4 1983009808
  %v2389 = vunpack.c.0.s8 %v2388
  %v2390 = vlaneseq
  %v2391 = vshrl.u32 %v2390, 7
  %v2392 = vsub.s32 %v2389, %v2391
  %v2393 = vrot.slane %v1920, %v2392
  %v2395 = vunpack.c.l.s4 1983009808
  %v2396 = vunpack.c.0.s8 %v2395
  %v2397 = vlaneseq
  %v2398 = vshrl.u32 %v2397, 7
  %v2399 = vsub.s32 %v2396, %v2398
  %v2400 = vrot.slane %v1926, %v2399
  %v2402 = vunpack.c.l.s4 1983009808
  %v2403 = vunpack.c.0.s8 %v2402
  %v2404 = vlaneseq
  %v2405 = vshrl.u32 %v2404, 7
  %v2406 = vsub.s32 %v2403, %v2405
  %v2407 = vrot.slane %v1932, %v2406
  %v2409 = vunpack.c.l.s4 1983009808
  %v2410 = vunpack.c.0.s8 %v2409
  %v2411 = vlaneseq
  %v2412 = vshrl.u32 %v2411, 7
  %v2413 = vsub.s32 %v2410, %v2412
  %v2414 = vrot.slane %v1938, %v2413
  %v2416 = vunpack.c.l.s4 1983009808
  %v2417 = vunpack.c.0.s8 %v2416
  %v2418 = vlaneseq
  %v2419 = vshrl.u32 %v2418, 7
  %v2420 = vsub.s32 %v2417, %v2419
  %v2421 = vrot.slane %v1944, %v2420
  %v2423 = vunpack.c.l.s4 1983009808
  %v2424 = vunpack.c.0.s8 %v2423
  %v2425 = vlaneseq
  %v2426 = vshrl.u32 %v2425, 7
  %v2427 = vsub.s32 %v2424, %v2426
  %v2428 = vrot.slane %v1950, %v2427
  %v2430 = vunpack.c.l.s4 1983009808
  %v2431 = vunpack.c.0.s8 %v2430
  %v2432 = vlaneseq
  %v2433 = vshrl.u32 %v2432, 7
  %v2434 = vsub.s32 %v2431, %v2433
  %v2435 = vrot.slane %v1956, %v2434
  %v2437 = vunpack.c.l.s4 1983009808
  %v2438 = vunpack.c.0.s8 %v2437
  %v2439 = vlaneseq
  %v2440 = vshrl.u32 %v2439, 7
  %v2441 = vsub.s32 %v2438, %v2440
  %v2442 = vrot.slane %v1962, %v2441
  %v2443 = vrot.slane %v2251, 1
  %v2444 = vrot.slane %v2393, 1
  %v2445 = vsel %vm97, %v2443, %v2444
  %v2446 = vrot.slane %v2268, 1
  %v2447 = vrot.slane %v2400, 1
  %v2448 = vsel %vm97, %v2446, %v2447
  %v2449 = vrot.slane %v2285, 1
  %v2450 = vrot.slane %v2407, 1
  %v2451 = vsel %vm97, %v2449, %v2450
  %v2452 = vrot.slane %v2302, 1
  %v2453 = vrot.slane %v2414, 1
  %v2454 = vsel %vm97, %v2452, %v2453
  %v2455 = vrot.slane %v2319, 1
  %v2456 = vrot.slane %v2421, 1
  %v2457 = vsel %vm97, %v2455, %v2456
  %v2458 = vrot.slane %v2336, 1
  %v2459 = vrot.slane %v2428, 1
  %v2460 = vsel %vm97, %v2458, %v2459
  %v2461 = vrot.slane %v2353, 1
  %v2462 = vrot.slane %v2435, 1
  %v2463 = vsel %vm97, %v2461, %v2462
  %v2464 = vrot.slane %v2370, 1
  %v2465 = vrot.slane %v2442, 1
  %v2466 = vsel %vm97, %v2464, %v2465
  %v2475 = vcombine.low %v1919, %v1920
  %v2477 = vunpack.c.l.s4 1983009808
  %v2478 = vunpack.c.0.s8 %v2477
  %v2479 = vlaneseq
  %v2480 = vshrl.u32 %v2479, 7
  %v2481 = vsub.s32 %v2478, %v2480
  %v2482 = vrot.slane %v2475, %v2481
  %v2483 = vcombine.low %v2010, %v2482
  %v2484 = vcombine.low %v1925, %v1926
  %v2486 = vunpack.c.l.s4 1983009808
  %v2487 = vunpack.c.0.s8 %v2486
  %v2488 = vlaneseq
  %v2489 = vshrl.u32 %v2488, 7
  %v2490 = vsub.s32 %v2487, %v2489
  %v2491 = vrot.slane %v2484, %v2490
  %v2492 = vcombine.low %v2027, %v2491
  %v2493 = vcombine.low %v1931, %v1932
  %v2495 = vunpack.c.l.s4 1983009808
  %v2496 = vunpack.c.0.s8 %v2495
  %v2497 = vlaneseq
  %v2498 = vshrl.u32 %v2497, 7
  %v2499 = vsub.s32 %v2496, %v2498
  %v2500 = vrot.slane %v2493, %v2499
  %v2501 = vcombine.low %v2044, %v2500
  %v2502 = vcombine.low %v1937, %v1938
  %v2504 = vunpack.c.l.s4 1983009808
  %v2505 = vunpack.c.0.s8 %v2504
  %v2506 = vlaneseq
  %v2507 = vshrl.u32 %v2506, 7
  %v2508 = vsub.s32 %v2505, %v2507
  %v2509 = vrot.slane %v2502, %v2508
  %v2510 = vcombine.low %v2061, %v2509
  %v2511 = vcombine.low %v1943, %v1944
  %v2513 = vunpack.c.l.s4 1983009808
  %v2514 = vunpack.c.0.s8 %v2513
  %v2515 = vlaneseq
  %v2516 = vshrl.u32 %v2515, 7
  %v2517 = vsub.s32 %v2514, %v2516
  %v2518 = vrot.slane %v2511, %v2517
  %v2519 = vcombine.low %v2078, %v2518
  %v2520 = vcombine.low %v1949, %v1950
  %v2522 = vunpack.c.l.s4 1983009808
  %v2523 = vunpack.c.0.s8 %v2522
  %v2524 = vlaneseq
  %v2525 = vshrl.u32 %v2524, 7
  %v2526 = vsub.s32 %v2523, %v2525
  %v2527 = vrot.slane %v2520, %v2526
  %v2528 = vcombine.low %v2095, %v2527
  %v2529 = vcombine.low %v1955, %v1956
  %v2531 = vunpack.c.l.s4 1983009808
  %v2532 = vunpack.c.0.s8 %v2531
  %v2533 = vlaneseq
  %v2534 = vshrl.u32 %v2533, 7
  %v2535 = vsub.s32 %v2532, %v2534
  %v2536 = vrot.slane %v2529, %v2535
  %v2537 = vcombine.low %v2112, %v2536
  %v2538 = vcombine.low %v1961, %v1962
  %v2540 = vunpack.c.l.s4 1983009808
  %v2541 = vunpack.c.0.s8 %v2540
  %v2542 = vlaneseq
  %v2543 = vshrl.u32 %v2542, 7
  %v2544 = vsub.s32 %v2541, %v2543
  %v2545 = vrot.slane %v2538, %v2544
  %v2546 = vcombine.low %v2129, %v2545
  %v2555 = vpack.c.bf16 %v2028, %v2011
  %v2556 = vpack.c.bf16 %v2208, %v2205
  %v2557 = vpack.c.bf16 %v2268, %v2251
  %v2558 = vpack.c.bf16 %v2448, %v2445
  %v2559 = vpack.c.bf16 %v2492, %v2483
  %v2560 = vpack.c.bf16 %v2062, %v2045
  %v2561 = vpack.c.bf16 %v2214, %v2211
  %v2562 = vpack.c.bf16 %v2302, %v2285
  %v2563 = vpack.c.bf16 %v2454, %v2451
  %v2564 = vpack.c.bf16 %v2510, %v2501
  %v2565 = vpack.c.bf16 %v2096, %v2079
  %v2566 = vpack.c.bf16 %v2220, %v2217
  %v2567 = vpack.c.bf16 %v2336, %v2319
  %v2568 = vpack.c.bf16 %v2460, %v2457
  %v2569 = vpack.c.bf16 %v2528, %v2519
  %v2570 = vpack.c.bf16 %v2130, %v2113
  %v2571 = vpack.c.bf16 %v2226, %v2223
  %v2572 = vpack.c.bf16 %v2370, %v2353
  %v2573 = vpack.c.bf16 %v2466, %v2463
  %v2574 = vpack.c.bf16 %v2546, %v2537
  %v2575 = vld [vmem:[%s3] sm:$0xff]
  %v2576 = vld [vmem:[%s3 + $0x8] sm:$0xff]
  %v2577 = vld [vmem:[%s3 + $0x10] sm:$0xff]
  %v2578 = vld [vmem:[%s3 + $0x18] sm:$0xff]
  %v2579 = vld [vmem:[%s3 + $0x20] sm:$0xff]
  %v2580 = vld [vmem:[%s3 + $0x28] sm:$0xff]
  %v2581 = vld [vmem:[%s3 + $0x30] sm:$0xff]
  %v2582 = vld [vmem:[%s3 + $0x38] sm:$0xff]
  %v2583 = vld [vmem:[%s3 + $0x40] sm:$0xff]
  %v2584 = vld [vmem:[%s3 + $0x48] sm:$0xff]
  %v2585 = vld [vmem:[%s3 + $0x50] sm:$0xff]
  %v2586 = vld [vmem:[%s3 + $0x58] sm:$0xff]
  %v2587 = vld [vmem:[%s3 + $0x60] sm:$0xff]
  %v2588 = vld [vmem:[%s3 + $0x68] sm:$0xff]
  %v2589 = vld [vmem:[%s3 + $0x70] sm:$0xff]
  %v2590 = vld [vmem:[%s3 + $0x78] sm:$0xff]
  %v2591 = vld [vmem:[%s3 + $0x80] sm:$0xff]
  %v2592 = vld [vmem:[%s3 + $0x88] sm:$0xff]
  %v2593 = vld [vmem:[%s3 + $0x90] sm:$0xff]
  %v2594 = vld [vmem:[%s3 + $0x98] sm:$0xff]
  %v2595 = vld [vmem:[%s3 + $0xa0] sm:$0xff]
  %v2596 = vld [vmem:[%s3 + $0xa8] sm:$0xff]
  %v2597 = vld [vmem:[%s3 + $0xb0] sm:$0xff]
  %v2598 = vld [vmem:[%s3 + $0xb8] sm:$0xff]
  %v2599 = vld [vmem:[%s3 + $0xc0] sm:$0xff]
  %v2600 = vld [vmem:[%s3 + $0xc8] sm:$0xff]
  %v2601 = vld [vmem:[%s3 + $0xd0] sm:$0xff]
  %v2602 = vld [vmem:[%s3 + $0xd8] sm:$0xff]
  %v2603 = vld [vmem:[%s3 + $0xe0] sm:$0xff]
  %v2604 = vld [vmem:[%s3 + $0xe8] sm:$0xff]
  %v2605 = vld [vmem:[%s3 + $0xf0] sm:$0xff]
  %v2606 = vld [vmem:[%s3 + $0xf8] sm:$0xff]
  %v2607 = vld [vmem:[%s3 + $0x100] sm:$0xff]
  %v2608 = vld [vmem:[%s3 + $0x108] sm:$0xff]
  %v2609 = vld [vmem:[%s3 + $0x110] sm:$0xff]
  %v2610 = vld [vmem:[%s3 + $0x118] sm:$0xff]
  %v2611 = vld [vmem:[%s3 + $0x120] sm:$0xff]
  %v2612 = vld [vmem:[%s3 + $0x128] sm:$0xff]
  %v2613 = vld [vmem:[%s3 + $0x130] sm:$0xff]
  %v2614 = vld [vmem:[%s3 + $0x138] sm:$0xff]
  %v2615 = vld [vmem:[%s3 + $0x140] sm:$0xff]
  %v2616 = vld [vmem:[%s3 + $0x148] sm:$0xff]
  %v2617 = vld [vmem:[%s3 + $0x150] sm:$0xff]
  %v2618 = vld [vmem:[%s3 + $0x158] sm:$0xff]
  %v2619 = vld [vmem:[%s3 + $0x160] sm:$0xff]
  %v2620 = vld [vmem:[%s3 + $0x168] sm:$0xff]
  %v2621 = vld [vmem:[%s3 + $0x170] sm:$0xff]
  %v2622 = vld [vmem:[%s3 + $0x178] sm:$0xff]
  %v2623 = vld [vmem:[%s3 + $0x180] sm:$0xff]
  %v2624 = vld [vmem:[%s3 + $0x188] sm:$0xff]
  %v2625 = vld [vmem:[%s3 + $0x190] sm:$0xff]
  %v2626 = vld [vmem:[%s3 + $0x198] sm:$0xff]
  %v2627 = vld [vmem:[%s3 + $0x1a0] sm:$0xff]
  %v2628 = vld [vmem:[%s3 + $0x1a8] sm:$0xff]
  %v2629 = vld [vmem:[%s3 + $0x1b0] sm:$0xff]
  %v2630 = vld [vmem:[%s3 + $0x1b8] sm:$0xff]
  %v2631 = vld [vmem:[%s3 + $0x1c0] sm:$0xff]
  %v2632 = vld [vmem:[%s3 + $0x1c8] sm:$0xff]
  %v2633 = vld [vmem:[%s3 + $0x1d0] sm:$0xff]
  %v2634 = vld [vmem:[%s3 + $0x1d8] sm:$0xff]
  %v2635 = vld [vmem:[%s3 + $0x1e0] sm:$0xff]
  %v2636 = vld [vmem:[%s3 + $0x1e8] sm:$0xff]
  %v2637 = vld [vmem:[%s3 + $0x1f0] sm:$0xff]
  %v2638 = vld [vmem:[%s3 + $0x1f8] sm:$0xff]
  %v2639 = vld [vmem:[%s3 + $0x200] sm:$0xff]
  %v2640 = vld [vmem:[%s3 + $0x208] sm:$0xff]
  %v2641 = vld [vmem:[%s3 + $0x210] sm:$0xff]
  %v2642 = vld [vmem:[%s3 + $0x218] sm:$0xff]
  %v2643 = vld [vmem:[%s3 + $0x220] sm:$0xff]
  %v2644 = vld [vmem:[%s3 + $0x228] sm:$0xff]
  %v2645 = vld [vmem:[%s3 + $0x230] sm:$0xff]
  %v2646 = vld [vmem:[%s3 + $0x238] sm:$0xff]
  %v2647 = vld [vmem:[%s3 + $0x240] sm:$0xff]
  %v2648 = vld [vmem:[%s3 + $0x248] sm:$0xff]
  %v2649 = vld [vmem:[%s3 + $0x250] sm:$0xff]
  %v2650 = vld [vmem:[%s3 + $0x258] sm:$0xff]
  %v2651 = vld [vmem:[%s3 + $0x260] sm:$0xff]
  %v2652 = vld [vmem:[%s3 + $0x268] sm:$0xff]
  %v2653 = vld [vmem:[%s3 + $0x270] sm:$0xff]
  %v2654 = vld [vmem:[%s3 + $0x278] sm:$0xff]
  %v2655 = vld [vmem:[%s4] sm:$0x3]
  %v2657 = vlaneseq
  %v2658 = vshrl.u32 %v2657, 7
  %v2659 = vsub.s32 0, %v2658
  %v2660 = vrot.slane %v2655, %v2659
  %v2661 = vlaneseq
  %v2662 = vshrl.u32 %v2661, 7
  %v2663 = vsub.s32 1, %v2662
  %v2664 = vrot.slane %v2655, %v2663
  %v2747 = vunpack.c.l.b16 %v2575
  %v2748 = vunpack.c.h.b16 %v2575
  %v2749 = vunpack.c.l.b16 %v2576
  %v2750 = vunpack.c.h.b16 %v2576
  %v2751 = vunpack.c.l.b16 %v2577
  %v2752 = vunpack.c.h.b16 %v2577
  %v2753 = vunpack.c.l.b16 %v2578
  %v2754 = vunpack.c.h.b16 %v2578
  %v2755 = vunpack.c.l.b16 %v2579
  %v2756 = vunpack.c.h.b16 %v2579
  %v2757 = vunpack.c.l.b16 %v2580
  %v2758 = vunpack.c.h.b16 %v2580
  %v2759 = vunpack.c.l.b16 %v2581
  %v2760 = vunpack.c.h.b16 %v2581
  %v2761 = vunpack.c.l.b16 %v2582
  %v2762 = vunpack.c.h.b16 %v2582
  %v2763 = vunpack.c.l.b16 %v2583
  %v2764 = vunpack.c.h.b16 %v2583
  %v2765 = vunpack.c.l.b16 %v2584
  %v2766 = vunpack.c.h.b16 %v2584
  %v2767 = vunpack.c.l.b16 %v2585
  %v2768 = vunpack.c.h.b16 %v2585
  %v2769 = vunpack.c.l.b16 %v2586
  %v2770 = vunpack.c.h.b16 %v2586
  %v2771 = vunpack.c.l.b16 %v2587
  %v2772 = vunpack.c.h.b16 %v2587
  %v2773 = vunpack.c.l.b16 %v2588
  %v2774 = vunpack.c.h.b16 %v2588
  %v2775 = vunpack.c.l.b16 %v2589
  %v2776 = vunpack.c.h.b16 %v2589
  %v2777 = vunpack.c.l.b16 %v2590
  %v2778 = vunpack.c.h.b16 %v2590
  %v2779 = vunpack.c.l.b16 %v2591
  %v2780 = vunpack.c.h.b16 %v2591
  %v2781 = vunpack.c.l.b16 %v2592
  %v2782 = vunpack.c.h.b16 %v2592
  %v2783 = vunpack.c.l.b16 %v2593
  %v2784 = vunpack.c.h.b16 %v2593
  %v2785 = vunpack.c.l.b16 %v2594
  %v2786 = vunpack.c.h.b16 %v2594
  %v2787 = vunpack.c.l.b16 %v2595
  %v2788 = vunpack.c.h.b16 %v2595
  %v2789 = vunpack.c.l.b16 %v2596
  %v2790 = vunpack.c.h.b16 %v2596
  %v2791 = vunpack.c.l.b16 %v2597
  %v2792 = vunpack.c.h.b16 %v2597
  %v2793 = vunpack.c.l.b16 %v2598
  %v2794 = vunpack.c.h.b16 %v2598
  %v2795 = vunpack.c.l.b16 %v2599
  %v2796 = vunpack.c.h.b16 %v2599
  %v2797 = vunpack.c.l.b16 %v2600
  %v2798 = vunpack.c.h.b16 %v2600
  %v2799 = vunpack.c.l.b16 %v2601
  %v2800 = vunpack.c.h.b16 %v2601
  %v2801 = vunpack.c.l.b16 %v2602
  %v2802 = vunpack.c.h.b16 %v2602
  %v2803 = vunpack.c.l.b16 %v2603
  %v2804 = vunpack.c.h.b16 %v2603
  %v2805 = vunpack.c.l.b16 %v2604
  %v2806 = vunpack.c.h.b16 %v2604
  %v2807 = vunpack.c.l.b16 %v2605
  %v2808 = vunpack.c.h.b16 %v2605
  %v2809 = vunpack.c.l.b16 %v2606
  %v2810 = vunpack.c.h.b16 %v2606
  %v2811 = vunpack.c.l.b16 %v2607
  %v2812 = vunpack.c.h.b16 %v2607
  %v2813 = vunpack.c.l.b16 %v2608
  %v2814 = vunpack.c.h.b16 %v2608
  %v2815 = vunpack.c.l.b16 %v2609
  %v2816 = vunpack.c.h.b16 %v2609
  %v2817 = vunpack.c.l.b16 %v2610
  %v2818 = vunpack.c.h.b16 %v2610
  %v2819 = vunpack.c.l.b16 %v2611
  %v2820 = vunpack.c.h.b16 %v2611
  %v2821 = vunpack.c.l.b16 %v2612
  %v2822 = vunpack.c.h.b16 %v2612
  %v2823 = vunpack.c.l.b16 %v2613
  %v2824 = vunpack.c.h.b16 %v2613
  %v2825 = vunpack.c.l.b16 %v2614
  %v2826 = vunpack.c.h.b16 %v2614
  %v2827 = vunpack.c.l.b16 %v2615
  %v2828 = vunpack.c.h.b16 %v2615
  %v2829 = vunpack.c.l.b16 %v2616
  %v2830 = vunpack.c.h.b16 %v2616
  %v2831 = vunpack.c.l.b16 %v2617
  %v2832 = vunpack.c.h.b16 %v2617
  %v2833 = vunpack.c.l.b16 %v2618
  %v2834 = vunpack.c.h.b16 %v2618
  %v2835 = vunpack.c.l.b16 %v2619
  %v2836 = vunpack.c.h.b16 %v2619
  %v2837 = vunpack.c.l.b16 %v2620
  %v2838 = vunpack.c.h.b16 %v2620
  %v2839 = vunpack.c.l.b16 %v2621
  %v2840 = vunpack.c.h.b16 %v2621
  %v2841 = vunpack.c.l.b16 %v2622
  %v2842 = vunpack.c.h.b16 %v2622
  %v2843 = vunpack.c.l.b16 %v2623
  %v2844 = vunpack.c.h.b16 %v2623
  %v2845 = vunpack.c.l.b16 %v2624
  %v2846 = vunpack.c.h.b16 %v2624
  %v2847 = vunpack.c.l.b16 %v2625
  %v2848 = vunpack.c.h.b16 %v2625
  %v2849 = vunpack.c.l.b16 %v2626
  %v2850 = vunpack.c.h.b16 %v2626
  %v2851 = vunpack.c.l.b16 %v2627
  %v2852 = vunpack.c.h.b16 %v2627
  %v2853 = vunpack.c.l.b16 %v2628
  %v2854 = vunpack.c.h.b16 %v2628
  %v2855 = vunpack.c.l.b16 %v2629
  %v2856 = vunpack.c.h.b16 %v2629
  %v2857 = vunpack.c.l.b16 %v2630
  %v2858 = vunpack.c.h.b16 %v2630
  %v2859 = vunpack.c.l.b16 %v2631
  %v2860 = vunpack.c.h.b16 %v2631
  %v2861 = vunpack.c.l.b16 %v2632
  %v2862 = vunpack.c.h.b16 %v2632
  %v2863 = vunpack.c.l.b16 %v2633
  %v2864 = vunpack.c.h.b16 %v2633
  %v2865 = vunpack.c.l.b16 %v2634
  %v2866 = vunpack.c.h.b16 %v2634
  %v2867 = vunpack.c.l.b16 %v2635
  %v2868 = vunpack.c.h.b16 %v2635
  %v2869 = vunpack.c.l.b16 %v2636
  %v2870 = vunpack.c.h.b16 %v2636
  %v2871 = vunpack.c.l.b16 %v2637
  %v2872 = vunpack.c.h.b16 %v2637
  %v2873 = vunpack.c.l.b16 %v2638
  %v2874 = vunpack.c.h.b16 %v2638
  %v2875 = vunpack.c.l.b16 %v2639
  %v2876 = vunpack.c.h.b16 %v2639
  %v2877 = vunpack.c.l.b16 %v2640
  %v2878 = vunpack.c.h.b16 %v2640
  %v2879 = vunpack.c.l.b16 %v2641
  %v2880 = vunpack.c.h.b16 %v2641
  %v2881 = vunpack.c.l.b16 %v2642
  %v2882 = vunpack.c.h.b16 %v2642
  %v2883 = vunpack.c.l.b16 %v2643
  %v2884 = vunpack.c.h.b16 %v2643
  %v2885 = vunpack.c.l.b16 %v2644
  %v2886 = vunpack.c.h.b16 %v2644
  %v2887 = vunpack.c.l.b16 %v2645
  %v2888 = vunpack.c.h.b16 %v2645
  %v2889 = vunpack.c.l.b16 %v2646
  %v2890 = vunpack.c.h.b16 %v2646
  %v2891 = vunpack.c.l.b16 %v2647
  %v2892 = vunpack.c.h.b16 %v2647
  %v2893 = vunpack.c.l.b16 %v2648
  %v2894 = vunpack.c.h.b16 %v2648
  %v2895 = vunpack.c.l.b16 %v2649
  %v2896 = vunpack.c.h.b16 %v2649
  %v2897 = vunpack.c.l.b16 %v2650
  %v2898 = vunpack.c.h.b16 %v2650
  %v2899 = vunpack.c.l.b16 %v2651
  %v2900 = vunpack.c.h.b16 %v2651
  %v2901 = vunpack.c.l.b16 %v2652
  %v2902 = vunpack.c.h.b16 %v2652
  %v2903 = vunpack.c.l.b16 %v2653
  %v2904 = vunpack.c.h.b16 %v2653
  %v2905 = vunpack.c.l.b16 %v2654
  %v2906 = vunpack.c.h.b16 %v2654
  %v2907 = vpack.c.b16 %v2749, %v2747
  %v2908 = vpack.c.b16 %v2750, %v2748
  %v2909 = vpack.c.b16 %v2753, %v2751
  %v2910 = vpack.c.b16 %v2754, %v2752
  %v2911 = vpack.c.b16 %v2757, %v2755
  %v2912 = vpack.c.b16 %v2758, %v2756
  %v2913 = vpack.c.b16 %v2761, %v2759
  %v2914 = vpack.c.b16 %v2762, %v2760
  %v2915 = vpack.c.b16 %v2765, %v2763
  %v2916 = vpack.c.b16 %v2766, %v2764
  %v2917 = vpack.c.b16 %v2769, %v2767
  %v2918 = vpack.c.b16 %v2770, %v2768
  %v2919 = vpack.c.b16 %v2773, %v2771
  %v2920 = vpack.c.b16 %v2774, %v2772
  %v2921 = vpack.c.b16 %v2777, %v2775
  %v2922 = vpack.c.b16 %v2778, %v2776
  %v2923 = vpack.c.b16 %v2781, %v2779
  %v2924 = vpack.c.b16 %v2782, %v2780
  %v2925 = vpack.c.b16 %v2785, %v2783
  %v2926 = vpack.c.b16 %v2786, %v2784
  %v2927 = vpack.c.b16 %v2789, %v2787
  %v2928 = vpack.c.b16 %v2790, %v2788
  %v2929 = vpack.c.b16 %v2793, %v2791
  %v2930 = vpack.c.b16 %v2794, %v2792
  %v2931 = vpack.c.b16 %v2797, %v2795
  %v2932 = vpack.c.b16 %v2798, %v2796
  %v2933 = vpack.c.b16 %v2801, %v2799
  %v2934 = vpack.c.b16 %v2802, %v2800
  %v2935 = vpack.c.b16 %v2805, %v2803
  %v2936 = vpack.c.b16 %v2806, %v2804
  %v2937 = vpack.c.b16 %v2809, %v2807
  %v2938 = vpack.c.b16 %v2810, %v2808
  %v2939 = vpack.c.b16 %v2813, %v2811
  %v2940 = vpack.c.b16 %v2814, %v2812
  %v2941 = vpack.c.b16 %v2817, %v2815
  %v2942 = vpack.c.b16 %v2818, %v2816
  %v2943 = vpack.c.b16 %v2821, %v2819
  %v2944 = vpack.c.b16 %v2822, %v2820
  %v2945 = vpack.c.b16 %v2825, %v2823
  %v2946 = vpack.c.b16 %v2826, %v2824
  %v2947 = vpack.c.b16 %v2829, %v2827
  %v2948 = vpack.c.b16 %v2830, %v2828
  %v2949 = vpack.c.b16 %v2833, %v2831
  %v2950 = vpack.c.b16 %v2834, %v2832
  %v2951 = vpack.c.b16 %v2837, %v2835
  %v2952 = vpack.c.b16 %v2838, %v2836
  %v2953 = vpack.c.b16 %v2841, %v2839
  %v2954 = vpack.c.b16 %v2842, %v2840
  %v2955 = vpack.c.b16 %v2845, %v2843
  %v2956 = vpack.c.b16 %v2846, %v2844
  %v2957 = vpack.c.b16 %v2849, %v2847
  %v2958 = vpack.c.b16 %v2850, %v2848
  %v2959 = vpack.c.b16 %v2853, %v2851
  %v2960 = vpack.c.b16 %v2854, %v2852
  %v2961 = vpack.c.b16 %v2857, %v2855
  %v2962 = vpack.c.b16 %v2858, %v2856
  %v2963 = vpack.c.b16 %v2861, %v2859
  %v2964 = vpack.c.b16 %v2862, %v2860
  %v2965 = vpack.c.b16 %v2865, %v2863
  %v2966 = vpack.c.b16 %v2866, %v2864
  %v2967 = vpack.c.b16 %v2869, %v2867
  %v2968 = vpack.c.b16 %v2870, %v2868
  %v2969 = vpack.c.b16 %v2873, %v2871
  %v2970 = vpack.c.b16 %v2874, %v2872
  %v2971 = vpack.c.b16 %v2877, %v2875
  %v2972 = vpack.c.b16 %v2878, %v2876
  %v2973 = vpack.c.b16 %v2881, %v2879
  %v2974 = vpack.c.b16 %v2882, %v2880
  %v2975 = vpack.c.b16 %v2885, %v2883
  %v2976 = vpack.c.b16 %v2886, %v2884
  %v2977 = vpack.c.b16 %v2889, %v2887
  %v2978 = vpack.c.b16 %v2890, %v2888
  %v2979 = vpack.c.b16 %v2893, %v2891
  %v2980 = vpack.c.b16 %v2894, %v2892
  %v2981 = vpack.c.b16 %v2897, %v2895
  %v2982 = vpack.c.b16 %v2898, %v2896
  %v2983 = vpack.c.b16 %v2901, %v2899
  %v2984 = vpack.c.b16 %v2902, %v2900
  %v2985 = vpack.c.b16 %v2905, %v2903
  %v2986 = vpack.c.b16 %v2906, %v2904
  %3067 = vmatprep.subr.bf16.mxu0 %v2908
  %3068 = vmatpush1.bf16.msra.mxu0 %v2907
  %3069 = vmatprep.subr.bf16.mxu0 %v2910
  %3070 = vmatpush1.bf16.msra.mxu0 %v2909
  %3071 = vmatprep.subr.bf16.mxu0 %v2912
  %3072 = vmatpush1.bf16.msra.mxu0 %v2911
  %3073 = vmatprep.subr.bf16.mxu0 %v2914
  %3074 = vmatpush1.bf16.msra.mxu0 %v2913
  %3075 = vmatprep.subr.bf16.mxu0 %v2916
  %3076 = vmatpush1.bf16.msra.mxu0 %v2915
  %3077 = vmatprep.subr.bf16.mxu0 %v2918
  %3078 = vmatpush1.bf16.msra.mxu0 %v2917
  %3079 = vmatprep.subr.bf16.mxu0 %v2920
  %3080 = vmatpush1.bf16.msra.mxu0 %v2919
  %3081 = vmatprep.subr.bf16.mxu0 %v2922
  %3082 = vmatpush1.bf16.msra.mxu0 %v2921
  %3083 = vmatprep.subr.bf16.mxu0 %v2924
  %3084 = vmatpush1.bf16.msra.mxu0 %v2923
  %3085 = vmatprep.subr.bf16.mxu0 %v2926
  %3086 = vmatpush1.bf16.msra.mxu0 %v2925
  %3087 = vmatprep.subr.bf16.mxu0 %v2928
  %3088 = vmatpush1.bf16.msra.mxu0 %v2927
  %3089 = vmatprep.subr.bf16.mxu0 %v2930
  %3090 = vmatpush1.bf16.msra.mxu0 %v2929
  %3091 = vmatprep.subr.bf16.mxu0 %v2932
  %3092 = vmatpush1.bf16.msra.mxu0 %v2931
  %3093 = vmatprep.subr.bf16.mxu0 %v2934
  %3094 = vmatpush1.bf16.msra.mxu0 %v2933
  %3095 = vmatprep.subr.bf16.mxu0 %v2936
  %3096 = vmatpush1.bf16.msra.mxu0 %v2935
  %3097 = vmatprep.subr.bf16.mxu0 %v2938
  %3098 = vmatpush1.bf16.msra.mxu0 %v2937
  %3099 = vmatprep.mubr.bf16.mxu0 %v2556
  %3100 = vmatmul.mubr.bf16.gmra.mrb[0].mxu0 %v2555
  %v3101 = vpop.f32.mrb[0].mxu0
  %v3102 = vadd.f32 %v2660, %v3101
  %v3103 = vpop.f32.mrb[0].mxu0
  %v3104 = vadd.f32 %v2664, %v3103
  %v3105 = vpop.f32.mrb[0].mxu0
  %v3106 = vadd.f32 %v2660, %v3105
  %v3107 = vpop.f32.mrb[0].mxu0
  %v3108 = vadd.f32 %v2664, %v3107
  %3109 = vmatprep.mubr.bf16.mxu0 %v2561
  %3110 = vmatmul.mubr.bf16.gmra.mrb[0].mxu0 %v2560
  %v3111 = vpop.f32.mrb[0].mxu0
  %v3112 = vadd.f32 %v2660, %v3111
  %v3113 = vpop.f32.mrb[0].mxu0
  %v3114 = vadd.f32 %v2664, %v3113
  %v3115 = vpop.f32.mrb[0].mxu0
  %v3116 = vadd.f32 %v2660, %v3115
  %v3117 = vpop.f32.mrb[0].mxu0
  %v3118 = vadd.f32 %v2664, %v3117
  %3119 = vmatprep.mubr.bf16.mxu0 %v2566
  %3120 = vmatmul.mubr.bf16.gmra.mrb[0].mxu0 %v2565
  %v3121 = vpop.f32.mrb[0].mxu0
  %v3122 = vadd.f32 %v2660, %v3121
  %v3123 = vpop.f32.mrb[0].mxu0
  %v3124 = vadd.f32 %v2664, %v3123
  %v3125 = vpop.f32.mrb[0].mxu0
  %v3126 = vadd.f32 %v2660, %v3125
  %v3127 = vpop.f32.mrb[0].mxu0
  %v3128 = vadd.f32 %v2664, %v3127
  %3129 = vmatprep.mubr.bf16.mxu0 %v2571
  %3130 = vmatmul.mubr.bf16.gmra.mrb[0].mxu0 %v2570
  %v3131 = vpop.f32.mrb[0].mxu0
  %v3132 = vadd.f32 %v2660, %v3131
  %v3133 = vpop.f32.mrb[0].mxu0
  %v3134 = vadd.f32 %v2664, %v3133
  %v3135 = vpop.f32.mrb[0].mxu0
  %v3136 = vadd.f32 %v2660, %v3135
  %v3137 = vpop.f32.mrb[0].mxu0
  %v3138 = vadd.f32 %v2664, %v3137
  %3139 = vdwg.mxu0
  %3140 = vmatprep.subr.bf16.mxu0 %v2940
  %3141 = vmatpush1.bf16.msra.mxu0 %v2939
  %3142 = vmatprep.subr.bf16.mxu0 %v2942
  %3143 = vmatpush1.bf16.msra.mxu0 %v2941
  %3144 = vmatprep.subr.bf16.mxu0 %v2944
  %3145 = vmatpush1.bf16.msra.mxu0 %v2943
  %3146 = vmatprep.subr.bf16.mxu0 %v2946
  %3147 = vmatpush1.bf16.msra.mxu0 %v2945
  %3148 = vmatprep.subr.bf16.mxu0 %v2948
  %3149 = vmatpush1.bf16.msra.mxu0 %v2947
  %3150 = vmatprep.subr.bf16.mxu0 %v2950
  %3151 = vmatpush1.bf16.msra.mxu0 %v2949
  %3152 = vmatprep.subr.bf16.mxu0 %v2952
  %3153 = vmatpush1.bf16.msra.mxu0 %v2951
  %3154 = vmatprep.subr.bf16.mxu0 %v2954
  %3155 = vmatpush1.bf16.msra.mxu0 %v2953
  %3156 = vmatprep.subr.bf16.mxu0 %v2956
  %3157 = vmatpush1.bf16.msra.mxu0 %v2955
  %3158 = vmatprep.subr.bf16.mxu0 %v2958
  %3159 = vmatpush1.bf16.msra.mxu0 %v2957
  %3160 = vmatprep.subr.bf16.mxu0 %v2960
  %3161 = vmatpush1.bf16.msra.mxu0 %v2959
  %3162 = vmatprep.subr.bf16.mxu0 %v2962
  %3163 = vmatpush1.bf16.msra.mxu0 %v2961
  %3164 = vmatprep.subr.bf16.mxu0 %v2964
  %3165 = vmatpush1.bf16.msra.mxu0 %v2963
  %3166 = vmatprep.subr.bf16.mxu0 %v2966
  %3167 = vmatpush1.bf16.msra.mxu0 %v2965
  %3168 = vmatprep.subr.bf16.mxu0 %v2968
  %3169 = vmatpush1.bf16.msra.mxu0 %v2967
  %3170 = vmatprep.subr.bf16.mxu0 %v2970
  %3171 = vmatpush1.bf16.msra.mxu0 %v2969
  %3172 = vmatprep.mubr.bf16.mxu0 %v2558
  %3173 = vmatmul.mubr.bf16.gmra.mrb[0].mxu0 %v2557
  %v3174 = vpop.f32.mrb[0].mxu0
  %v3175 = vadd.f32 %v3102, %v3174
  %v3176 = vpop.f32.mrb[0].mxu0
  %v3177 = vadd.f32 %v3104, %v3176
  %v3178 = vpop.f32.mrb[0].mxu0
  %v3179 = vadd.f32 %v3106, %v3178
  %v3180 = vpop.f32.mrb[0].mxu0
  %v3181 = vadd.f32 %v3108, %v3180
  %3182 = vmatprep.mubr.bf16.mxu0 %v2563
  %3183 = vmatmul.mubr.bf16.gmra.mrb[0].mxu0 %v2562
  %v3184 = vpop.f32.mrb[0].mxu0
  %v3185 = vadd.f32 %v3112, %v3184
  %v3186 = vpop.f32.mrb[0].mxu0
  %v3187 = vadd.f32 %v3114, %v3186
  %v3188 = vpop.f32.mrb[0].mxu0
  %v3189 = vadd.f32 %v3116, %v3188
  %v3190 = vpop.f32.mrb[0].mxu0
  %v3191 = vadd.f32 %v3118, %v3190
  %3192 = vmatprep.mubr.bf16.mxu0 %v2568
  %3193 = vmatmul.mubr.bf16.gmra.mrb[0].mxu0 %v2567
  %v3194 = vpop.f32.mrb[0].mxu0
  %v3195 = vadd.f32 %v3122, %v3194
  %v3196 = vpop.f32.mrb[0].mxu0
  %v3197 = vadd.f32 %v3124, %v3196
  %v3198 = vpop.f32.mrb[0].mxu0
  %v3199 = vadd.f32 %v3126, %v3198
  %v3200 = vpop.f32.mrb[0].mxu0
  %v3201 = vadd.f32 %v3128, %v3200
  %3202 = vmatprep.mubr.bf16.mxu0 %v2573
  %3203 = vmatmul.mubr.bf16.gmra.mrb[0].mxu0 %v2572
  %v3204 = vpop.f32.mrb[0].mxu0
  %v3205 = vadd.f32 %v3132, %v3204
  %v3206 = vpop.f32.mrb[0].mxu0
  %v3207 = vadd.f32 %v3134, %v3206
  %v3208 = vpop.f32.mrb[0].mxu0
  %v3209 = vadd.f32 %v3136, %v3208
  %v3210 = vpop.f32.mrb[0].mxu0
  %v3211 = vadd.f32 %v3138, %v3210
  %3212 = vdwg.mxu0
  %3213 = vmatprep.subr.bf16.mxu0 %v2972
  %3214 = vmatpush1.bf16.msra.mxu0 %v2971
  %3215 = vmatprep.subr.bf16.mxu0 %v2974
  %3216 = vmatpush1.bf16.msra.mxu0 %v2973
  %3217 = vmatprep.subr.bf16.mxu0 %v2976
  %3218 = vmatpush1.bf16.msra.mxu0 %v2975
  %3219 = vmatprep.subr.bf16.mxu0 %v2978
  %3220 = vmatpush1.bf16.msra.mxu0 %v2977
  %3221 = vmatprep.subr.bf16.mxu0 %v2980
  %3222 = vmatpush1.bf16.msra.mxu0 %v2979
  %3223 = vmatprep.subr.bf16.mxu0 %v2982
  %3224 = vmatpush1.bf16.msra.mxu0 %v2981
  %3225 = vmatprep.subr.bf16.mxu0 %v2984
  %3226 = vmatpush1.bf16.msra.mxu0 %v2983
  %3227 = vmatprep.subr.bf16.mxu0 %v2986
  %3228 = vmatpush1.bf16.msra.mxu0 %v2985
  %3229 = vmatprep.subr.bf16.mxu0 0
  %3230 = vmatpush1.bf16.msra.mxu0 0
  %3231 = vmatprep.subr.bf16.mxu0 0
  %3232 = vmatpush1.bf16.msra.mxu0 0
  %3233 = vmatprep.subr.bf16.mxu0 0
  %3234 = vmatpush1.bf16.msra.mxu0 0
  %3235 = vmatprep.subr.bf16.mxu0 0
  %3236 = vmatpush1.bf16.msra.mxu0 0
  %3237 = vmatprep.subr.bf16.mxu0 0
  %3238 = vmatpush1.bf16.msra.mxu0 0
  %3239 = vmatprep.subr.bf16.mxu0 0
  %3240 = vmatpush1.bf16.msra.mxu0 0
  %3241 = vmatprep.subr.bf16.mxu0 0
  %3242 = vmatpush1.bf16.msra.mxu0 0
  %3243 = vmatprep.subr.bf16.mxu0 0
  %3244 = vmatpush1.bf16.msra.mxu0 0
  %3245 = vmatprep.mubr.bf16.mxu0 0
  %3246 = vmatmul.mubr.bf16.gmra.mrb[0].mxu0 %v2559
  %v3247 = vpop.f32.mrb[0].mxu0
  %v3248 = vadd.f32 %v3175, %v3247
  %v3249 = vpop.f32.mrb[0].mxu0
  %v3250 = vadd.f32 %v3177, %v3249
  %v3251 = vpop.f32.mrb[0].mxu0
  %v3252 = vadd.f32 %v3179, %v3251
  %v3253 = vpop.f32.mrb[0].mxu0
  %v3254 = vadd.f32 %v3181, %v3253
  %3255 = vmatprep.mubr.bf16.mxu0 0
  %3256 = vmatmul.mubr.bf16.gmra.mrb[0].mxu0 %v2564
  %v3257 = vpop.f32.mrb[0].mxu0
  %v3258 = vadd.f32 %v3185, %v3257
  %v3259 = vpop.f32.mrb[0].mxu0
  %v3260 = vadd.f32 %v3187, %v3259
  %v3261 = vpop.f32.mrb[0].mxu0
  %v3262 = vadd.f32 %v3189, %v3261
  %v3263 = vpop.f32.mrb[0].mxu0
  %v3264 = vadd.f32 %v3191, %v3263
  %3265 = vmatprep.mubr.bf16.mxu0 0
  %3266 = vmatmul.mubr.bf16.gmra.mrb[0].mxu0 %v2569
  %v3267 = vpop.f32.mrb[0].mxu0
  %v3268 = vadd.f32 %v3195, %v3267
  %v3269 = vpop.f32.mrb[0].mxu0
  %v3270 = vadd.f32 %v3197, %v3269
  %v3271 = vpop.f32.mrb[0].mxu0
  %v3272 = vadd.f32 %v3199, %v3271
  %v3273 = vpop.f32.mrb[0].mxu0
  %v3274 = vadd.f32 %v3201, %v3273
  %3275 = vmatprep.mubr.bf16.mxu0 0
  %3276 = vmatmul.mubr.bf16.gmra.mrb[0].mxu0 %v2574
  %v3277 = vpop.f32.mrb[0].mxu0
  %v3278 = vadd.f32 %v3205, %v3277
  %v3279 = vpop.f32.mrb[0].mxu0
  %v3280 = vadd.f32 %v3207, %v3279
  %v3281 = vpop.f32.mrb[0].mxu0
  %v3282 = vadd.f32 %v3209, %v3281
  %v3283 = vpop.f32.mrb[0].mxu0
  %v3284 = vadd.f32 %v3211, %v3283
  %3285 = vdwg.mxu0
  %v3302 = vcombine.low %v3248, %v3250
  %v3303 = vcombine.high %v3248, %v3250
  %v3304 = vcombine.low %v3252, %v3254
  %v3305 = vcombine.high %v3252, %v3254
  %v3306 = vcombine.low %v3258, %v3260
  %v3307 = vcombine.high %v3258, %v3260
  %v3308 = vcombine.low %v3262, %v3264
  %v3309 = vcombine.high %v3262, %v3264
  %v3310 = vcombine.low %v3268, %v3270
  %v3311 = vcombine.high %v3268, %v3270
  %v3312 = vcombine.low %v3272, %v3274
  %v3313 = vcombine.high %v3272, %v3274
  %v3314 = vcombine.low %v3278, %v3280
  %v3315 = vcombine.high %v3278, %v3280
  %v3316 = vcombine.low %v3282, %v3284
  %v3317 = vcombine.high %v3282, %v3284
  %v3335 = vunpack.c.l.s4 1966171168
  %v3336 = vunpack.c.0.s8 %v3335
  %v3337 = vlaneseq
  %v3338 = vshrl.u32 %v3337, 7
  %v3339 = vsub.s32 %v3336, %v3338
  %v3340 = vrot.slane %v3302, %v3339
  %v3342 = vunpack.c.l.s4 1966171168
  %v3343 = vunpack.c.0.s8 %v3342
  %v3344 = vlaneseq
  %v3345 = vshrl.u32 %v3344, 7
  %v3346 = vsub.s32 %v3343, %v3345
  %v3347 = vrot.slane %v3303, %v3346
  %v3349 = vunpack.c.l.s4 1966171168
  %v3350 = vunpack.c.0.s8 %v3349
  %v3351 = vlaneseq
  %v3352 = vshrl.u32 %v3351, 7
  %v3353 = vsub.s32 %v3350, %v3352
  %v3354 = vrot.slane %v3304, %v3353
  %v3356 = vunpack.c.l.s4 1966171168
  %v3357 = vunpack.c.0.s8 %v3356
  %v3358 = vlaneseq
  %v3359 = vshrl.u32 %v3358, 7
  %v3360 = vsub.s32 %v3357, %v3359
  %v3361 = vrot.slane %v3305, %v3360
  %v3363 = vunpack.c.l.s4 1966171168
  %v3364 = vunpack.c.0.s8 %v3363
  %v3365 = vlaneseq
  %v3366 = vshrl.u32 %v3365, 7
  %v3367 = vsub.s32 %v3364, %v3366
  %v3368 = vrot.slane %v3306, %v3367
  %v3370 = vunpack.c.l.s4 1966171168
  %v3371 = vunpack.c.0.s8 %v3370
  %v3372 = vlaneseq
  %v3373 = vshrl.u32 %v3372, 7
  %v3374 = vsub.s32 %v3371, %v3373
  %v3375 = vrot.slane %v3307, %v3374
  %v3377 = vunpack.c.l.s4 1966171168
  %v3378 = vunpack.c.0.s8 %v3377
  %v3379 = vlaneseq
  %v3380 = vshrl.u32 %v3379, 7
  %v3381 = vsub.s32 %v3378, %v3380
  %v3382 = vrot.slane %v3308, %v3381
  %v3384 = vunpack.c.l.s4 1966171168
  %v3385 = vunpack.c.0.s8 %v3384
  %v3386 = vlaneseq
  %v3387 = vshrl.u32 %v3386, 7
  %v3388 = vsub.s32 %v3385, %v3387
  %v3389 = vrot.slane %v3309, %v3388
  %v3391 = vunpack.c.l.s4 1966171168
  %v3392 = vunpack.c.0.s8 %v3391
  %v3393 = vlaneseq
  %v3394 = vshrl.u32 %v3393, 7
  %v3395 = vsub.s32 %v3392, %v3394
  %v3396 = vrot.slane %v3310, %v3395
  %v3398 = vunpack.c.l.s4 1966171168
  %v3399 = vunpack.c.0.s8 %v3398
  %v3400 = vlaneseq
  %v3401 = vshrl.u32 %v3400, 7
  %v3402 = vsub.s32 %v3399, %v3401
  %v3403 = vrot.slane %v3311, %v3402
  %v3405 = vunpack.c.l.s4 1966171168
  %v3406 = vunpack.c.0.s8 %v3405
  %v3407 = vlaneseq
  %v3408 = vshrl.u32 %v3407, 7
  %v3409 = vsub.s32 %v3406, %v3408
  %v3410 = vrot.slane %v3312, %v3409
  %v3412 = vunpack.c.l.s4 1966171168
  %v3413 = vunpack.c.0.s8 %v3412
  %v3414 = vlaneseq
  %v3415 = vshrl.u32 %v3414, 7
  %v3416 = vsub.s32 %v3413, %v3415
  %v3417 = vrot.slane %v3313, %v3416
  %v3419 = vunpack.c.l.s4 1966171168
  %v3420 = vunpack.c.0.s8 %v3419
  %v3421 = vlaneseq
  %v3422 = vshrl.u32 %v3421, 7
  %v3423 = vsub.s32 %v3420, %v3422
  %v3424 = vrot.slane %v3314, %v3423
  %v3426 = vunpack.c.l.s4 1966171168
  %v3427 = vunpack.c.0.s8 %v3426
  %v3428 = vlaneseq
  %v3429 = vshrl.u32 %v3428, 7
  %v3430 = vsub.s32 %v3427, %v3429
  %v3431 = vrot.slane %v3315, %v3430
  %v3433 = vunpack.c.l.s4 1966171168
  %v3434 = vunpack.c.0.s8 %v3433
  %v3435 = vlaneseq
  %v3436 = vshrl.u32 %v3435, 7
  %v3437 = vsub.s32 %v3434, %v3436
  %v3438 = vrot.slane %v3316, %v3437
  %v3440 = vunpack.c.l.s4 1966171168
  %v3441 = vunpack.c.0.s8 %v3440
  %v3442 = vlaneseq
  %v3443 = vshrl.u32 %v3442, 7
  %v3444 = vsub.s32 %v3441, %v3443
  %v3445 = vrot.slane %v3317, %v3444
  %v3462 = vrot.slane %v3340, 4
  %v3463 = vrot.slane %v3347, 4
  %v3464 = vrot.slane %v3354, 4
  %v3465 = vrot.slane %v3361, 4
  %v3466 = vrot.slane %v3368, 4
  %v3467 = vrot.slane %v3375, 4
  %v3468 = vrot.slane %v3382, 4
  %v3469 = vrot.slane %v3389, 4
  %v3470 = vrot.slane %v3396, 4
  %v3471 = vrot.slane %v3403, 4
  %v3472 = vrot.slane %v3410, 4
  %v3473 = vrot.slane %v3417, 4
  %v3474 = vrot.slane %v3424, 4
  %v3475 = vrot.slane %v3431, 4
  %v3476 = vrot.slane %v3438, 4
  %v3477 = vrot.slane %v3445, 4
  %v3494 = vmax.f32 %v3340, %v3462
  %v3495 = vmax.f32 %v3347, %v3463
  %v3496 = vmax.f32 %v3354, %v3464
  %v3497 = vmax.f32 %v3361, %v3465
  %v3498 = vmax.f32 %v3368, %v3466
  %v3499 = vmax.f32 %v3375, %v3467
  %v3500 = vmax.f32 %v3382, %v3468
  %v3501 = vmax.f32 %v3389, %v3469
  %v3502 = vmax.f32 %v3396, %v3470
  %v3503 = vmax.f32 %v3403, %v3471
  %v3504 = vmax.f32 %v3410, %v3472
  %v3505 = vmax.f32 %v3417, %v3473
  %v3506 = vmax.f32 %v3424, %v3474
  %v3507 = vmax.f32 %v3431, %v3475
  %v3508 = vmax.f32 %v3438, %v3476
  %v3509 = vmax.f32 %v3445, %v3477
  %v3526 = vrot.slane %v3494, 2
  %v3527 = vrot.slane %v3495, 2
  %v3528 = vrot.slane %v3496, 2
  %v3529 = vrot.slane %v3497, 2
  %v3530 = vrot.slane %v3498, 2
  %v3531 = vrot.slane %v3499, 2
  %v3532 = vrot.slane %v3500, 2
  %v3533 = vrot.slane %v3501, 2
  %v3534 = vrot.slane %v3502, 2
  %v3535 = vrot.slane %v3503, 2
  %v3536 = vrot.slane %v3504, 2
  %v3537 = vrot.slane %v3505, 2
  %v3538 = vrot.slane %v3506, 2
  %v3539 = vrot.slane %v3507, 2
  %v3540 = vrot.slane %v3508, 2
  %v3541 = vrot.slane %v3509, 2
  %v3558 = vmax.f32 %v3494, %v3526
  %v3559 = vmax.f32 %v3495, %v3527
  %v3560 = vmax.f32 %v3496, %v3528
  %v3561 = vmax.f32 %v3497, %v3529
  %v3562 = vmax.f32 %v3498, %v3530
  %v3563 = vmax.f32 %v3499, %v3531
  %v3564 = vmax.f32 %v3500, %v3532
  %v3565 = vmax.f32 %v3501, %v3533
  %v3566 = vmax.f32 %v3502, %v3534
  %v3567 = vmax.f32 %v3503, %v3535
  %v3568 = vmax.f32 %v3504, %v3536
  %v3569 = vmax.f32 %v3505, %v3537
  %v3570 = vmax.f32 %v3506, %v3538
  %v3571 = vmax.f32 %v3507, %v3539
  %v3572 = vmax.f32 %v3508, %v3540
  %v3573 = vmax.f32 %v3509, %v3541
  %v3574 = vmax.f32 %v3558, 0.0
  %v3575 = vmax.f32 %v3559, 0.0
  %v3576 = vmax.f32 %v3560, 0.0
  %v3577 = vmax.f32 %v3561, 0.0
  %v3578 = vmax.f32 %v3562, 0.0
  %v3579 = vmax.f32 %v3563, 0.0
  %v3580 = vmax.f32 %v3564, 0.0
  %v3581 = vmax.f32 %v3565, 0.0
  %v3582 = vmax.f32 %v3566, 0.0
  %v3583 = vmax.f32 %v3567, 0.0
  %v3584 = vmax.f32 %v3568, 0.0
  %v3585 = vmax.f32 %v3569, 0.0
  %v3586 = vmax.f32 %v3570, 0.0
  %v3587 = vmax.f32 %v3571, 0.0
  %v3588 = vmax.f32 %v3572, 0.0
  %v3589 = vmax.f32 %v3573, 0.0
  %v3606 = vcombine.low %v3574, %v3575
  %v3607 = vcombine.low %v3576, %v3577
  %v3609 = vunpack.c.l.s4 1983009808
  %v3610 = vunpack.c.0.s8 %v3609
  %v3611 = vlaneseq
  %v3612 = vshrl.u32 %v3611, 7
  %v3613 = vsub.s32 %v3610, %v3612
  %v3614 = vrot.slane %v3606, %v3613
  %v3616 = vunpack.c.l.s4 1983009808
  %v3617 = vunpack.c.0.s8 %v3616
  %v3618 = vlaneseq
  %v3619 = vshrl.u32 %v3618, 7
  %v3620 = vsub.s32 %v3617, %v3619
  %v3621 = vrot.slane %v3607, %v3620
  %v3622 = vcombine.low %v3614, %v3621
  %v3623 = vcombine.low %v3578, %v3579
  %v3624 = vcombine.low %v3580, %v3581
  %v3626 = vunpack.c.l.s4 1983009808
  %v3627 = vunpack.c.0.s8 %v3626
  %v3628 = vlaneseq
  %v3629 = vshrl.u32 %v3628, 7
  %v3630 = vsub.s32 %v3627, %v3629
  %v3631 = vrot.slane %v3623, %v3630
  %v3633 = vunpack.c.l.s4 1983009808
  %v3634 = vunpack.c.0.s8 %v3633
  %v3635 = vlaneseq
  %v3636 = vshrl.u32 %v3635, 7
  %v3637 = vsub.s32 %v3634, %v3636
  %v3638 = vrot.slane %v3624, %v3637
  %v3639 = vcombine.low %v3631, %v3638
  %v3640 = vcombine.low %v3582, %v3583
  %v3641 = vcombine.low %v3584, %v3585
  %v3643 = vunpack.c.l.s4 1983009808
  %v3644 = vunpack.c.0.s8 %v3643
  %v3645 = vlaneseq
  %v3646 = vshrl.u32 %v3645, 7
  %v3647 = vsub.s32 %v3644, %v3646
  %v3648 = vrot.slane %v3640, %v3647
  %v3650 = vunpack.c.l.s4 1983009808
  %v3651 = vunpack.c.0.s8 %v3650
  %v3652 = vlaneseq
  %v3653 = vshrl.u32 %v3652, 7
  %v3654 = vsub.s32 %v3651, %v3653
  %v3655 = vrot.slane %v3641, %v3654
  %v3656 = vcombine.low %v3648, %v3655
  %v3657 = vcombine.low %v3586, %v3587
  %v3658 = vcombine.low %v3588, %v3589
  %v3660 = vunpack.c.l.s4 1983009808
  %v3661 = vunpack.c.0.s8 %v3660
  %v3662 = vlaneseq
  %v3663 = vshrl.u32 %v3662, 7
  %v3664 = vsub.s32 %v3661, %v3663
  %v3665 = vrot.slane %v3657, %v3664
  %v3667 = vunpack.c.l.s4 1983009808
  %v3668 = vunpack.c.0.s8 %v3667
  %v3669 = vlaneseq
  %v3670 = vshrl.u32 %v3669, 7
  %v3671 = vsub.s32 %v3668, %v3670
  %v3672 = vrot.slane %v3658, %v3671
  %v3673 = vcombine.low %v3665, %v3672
  %v3679 = vunpack.c.l.s4 1935823168
  %v3680 = vunpack.c.0.s8 %v3679
  %v3681 = vlaneseq
  %v3682 = vshrl.u32 %v3681, 7
  %v3683 = vsub.s32 %v3680, %v3682
  %v3684 = vrot.slane %v3622, %v3683
  %v3686 = vunpack.c.l.s4 1935823168
  %v3687 = vunpack.c.0.s8 %v3686
  %v3688 = vlaneseq
  %v3689 = vshrl.u32 %v3688, 7
  %v3690 = vsub.s32 %v3687, %v3689
  %v3691 = vrot.slane %v3639, %v3690
  %v3693 = vunpack.c.l.s4 1935823168
  %v3694 = vunpack.c.0.s8 %v3693
  %v3695 = vlaneseq
  %v3696 = vshrl.u32 %v3695, 7
  %v3697 = vsub.s32 %v3694, %v3696
  %v3698 = vrot.slane %v3656, %v3697
  %v3700 = vunpack.c.l.s4 1935823168
  %v3701 = vunpack.c.0.s8 %v3700
  %v3702 = vlaneseq
  %v3703 = vshrl.u32 %v3702, 7
  %v3704 = vsub.s32 %v3701, %v3703
  %v3705 = vrot.slane %v3673, %v3704
  %v3710 = vcombine.low %v3684, %v3691
  %v3711 = vcombine.high %v3684, %v3691
  %v3712 = vcombine.low %v3698, %v3705
  %v3713 = vcombine.high %v3698, %v3705
  %v3715 = vunpack.c.l.s4 1983009808
  %v3716 = vunpack.c.0.s8 %v3715
  %v3717 = vlaneseq
  %v3718 = vshrl.u32 %v3717, 7
  %v3719 = vsub.s32 %v3716, %v3718
  %v3720 = vrot.slane %v3710, %v3719
  %v3722 = vunpack.c.l.s4 1983009808
  %v3723 = vunpack.c.0.s8 %v3722
  %v3724 = vlaneseq
  %v3725 = vshrl.u32 %v3724, 7
  %v3726 = vsub.s32 %v3723, %v3725
  %v3727 = vrot.slane %v3711, %v3726
  %v3729 = vunpack.c.l.s4 1983009808
  %v3730 = vunpack.c.0.s8 %v3729
  %v3731 = vlaneseq
  %v3732 = vshrl.u32 %v3731, 7
  %v3733 = vsub.s32 %v3730, %v3732
  %v3734 = vrot.slane %v3712, %v3733
  %v3736 = vunpack.c.l.s4 1983009808
  %v3737 = vunpack.c.0.s8 %v3736
  %v3738 = vlaneseq
  %v3739 = vshrl.u32 %v3738, 7
  %v3740 = vsub.s32 %v3737, %v3739
  %v3741 = vrot.slane %v3713, %v3740
  %v3742 = vcombine.low %v3720, %v3734
  %v3743 = vcombine.high %v3720, %v3734
  %v3744 = vcombine.low %v3727, %v3741
  %v3745 = vcombine.high %v3727, %v3741
  %v3750 = vpack.c.bf16 %v3742, %v3742
  %v3751 = vpack.c.bf16 %v3743, %v3743
  %v3752 = vpack.c.bf16 %v3744, %v3744
  %v3753 = vpack.c.bf16 %v3745, %v3745
  %v3754 = vld [vmem:[%s5] sm:$0xf]
  %v3755 = vld [vmem:[%s5 + $0x4] sm:$0xf]
  %v3756 = vld [vmem:[%s5 + $0x8] sm:$0xf]
  %v3757 = vld [vmem:[%s5 + $0xc] sm:$0xf]
  %v3758 = vld [vmem:[%s5 + $0x10] sm:$0xf]
  %v3759 = vld [vmem:[%s5 + $0x14] sm:$0xf]
  %v3760 = vld [vmem:[%s5 + $0x18] sm:$0xf]
  %v3761 = vld [vmem:[%s5 + $0x1c] sm:$0xf]
  %v3762 = vld [vmem:[%s5 + $0x20] sm:$0xf]
  %v3763 = vld [vmem:[%s5 + $0x24] sm:$0xf]
  %v3764 = vld [vmem:[%s5 + $0x28] sm:$0xf]
  %v3765 = vld [vmem:[%s5 + $0x2c] sm:$0xf]
  %v3766 = vld [vmem:[%s5 + $0x30] sm:$0xf]
  %v3767 = vld [vmem:[%s5 + $0x34] sm:$0xf]
  %v3768 = vld [vmem:[%s5 + $0x38] sm:$0xf]
  %v3769 = vld [vmem:[%s5 + $0x3c] sm:$0xf]
  %v3770 = vld [vmem:[%s5 + $0x40] sm:$0xf]
  %v3771 = vld [vmem:[%s5 + $0x44] sm:$0xf]
  %v3772 = vld [vmem:[%s5 + $0x48] sm:$0xf]
  %v3773 = vld [vmem:[%s5 + $0x4c] sm:$0xf]
  %v3774 = vld [vmem:[%s5 + $0x50] sm:$0xf]
  %v3775 = vld [vmem:[%s5 + $0x54] sm:$0xf]
  %v3776 = vld [vmem:[%s5 + $0x58] sm:$0xf]
  %v3777 = vld [vmem:[%s5 + $0x5c] sm:$0xf]
  %v3778 = vld [vmem:[%s5 + $0x60] sm:$0xf]
  %v3779 = vld [vmem:[%s5 + $0x64] sm:$0xf]
  %v3780 = vld [vmem:[%s5 + $0x68] sm:$0xf]
  %v3781 = vld [vmem:[%s5 + $0x6c] sm:$0xf]
  %v3782 = vld [vmem:[%s5 + $0x70] sm:$0xf]
  %v3783 = vld [vmem:[%s5 + $0x74] sm:$0xf]
  %v3784 = vld [vmem:[%s5 + $0x78] sm:$0xf]
  %v3785 = vld [vmem:[%s5 + $0x7c] sm:$0xf]
  %v3786 = vld [vmem:[%s5 + $0x80] sm:$0xf]
  %v3787 = vld [vmem:[%s5 + $0x84] sm:$0xf]
  %v3788 = vld [vmem:[%s5 + $0x88] sm:$0xf]
  %v3789 = vld [vmem:[%s5 + $0x8c] sm:$0xf]
  %v3790 = vld [vmem:[%s5 + $0x90] sm:$0xf]
  %v3791 = vld [vmem:[%s5 + $0x94] sm:$0xf]
  %v3792 = vld [vmem:[%s5 + $0x98] sm:$0xf]
  %v3793 = vld [vmem:[%s5 + $0x9c] sm:$0xf]
  %v3794 = vld [vmem:[%s5 + $0xa0] sm:$0xf]
  %v3795 = vld [vmem:[%s5 + $0xa4] sm:$0xf]
  %v3796 = vld [vmem:[%s5 + $0xa8] sm:$0xf]
  %v3797 = vld [vmem:[%s5 + $0xac] sm:$0xf]
  %v3798 = vld [vmem:[%s5 + $0xb0] sm:$0xf]
  %v3799 = vld [vmem:[%s5 + $0xb4] sm:$0xf]
  %v3800 = vld [vmem:[%s5 + $0xb8] sm:$0xf]
  %v3801 = vld [vmem:[%s5 + $0xbc] sm:$0xf]
  %v3802 = vld [vmem:[%s5 + $0xc0] sm:$0xf]
  %v3803 = vld [vmem:[%s5 + $0xc4] sm:$0xf]
  %v3804 = vld [vmem:[%s5 + $0xc8] sm:$0xf]
  %v3805 = vld [vmem:[%s5 + $0xcc] sm:$0xf]
  %v3806 = vld [vmem:[%s5 + $0xd0] sm:$0xf]
  %v3807 = vld [vmem:[%s5 + $0xd4] sm:$0xf]
  %v3808 = vld [vmem:[%s5 + $0xd8] sm:$0xf]
  %v3809 = vld [vmem:[%s5 + $0xdc] sm:$0xf]
  %v3810 = vld [vmem:[%s5 + $0xe0] sm:$0xf]
  %v3811 = vld [vmem:[%s5 + $0xe4] sm:$0xf]
  %v3812 = vld [vmem:[%s5 + $0xe8] sm:$0xf]
  %v3813 = vld [vmem:[%s5 + $0xec] sm:$0xf]
  %v3814 = vld [vmem:[%s5 + $0xf0] sm:$0xf]
  %v3815 = vld [vmem:[%s5 + $0xf4] sm:$0xf]
  %v3816 = vld [vmem:[%s5 + $0xf8] sm:$0xf]
  %v3817 = vld [vmem:[%s5 + $0xfc] sm:$0xf]
  %v3818 = vld [vmem:[%s6] sm:$0x1]
  %v3820 = vlaneseq
  %v3821 = vshrl.u32 %v3820, 7
  %v3822 = vsub.s32 0, %v3821
  %v3823 = vrot.slane %v3818, %v3822
  %v3889 = vunpack.c.l.b16 %v3754
  %v3890 = vunpack.c.l.b16 %v3755
  %v3891 = vunpack.c.l.b16 %v3756
  %v3892 = vunpack.c.l.b16 %v3757
  %v3893 = vunpack.c.l.b16 %v3758
  %v3894 = vunpack.c.l.b16 %v3759
  %v3895 = vunpack.c.l.b16 %v3760
  %v3896 = vunpack.c.l.b16 %v3761
  %v3897 = vunpack.c.l.b16 %v3762
  %v3898 = vunpack.c.l.b16 %v3763
  %v3899 = vunpack.c.l.b16 %v3764
  %v3900 = vunpack.c.l.b16 %v3765
  %v3901 = vunpack.c.l.b16 %v3766
  %v3902 = vunpack.c.l.b16 %v3767
  %v3903 = vunpack.c.l.b16 %v3768
  %v3904 = vunpack.c.l.b16 %v3769
  %v3905 = vunpack.c.l.b16 %v3770
  %v3906 = vunpack.c.l.b16 %v3771
  %v3907 = vunpack.c.l.b16 %v3772
  %v3908 = vunpack.c.l.b16 %v3773
  %v3909 = vunpack.c.l.b16 %v3774
  %v3910 = vunpack.c.l.b16 %v3775
  %v3911 = vunpack.c.l.b16 %v3776
  %v3912 = vunpack.c.l.b16 %v3777
  %v3913 = vunpack.c.l.b16 %v3778
  %v3914 = vunpack.c.l.b16 %v3779
  %v3915 = vunpack.c.l.b16 %v3780
  %v3916 = vunpack.c.l.b16 %v3781
  %v3917 = vunpack.c.l.b16 %v3782
  %v3918 = vunpack.c.l.b16 %v3783
  %v3919 = vunpack.c.l.b16 %v3784
  %v3920 = vunpack.c.l.b16 %v3785
  %v3921 = vunpack.c.l.b16 %v3786
  %v3922 = vunpack.c.l.b16 %v3787
  %v3923 = vunpack.c.l.b16 %v3788
  %v3924 = vunpack.c.l.b16 %v3789
  %v3925 = vunpack.c.l.b16 %v3790
  %v3926 = vunpack.c.l.b16 %v3791
  %v3927 = vunpack.c.l.b16 %v3792
  %v3928 = vunpack.c.l.b16 %v3793
  %v3929 = vunpack.c.l.b16 %v3794
  %v3930 = vunpack.c.l.b16 %v3795
  %v3931 = vunpack.c.l.b16 %v3796
  %v3932 = vunpack.c.l.b16 %v3797
  %v3933 = vunpack.c.l.b16 %v3798
  %v3934 = vunpack.c.l.b16 %v3799
  %v3935 = vunpack.c.l.b16 %v3800
  %v3936 = vunpack.c.l.b16 %v3801
  %v3937 = vunpack.c.l.b16 %v3802
  %v3938 = vunpack.c.l.b16 %v3803
  %v3939 = vunpack.c.l.b16 %v3804
  %v3940 = vunpack.c.l.b16 %v3805
  %v3941 = vunpack.c.l.b16 %v3806
  %v3942 = vunpack.c.l.b16 %v3807
  %v3943 = vunpack.c.l.b16 %v3808
  %v3944 = vunpack.c.l.b16 %v3809
  %v3945 = vunpack.c.l.b16 %v3810
  %v3946 = vunpack.c.l.b16 %v3811
  %v3947 = vunpack.c.l.b16 %v3812
  %v3948 = vunpack.c.l.b16 %v3813
  %v3949 = vunpack.c.l.b16 %v3814
  %v3950 = vunpack.c.l.b16 %v3815
  %v3951 = vunpack.c.l.b16 %v3816
  %v3952 = vunpack.c.l.b16 %v3817
  %v3953 = vpack.c.b16 %v3890, %v3889
  %v3954 = vpack.c.b16 %v3892, %v3891
  %v3955 = vpack.c.b16 %v3894, %v3893
  %v3956 = vpack.c.b16 %v3896, %v3895
  %v3957 = vpack.c.b16 %v3898, %v3897
  %v3958 = vpack.c.b16 %v3900, %v3899
  %v3959 = vpack.c.b16 %v3902, %v3901
  %v3960 = vpack.c.b16 %v3904, %v3903
  %v3961 = vpack.c.b16 %v3906, %v3905
  %v3962 = vpack.c.b16 %v3908, %v3907
  %v3963 = vpack.c.b16 %v3910, %v3909
  %v3964 = vpack.c.b16 %v3912, %v3911
  %v3965 = vpack.c.b16 %v3914, %v3913
  %v3966 = vpack.c.b16 %v3916, %v3915
  %v3967 = vpack.c.b16 %v3918, %v3917
  %v3968 = vpack.c.b16 %v3920, %v3919
  %v3969 = vpack.c.b16 %v3922, %v3921
  %v3970 = vpack.c.b16 %v3924, %v3923
  %v3971 = vpack.c.b16 %v3926, %v3925
  %v3972 = vpack.c.b16 %v3928, %v3927
  %v3973 = vpack.c.b16 %v3930, %v3929
  %v3974 = vpack.c.b16 %v3932, %v3931
  %v3975 = vpack.c.b16 %v3934, %v3933
  %v3976 = vpack.c.b16 %v3936, %v3935
  %v3977 = vpack.c.b16 %v3938, %v3937
  %v3978 = vpack.c.b16 %v3940, %v3939
  %v3979 = vpack.c.b16 %v3942, %v3941
  %v3980 = vpack.c.b16 %v3944, %v3943
  %v3981 = vpack.c.b16 %v3946, %v3945
  %v3982 = vpack.c.b16 %v3948, %v3947
  %v3983 = vpack.c.b16 %v3950, %v3949
  %v3984 = vpack.c.b16 %v3952, %v3951
  %4017 = vmatprep.subr.bf16.mxu0 0
  %4018 = vmatpush1.bf16.msra.mxu0 %v3953
  %4019 = vmatprep.subr.bf16.mxu0 0
  %4020 = vmatpush1.bf16.msra.mxu0 %v3954
  %4021 = vmatprep.subr.bf16.mxu0 0
  %4022 = vmatpush1.bf16.msra.mxu0 %v3955
  %4023 = vmatprep.subr.bf16.mxu0 0
  %4024 = vmatpush1.bf16.msra.mxu0 %v3956
  %4025 = vmatprep.subr.bf16.mxu0 0
  %4026 = vmatpush1.bf16.msra.mxu0 %v3957
  %4027 = vmatprep.subr.bf16.mxu0 0
  %4028 = vmatpush1.bf16.msra.mxu0 %v3958
  %4029 = vmatprep.subr.bf16.mxu0 0
  %4030 = vmatpush1.bf16.msra.mxu0 %v3959
  %4031 = vmatprep.subr.bf16.mxu0 0
  %4032 = vmatpush1.bf16.msra.mxu0 %v3960
  %4033 = vmatprep.subr.bf16.mxu0 0
  %4034 = vmatpush1.bf16.msra.mxu0 %v3961
  %4035 = vmatprep.subr.bf16.mxu0 0
  %4036 = vmatpush1.bf16.msra.mxu0 %v3962
  %4037 = vmatprep.subr.bf16.mxu0 0
  %4038 = vmatpush1.bf16.msra.mxu0 %v3963
  %4039 = vmatprep.subr.bf16.mxu0 0
  %4040 = vmatpush1.bf16.msra.mxu0 %v3964
  %4041 = vmatprep.subr.bf16.mxu0 0
  %4042 = vmatpush1.bf16.msra.mxu0 %v3965
  %4043 = vmatprep.subr.bf16.mxu0 0
  %4044 = vmatpush1.bf16.msra.mxu0 %v3966
  %4045 = vmatprep.subr.bf16.mxu0 0
  %4046 = vmatpush1.bf16.msra.mxu0 %v3967
  %4047 = vmatprep.subr.bf16.mxu0 0
  %4048 = vmatpush1.bf16.msra.mxu0 %v3968
  %4049 = vmatprep.mubr.bf16.mxu0 %v3751
  %4050 = vmatmul.mubr.bf16.gmra.mrb[0].mxu0 %v3750
  %v4051 = vpop.f32.mrb[0].mxu0
  %v4052 = vadd.f32 %v3823, %v4051
  %v4053 = vpop.f32.mrb[0].mxu0
  %v4054 = vpop.f32.mrb[0].mxu0
  %v4055 = vpop.f32.mrb[0].mxu0
  %4056 = vdwg.mxu0
  %4057 = vmatprep.subr.bf16.mxu0 0
  %4058 = vmatpush1.bf16.msra.mxu0 %v3969
  %4059 = vmatprep.subr.bf16.mxu0 0
  %4060 = vmatpush1.bf16.msra.mxu0 %v3970
  %4061 = vmatprep.subr.bf16.mxu0 0
  %4062 = vmatpush1.bf16.msra.mxu0 %v3971
  %4063 = vmatprep.subr.bf16.mxu0 0
  %4064 = vmatpush1.bf16.msra.mxu0 %v3972
  %4065 = vmatprep.subr.bf16.mxu0 0
  %4066 = vmatpush1.bf16.msra.mxu0 %v3973
  %4067 = vmatprep.subr.bf16.mxu0 0
  %4068 = vmatpush1.bf16.msra.mxu0 %v3974
  %4069 = vmatprep.subr.bf16.mxu0 0
  %4070 = vmatpush1.bf16.msra.mxu0 %v3975
  %4071 = vmatprep.subr.bf16.mxu0 0
  %4072 = vmatpush1.bf16.msra.mxu0 %v3976
  %4073 = vmatprep.subr.bf16.mxu0 0
  %4074 = vmatpush1.bf16.msra.mxu0 %v3977
  %4075 = vmatprep.subr.bf16.mxu0 0
  %4076 = vmatpush1.bf16.msra.mxu0 %v3978
  %4077 = vmatprep.subr.bf16.mxu0 0
  %4078 = vmatpush1.bf16.msra.mxu0 %v3979
  %4079 = vmatprep.subr.bf16.mxu0 0
  %4080 = vmatpush1.bf16.msra.mxu0 %v3980
  %4081 = vmatprep.subr.bf16.mxu0 0
  %4082 = vmatpush1.bf16.msra.mxu0 %v3981
  %4083 = vmatprep.subr.bf16.mxu0 0
  %4084 = vmatpush1.bf16.msra.mxu0 %v3982
  %4085 = vmatprep.subr.bf16.mxu0 0
  %4086 = vmatpush1.bf16.msra.mxu0 %v3983
  %4087 = vmatprep.subr.bf16.mxu0 0
  %4088 = vmatpush1.bf16.msra.mxu0 %v3984
  %4089 = vmatprep.mubr.bf16.mxu0 %v3753
  %4090 = vmatmul.mubr.bf16.gmra.mrb[0].mxu0 %v3752
  %v4091 = vpop.f32.mrb[0].mxu0
  %v4092 = vadd.f32 %v4052, %v4091
  %v4093 = vpop.f32.mrb[0].mxu0
  %v4094 = vpop.f32.mrb[0].mxu0
  %v4095 = vpop.f32.mrb[0].mxu0
  %4096 = vdwg.mxu0
  %v4097 = vmax.f32 %v4092, 0.0
  %v4098 = vpack.c.bf16 %v4097, %v4097
  %v4099 = vld [vmem:[%s7] sm:$0xf]
  %v4100 = vld [vmem:[%s7 + $0x4] sm:$0xf]
  %v4101 = vld [vmem:[%s7 + $0x8] sm:$0xf]
  %v4102 = vld [vmem:[%s7 + $0xc] sm:$0xf]
  %v4103 = vld [vmem:[%s7 + $0x10] sm:$0xf]
  %v4104 = vld [vmem:[%s7 + $0x14] sm:$0xf]
  %v4105 = vld [vmem:[%s7 + $0x18] sm:$0x1]
  %v4106 = vld [vmem:[%s8] sm:$0x1]
  %v4108 = vlaneseq
  %v4109 = vshrl.u32 %v4108, 7
  %v4110 = vsub.s32 0, %v4109
  %v4111 = vrot.slane %v4106, %v4110
  %v4120 = vunpack.c.l.b16 %v4099
  %v4121 = vunpack.c.l.b16 %v4100
  %v4122 = vunpack.c.l.b16 %v4101
  %v4123 = vunpack.c.l.b16 %v4102
  %v4124 = vunpack.c.l.b16 %v4103
  %v4125 = vunpack.c.l.b16 %v4104
  %v4126 = vunpack.c.l.b16 %v4105
  %v4127 = vpack.c.b16 %v4121, %v4120
  %v4128 = vpack.c.b16 %v4123, %v4122
  %v4129 = vpack.c.b16 %v4125, %v4124
  %v4130 = vpack.c.b16 %v4126, %v4126
  %vm4134 = vcmask 408576
  %v4136 = vsel %vm4134, %v4098, 0
  %vm4138 = vcmask 1040384
  %v4140 = vsel %vm4138, %v4130, 0
  %4142 = vmatprep.subr.bf16.mxu0 0
  %4143 = vmatpush1.bf16.msra.mxu0 %v4127
  %4144 = vmatprep.subr.bf16.mxu0 0
  %4145 = vmatpush1.bf16.msra.mxu0 %v4128
  %4146 = vmatprep.subr.bf16.mxu0 0
  %4147 = vmatpush1.bf16.msra.mxu0 %v4129
  %4148 = vmatprep.subr.bf16.mxu0 0
  %4149 = vmatpush1.bf16.msra.mxu0 %v4140
  %4150 = vmatprep.subr.bf16.mxu0 0
  %4151 = vmatpush1.bf16.msra.mxu0 0
  %4152 = vmatprep.subr.bf16.mxu0 0
  %4153 = vmatpush1.bf16.msra.mxu0 0
  %4154 = vmatprep.subr.bf16.mxu0 0
  %4155 = vmatpush1.bf16.msra.mxu0 0
  %4156 = vmatprep.subr.bf16.mxu0 0
  %4157 = vmatpush1.bf16.msra.mxu0 0
  %4158 = vmatprep.subr.bf16.mxu0 0
  %4159 = vmatpush1.bf16.msra.mxu0 0
  %4160 = vmatprep.subr.bf16.mxu0 0
  %4161 = vmatpush1.bf16.msra.mxu0 0
  %4162 = vmatprep.subr.bf16.mxu0 0
  %4163 = vmatpush1.bf16.msra.mxu0 0
  %4164 = vmatprep.subr.bf16.mxu0 0
  %4165 = vmatpush1.bf16.msra.mxu0 0
  %4166 = vmatprep.subr.bf16.mxu0 0
  %4167 = vmatpush1.bf16.msra.mxu0 0
  %4168 = vmatprep.subr.bf16.mxu0 0
  %4169 = vmatpush1.bf16.msra.mxu0 0
  %4170 = vmatprep.subr.bf16.mxu0 0
  %4171 = vmatpush1.bf16.msra.mxu0 0
  %4172 = vmatprep.subr.bf16.mxu0 0
  %4173 = vmatpush1.bf16.msra.mxu0 0
  %4174 = vmatprep.mubr.bf16.mxu0 0
  %4175 = vmatmul.mubr.bf16.gmra.mrb[0].mxu0 %v4136
  %v4176 = vpop.f32.mrb[0].mxu0
  %v4177 = vadd.f32 %v4111, %v4176
  %v4178 = vpop.f32.mrb[0].mxu0
  %v4179 = vpop.f32.mrb[0].mxu0
  %v4180 = vpop.f32.mrb[0].mxu0
  %4181 = vdwg.mxu0
  %vm4182 = vcmask 80896
  %v4183 = vsel %vm4182, %v4177, -inf
  %4184 = vmax.xlane.f32.xlu0 %v4183
  %v4185 = vpop.xlane.xlu0 %4184
  %v4186 = vsub.f32 %v4177, %v4185
  %v4187 = vmul.f32 %v4186, 1.442695
  %v4188 = vpow.pop %v4187
  %v4189 = vsel %vm4182, %v4188, 0.0
  %4190 = vadd.xlane.f32.xlu0 %v4189
  %v4191 = vpop.xlane.xlu0 %4190
  %v4192 = vlog2.pop %v4191
  %v4193 = vmul.f32 %v4192, 0.6931472
  %v4194 = vadd.f32 %v4185, %v4193
  %v4195 = vsub.f32 %v4177, %v4194
  %4196 = vst.msk [vmem:[%s9] sm:$0xff] %vm4182, %v4195
  // Predicated region
  $region38: #{net_forward.1} parent=0 // pred_check
    _
  $region39: #{net_forward.1} parent=0 // pred_check_branch
    %4198 = sbr.rel (0) target = $region41
  $region40: #{net_forward.1} parent=0 // pred_region
    _
  $region41: #{net_forward.1} parent=0 // pred_fallthru
    _
  // Predicated region
  $region42: #{net_forward.1} parent=0 // pred_check
    _
  $region43: #{net_forward.1} parent=0 // pred_check_branch
    %4200 = sbr.rel (0) target = $region45
  $region44: #{net_forward.1} parent=0 // pred_region
    _
  $region45: #{net_forward.1} parent=0 // pred_fallthru
    _

</llo_original>
